<compile_context>
chip_gen: v5e
topology: v5e:2x2
jax: 0.10.0
libtpu: 0.0.40
codegen_flags: <defaults>
</compile_context>

<pallas_src>
import jax
import jax.numpy as jnp
from jax.experimental import pallas as pl
from jax.experimental.pallas import tpu as pltpu


# ------------------------------ tiling helpers -----------------------------

def _block_config(block_bytes=None):
    """Pick (block_bytes, vmem_limit_bytes) for the row-block streaming."""
    if block_bytes is not None:
        return int(block_bytes), None
    try:
        phys = getattr(pltpu.get_tpu_info(), "vmem_capacity_bytes", None)
    except Exception:
        phys = None
    if not phys:
        # Conservative fallback: ~6 live blocks in kernel 1 fit the 16 MiB
        # scoped-VMEM default on v5e.
        return 2 * 1024 * 1024, None
    # Generation-aware: bigger blocks (less per-grid-step overhead) with an
    # explicit scoped-VMEM limit.  Budget ~12 blocks of live VMEM
    # (double-buffered ins/outs + temporaries) and never ask for more than
    # 3/4 of physical VMEM (v7x has only 64 MiB per TensorCore).
    limit = max(32 << 20, min(phys * 3 // 4, 64 << 20))
    blk = max(1 << 20, min(4 << 20, limit // 12))
    return blk, limit


def _choose_tile_rows(n_rows, g, block_bytes):
    # Biggest row tile whose (TN, G) f32 block fits the byte budget; TN is a
    # multiple of 8 (sublane tile) unless a single block covers all rows.
    tn = max(8, (block_bytes // (g * 4)) // 8 * 8)
    return n_rows if tn >= n_rows else tn


def _compiler_params(vmem_limit):
    kw = dict(dimension_semantics=("parallel",))
    if vmem_limit is not None:
        kw["vmem_limit_bytes"] = int(vmem_limit)
    return pltpu.CompilerParams(**kw)


# ------------------------------ Pallas kernels -----------------------------

def _stats_kernel(recon_ref, normx_ref,
                  rowsum_ref, rowmin_ref, rowmax_ref, pseudo_ref, rowsq_ref):
    # Per-spot reductions for one (TN, G) row block.  All outputs are (TN, 1)
    # columns; rows past N in a partial last block are write-masked by Pallas,
    # so no in-kernel masking and no cross-iteration accumulators are needed
    # (grid is fully "parallel").
    recon = recon_ref[...].astype(jnp.float32)
    normx = normx_ref[...].astype(jnp.float32)
    rowsum_ref[...] = jnp.sum(recon, axis=1, keepdims=True)
    rowmin_ref[...] = jnp.min(recon, axis=1, keepdims=True)
    rowmax_ref[...] = jnp.max(recon, axis=1, keepdims=True)
    pseudo_ref[...] = jnp.sum(normx, axis=1, keepdims=True)
    rowsq_ref[...] = jnp.sum(recon * recon, axis=1, keepdims=True)


def _rescale_kernel(recon_ref, coeff_ref, b_ref, out_ref):
    # out = recon * coeff_row + b  (renormalize + min-max rescale + /mean),
    # with coeff the per-row column folded in glue and b a scalar in SMEM.
    out_ref[...] = (recon_ref[...].astype(jnp.float32) * coeff_ref[...]
                    + b_ref[0]).astype(out_ref.dtype)


# -------------------------------- JAX glue ---------------------------------

def _assign_states(spot_mean_std, num_states=3, max_iters=20):
    # TODO(synk): hmmlearn GaussianHMM (float64 Baum-Welch fit + Viterbi
    # predict) has no Pallas/JAX equivalent; a deterministic
    # quantile-initialized hard-EM (1-D nearest-mean clustering, matching the
    # module's manual means/covars re-estimation loop) is the surrogate.
    x = spot_mean_std
    means0 = jnp.quantile(x, jnp.array([0.2, 0.5, 0.8], dtype=x.dtype))

    def body(_, means):
        states = jnp.argmin(jnp.abs(x[:, None] - means[None, :]), axis=1)
        new_means = []
        for s in range(num_states):
            m = (states == s)
            cnt = jnp.sum(m)
            cm = jnp.sum(jnp.where(m, x, 0.0)) / jnp.maximum(cnt, 1)
            new_means.append(jnp.where(cnt > 0, cm, jnp.mean(x)))
        return jnp.stack(new_means)

    means = jax.lax.fori_loop(0, max_iters, body, means0)
    return jnp.argmin(jnp.abs(x[:, None] - means[None, :]), axis=1)


def _scatter_mean(src, index, dim_size):
    sums = jnp.zeros((dim_size,), src.dtype).at[index].add(src)
    counts = jnp.zeros((dim_size,), src.dtype).at[index].add(1.0)
    safe = jnp.where(counts > 0, counts, 1.0)
    return jnp.where(counts > 0, sums / safe, 0.0)


def cn_encoder_forward(norm_x, recon, edge_index, num_states=3, max_iters=20,
                       block_bytes=None):
    N, G = recon.shape
    blk_bytes, vmem_limit = _block_config(block_bytes)
    TN = _choose_tile_rows(N, G, blk_bytes)
    grid = (pl.cdiv(N, TN),)
    cparams = _compiler_params(vmem_limit)

    row_spec = pl.BlockSpec((TN, G), lambda i: (i, 0))   # last dim == full G
    col_spec = pl.BlockSpec((TN, 1), lambda i: (i, 0))
    smem_spec = pl.BlockSpec(memory_space=pltpu.MemorySpace.SMEM)

    # --- pass 1: per-spot stats (single read of recon and norm_x) ---------
    col_f32 = jax.ShapeDtypeStruct((N, 1), jnp.float32)
    rowsum, rowmin, rowmax, pseudo, rowsq = pl.pallas_call(
        _stats_kernel,
        grid=grid,
        in_specs=[row_spec, row_spec],
        out_specs=[col_spec] * 5,
        out_shape=[col_f32] * 5,
        compiler_params=cparams,
    )(recon, norm_x)

    reg_loss = jnp.sum(rowsq) * 1e-4

    # --- HMM-style state assignment (glue, see TODO in _assign_states) ----
    spot_mean = rowsum[:, 0] / G
    sm_std = (spot_mean - spot_mean.mean()) / (spot_mean.std() + 1e-8)
    states = _assign_states(sm_std, num_states=num_states, max_iters=max_iters)
    states_f = (states + 1).astype(jnp.float32)                  # [N]

    # --- neighbor smoothing via scatter_mean over edges (glue) ------------
    row, col = edge_index[0], edge_index[1]
    neighbor_avg = _scatter_mean(states_f[row], col, N)
    smoothed = 0.5 * states_f + 0.5 * neighbor_avg               # [N]

    # --- global stats of the renormalized copy from per-row stats ---------
    # nc[i, j] = recon[i, j] * c[i], with
    #   c[i]        = smoothed[i] * pseudo[i] / (copy_sum[i] + 1e-8)
    #   copy_sum[i] = smoothed[i] * rowsum[i]   (== sum_j recon[i,j]*smoothed[i])
    copy_sum = smoothed * rowsum[:, 0]
    c = smoothed * pseudo[:, 0] / (copy_sum + 1e-8)              # exact division
    lo = c * rowmin[:, 0]
    hi = c * rowmax[:, 0]
    gmin = jnp.min(jnp.minimum(lo, hi))     # c may be negative: take both ends
    gmax = jnp.max(jnp.maximum(lo, hi))
    gsum = jnp.sum(c * rowsum[:, 0])        # sum_ij nc[i, j]

    # --- fold min-max rescale + mean division into one affine (a, b) ------
    range_min = gmin * 0.8
    range_max = gmax * 1.2
    scale = (range_max - range_min) / (gmax - gmin + 1e-8)
    pre_mean = gsum / (N * G)
    current_mean = (pre_mean - gmin) * scale + range_min
    # Guard only the exact-zero case (the reference would produce inf/nan).
    current_mean = jnp.where(current_mean == 0.0, 1.0, current_mean)
    a = scale / current_mean
    b = (range_min - gmin * scale) / current_mean

    coeff = (c * a).astype(jnp.float32)[:, None]                 # [N, 1]
    b_smem = jnp.reshape(b, (1,)).astype(jnp.float32)            # [1] (SMEM)

    # --- pass 2: out = recon * coeff + b, written directly as (N, G) ------
    norm_copy = pl.pallas_call(
        _rescale_kernel,
        grid=grid,
        in_specs=[row_spec, col_spec, smem_spec],
        out_specs=row_spec,
        out_shape=jax.ShapeDtypeStruct((N, G), recon.dtype),
        compiler_params=cparams,
    )(recon, coeff, b_smem)

    return norm_copy, reg_loss


# ---------------------------------- main -----------------------------------

if __name__ == "__main__":
    key = jax.random.PRNGKey(0)
    # N not a multiple of the forced row tile and G not a multiple of 128 so
    # the partial-block (write-masked) and non-128 lane paths are exercised.
    N, G = 1000, 200
    k1, k2 = jax.random.split(key, 2)
    norm_x = jax.random.uniform(k1, (N, G), dtype=jnp.float32)
    recon = jax.random.uniform(k2, (N, G), dtype=jnp.float32) + 0.1

    # simple bidirectional ring graph over the N spots
    src = jnp.arange(N, dtype=jnp.int32)
    dst = (src + 1) % N
    edge_index = jnp.stack([jnp.concatenate([src, dst]),
                            jnp.concatenate([dst, src])])   # [2, 2N]

    # Auto-sized blocks (single block at this problem size) ...
    norm_copy, reg_loss = cn_encoder_forward(norm_x, recon, edge_index)
    # ... and a forced small block so the multi-block / partial-last-block
    # path is exercised too; results must match.
    norm_copy_mb, reg_loss_mb = cn_encoder_forward(
        norm_x, recon, edge_index, block_bytes=256 * 1024)
    jax.block_until_ready((norm_copy, reg_loss, norm_copy_mb, reg_loss_mb))

    assert norm_copy.shape == (N, G)
    assert reg_loss.shape == ()
    assert bool(jnp.all(jnp.isfinite(norm_copy)))
    assert bool(jnp.allclose(norm_copy, norm_copy_mb, rtol=1e-5, atol=1e-5))
    assert bool(jnp.allclose(reg_loss, reg_loss_mb, rtol=1e-5, atol=1e-5))
    print("KERNEL_OK")
</pallas_src>

<mosaic_0001>
module attributes {stable_mosaic.version = 11 : i64} {
  func.func @_stats_kernel(%arg0: i32, %arg1: memref<1000x200xf32, #tpu.memory_space<vmem>>, %arg2: memref<1000x200xf32, #tpu.memory_space<vmem>>, %arg3: memref<1000x1xf32, #tpu.memory_space<vmem>>, %arg4: memref<1000x1xf32, #tpu.memory_space<vmem>>, %arg5: memref<1000x1xf32, #tpu.memory_space<vmem>>, %arg6: memref<1000x1xf32, #tpu.memory_space<vmem>>, %arg7: memref<1000x1xf32, #tpu.memory_space<vmem>>) attributes {dimension_semantics = [#tpu.dimension_semantics<parallel>], iteration_bounds = array<i64: 1>, scalar_prefetch = 0 : i64, scratch_operands = 0 : i64, tpu.core_type = #tpu.core_type<tc>, window_params = [{transform_indices = @transform_0, window_bounds = array<i64: 1000, 200>}, {transform_indices = @transform_1, window_bounds = array<i64: 1000, 200>}, {transform_indices = @transform_2, window_bounds = array<i64: 1000, 1>}, {transform_indices = @transform_3, window_bounds = array<i64: 1000, 1>}, {transform_indices = @transform_4, window_bounds = array<i64: 1000, 1>}, {transform_indices = @transform_5, window_bounds = array<i64: 1000, 1>}, {transform_indices = @transform_6, window_bounds = array<i64: 1000, 1>}]} {
    %c0 = arith.constant 0 : index
    %c0_0 = arith.constant 0 : index
    %0 = vector.load %arg1[%c0, %c0_0] : memref<1000x200xf32, #tpu.memory_space<vmem>>, vector<1000x200xf32>
    %c0_1 = arith.constant 0 : index
    %c0_2 = arith.constant 0 : index
    %1 = vector.load %arg2[%c0_1, %c0_2] : memref<1000x200xf32, #tpu.memory_space<vmem>>, vector<1000x200xf32>
    %cst = arith.constant dense<0.000000e+00> : vector<1000xf32>
    %2 = vector.multi_reduction <add>, %0, %cst [1] : vector<1000x200xf32> to vector<1000xf32>
    %3 = vector.shape_cast %2 : vector<1000xf32> to vector<1000x1xf32>
    %c0_3 = arith.constant 0 : index
    %c0_4 = arith.constant 0 : index
    %4 = vector.load %arg3[%c0_3, %c0_4] : memref<1000x1xf32, #tpu.memory_space<vmem>>, vector<1000x1xf32>
    tpu.vector_store %arg3[%c0_3, %c0_4], %3 {strides = array<i32>} : memref<1000x1xf32, #tpu.memory_space<vmem>>, vector<1000x1xf32>,
    %cst_5 = arith.constant dense<0x7F800000> : vector<1000xf32>
    %5 = vector.multi_reduction <minimumf>, %0, %cst_5 [1] : vector<1000x200xf32> to vector<1000xf32>
    %6 = vector.shape_cast %5 : vector<1000xf32> to vector<1000x1xf32>
    %c0_6 = arith.constant 0 : index
    %c0_7 = arith.constant 0 : index
    %7 = vector.load %arg4[%c0_6, %c0_7] : memref<1000x1xf32, #tpu.memory_space<vmem>>, vector<1000x1xf32>
    tpu.vector_store %arg4[%c0_6, %c0_7], %6 {strides = array<i32>} : memref<1000x1xf32, #tpu.memory_space<vmem>>, vector<1000x1xf32>,
    %cst_8 = arith.constant dense<0xFF800000> : vector<1000xf32>
    %8 = vector.multi_reduction <maximumf>, %0, %cst_8 [1] : vector<1000x200xf32> to vector<1000xf32>
    %9 = vector.shape_cast %8 : vector<1000xf32> to vector<1000x1xf32>
    %c0_9 = arith.constant 0 : index
    %c0_10 = arith.constant 0 : index
    %10 = vector.load %arg5[%c0_9, %c0_10] : memref<1000x1xf32, #tpu.memory_space<vmem>>, vector<1000x1xf32>
    tpu.vector_store %arg5[%c0_9, %c0_10], %9 {strides = array<i32>} : memref<1000x1xf32, #tpu.memory_space<vmem>>, vector<1000x1xf32>,
    %cst_11 = arith.constant dense<0.000000e+00> : vector<1000xf32>
    %11 = vector.multi_reduction <add>, %1, %cst_11 [1] : vector<1000x200xf32> to vector<1000xf32>
    %12 = vector.shape_cast %11 : vector<1000xf32> to vector<1000x1xf32>
    %c0_12 = arith.constant 0 : index
    %c0_13 = arith.constant 0 : index
    %13 = vector.load %arg6[%c0_12, %c0_13] : memref<1000x1xf32, #tpu.memory_space<vmem>>, vector<1000x1xf32>
    tpu.vector_store %arg6[%c0_12, %c0_13], %12 {strides = array<i32>} : memref<1000x1xf32, #tpu.memory_space<vmem>>, vector<1000x1xf32>,
    %14 = arith.mulf %0, %0 : vector<1000x200xf32>
    %cst_14 = arith.constant dense<0.000000e+00> : vector<1000xf32>
    %15 = vector.multi_reduction <add>, %14, %cst_14 [1] : vector<1000x200xf32> to vector<1000xf32>
    %16 = vector.shape_cast %15 : vector<1000xf32> to vector<1000x1xf32>
    %c0_15 = arith.constant 0 : index
    %c0_16 = arith.constant 0 : index
    %17 = vector.load %arg7[%c0_15, %c0_16] : memref<1000x1xf32, #tpu.memory_space<vmem>>, vector<1000x1xf32>
    tpu.vector_store %arg7[%c0_15, %c0_16], %16 {strides = array<i32>} : memref<1000x1xf32, #tpu.memory_space<vmem>>, vector<1000x1xf32>,
    return
  }
  func.func @transform_0(%arg0: i32) -> (i32, i32) {
    %c0_i32 = arith.constant 0 : i32
    %c0_i32_0 = arith.constant 0 : i32
    return %arg0, %c0_i32 : i32, i32
  }
  func.func @transform_1(%arg0: i32) -> (i32, i32) {
    %c0_i32 = arith.constant 0 : i32
    %c0_i32_0 = arith.constant 0 : i32
    return %arg0, %c0_i32 : i32, i32
  }
  func.func @transform_2(%arg0: i32) -> (i32, i32) {
    %c0_i32 = arith.constant 0 : i32
    %c0_i32_0 = arith.constant 0 : i32
    return %arg0, %c0_i32 : i32, i32
  }
  func.func @transform_3(%arg0: i32) -> (i32, i32) {
    %c0_i32 = arith.constant 0 : i32
    %c0_i32_0 = arith.constant 0 : i32
    return %arg0, %c0_i32 : i32, i32
  }
  func.func @transform_4(%arg0: i32) -> (i32, i32) {
    %c0_i32 = arith.constant 0 : i32
    %c0_i32_0 = arith.constant 0 : i32
    return %arg0, %c0_i32 : i32, i32
  }
  func.func @transform_5(%arg0: i32) -> (i32, i32) {
    %c0_i32 = arith.constant 0 : i32
    %c0_i32_0 = arith.constant 0 : i32
    return %arg0, %c0_i32 : i32, i32
  }
  func.func @transform_6(%arg0: i32) -> (i32, i32) {
    %c0_i32 = arith.constant 0 : i32
    %c0_i32_0 = arith.constant 0 : i32
    return %arg0, %c0_i32 : i32, i32
  }
}

</mosaic_0001>

<llo_original>
// kernel: tpu_custom_call.1
$region0: #{tpu_custom_call.1}
  #allocation0 [shape = 'u32[]', space=smem, size = 0x4, offset = 0x4, fixed_abs, tag = 'smem constant byte address 0x4 - core index']
  #allocation1 [shape = 'u32[72,128]{1,0:T(1,128)}', space=vmem, size = 0x9000, scoped, tag = 'internal scratch']
  %s0 = inlined_call_operand.vmem [shape: f32[1000,200], index: 0, kind: input, shape index: {}]
  %s1 = inlined_call_operand.vmem [shape: f32[1000,200], index: 1, kind: input, shape index: {}]
  %s2 = inlined_call_operand.vmem [shape: f32[1000,1], index: 2, kind: output, shape index: {0}]
  %s3 = inlined_call_operand.vmem [shape: f32[1000,1], index: 3, kind: output, shape index: {1}]
  %s4 = inlined_call_operand.vmem [shape: f32[1000,1], index: 4, kind: output, shape index: {2}]
  %s5 = inlined_call_operand.vmem [shape: f32[1000,1], index: 5, kind: output, shape index: {3}]
  %s6 = inlined_call_operand.vmem [shape: f32[1000,1], index: 6, kind: output, shape index: {4}]
  %7 = xla_tuple %s2, %s3, %s4, %s5, %s6
  %s8 = sld [smem:[#allocation0]]
  $region50: #{tpu_custom_call.1} parent=0
    _
  %s10 = ssub.s32 1, %s8
  %s11 = scalar_select 0, %s10, %s8
  // Predicated region
  $region2: #{tpu_custom_call.1} parent=0 // pred_check
    _
  $region3: #{tpu_custom_call.1} parent=0 // pred_check_branch
    %13 = sbr.rel (0) target = $region5
  $region4: #{tpu_custom_call.1} parent=0 // pred_region
    _
  $region5: #{tpu_custom_call.1} parent=0 // pred_fallthru
    _
  // Predicated region
  $region6: #{tpu_custom_call.1} parent=0 // pred_check
    _
  $region7: #{tpu_custom_call.1} parent=0 // pred_check_branch
    %15 = sbr.rel (0) target = $region9
  $region8: #{tpu_custom_call.1} parent=0 // pred_region
    _
  $region9: #{tpu_custom_call.1} parent=0 // pred_fallthru
    _
  %v16 = vld [vmem:[%s0] sm:$0xff]
  %v17 = vld [vmem:[%s0 + $0x8] sm:$0xff]
  %v18 = vld [vmem:[%s0 + $0x10] sm:$0xff]
  %v19 = vld [vmem:[%s0 + $0x18] sm:$0xff]
  %v20 = vld [vmem:[%s0 + $0x20] sm:$0xff]
  %v21 = vld [vmem:[%s0 + $0x28] sm:$0xff]
  %v22 = vld [vmem:[%s0 + $0x30] sm:$0xff]
  %v23 = vld [vmem:[%s0 + $0x38] sm:$0xff]
  %v24 = vld [vmem:[%s0 + $0x40] sm:$0xff]
  %v25 = vld [vmem:[%s0 + $0x48] sm:$0xff]
  %v26 = vld [vmem:[%s0 + $0x50] sm:$0xff]
  %v27 = vld [vmem:[%s0 + $0x58] sm:$0xff]
  %v28 = vld [vmem:[%s0 + $0x60] sm:$0xff]
  %v29 = vld [vmem:[%s0 + $0x68] sm:$0xff]
  %v30 = vld [vmem:[%s0 + $0x70] sm:$0xff]
  %v31 = vld [vmem:[%s0 + $0x78] sm:$0xff]
  %v32 = vld [vmem:[%s0 + $0x80] sm:$0xff]
  %v33 = vld [vmem:[%s0 + $0x88] sm:$0xff]
  %v34 = vld [vmem:[%s0 + $0x90] sm:$0xff]
  %v35 = vld [vmem:[%s0 + $0x98] sm:$0xff]
  %v36 = vld [vmem:[%s0 + $0xa0] sm:$0xff]
  %v37 = vld [vmem:[%s0 + $0xa8] sm:$0xff]
  %v38 = vld [vmem:[%s0 + $0xb0] sm:$0xff]
  %v39 = vld [vmem:[%s0 + $0xb8] sm:$0xff]
  %v40 = vld [vmem:[%s0 + $0xc0] sm:$0xff]
  %v41 = vld [vmem:[%s0 + $0xc8] sm:$0xff]
  %v42 = vld [vmem:[%s0 + $0xd0] sm:$0xff]
  %v43 = vld [vmem:[%s0 + $0xd8] sm:$0xff]
  %v44 = vld [vmem:[%s0 + $0xe0] sm:$0xff]
  %v45 = vld [vmem:[%s0 + $0xe8] sm:$0xff]
  %v46 = vld [vmem:[%s0 + $0xf0] sm:$0xff]
  %v47 = vld [vmem:[%s0 + $0xf8] sm:$0xff]
  %v48 = vld [vmem:[%s0 + $0x100] sm:$0xff]
  %v49 = vld [vmem:[%s0 + $0x108] sm:$0xff]
  %v50 = vld [vmem:[%s0 + $0x110] sm:$0xff]
  %v51 = vld [vmem:[%s0 + $0x118] sm:$0xff]
  %v52 = vld [vmem:[%s0 + $0x120] sm:$0xff]
  %v53 = vld [vmem:[%s0 + $0x128] sm:$0xff]
  %v54 = vld [vmem:[%s0 + $0x130] sm:$0xff]
  %v55 = vld [vmem:[%s0 + $0x138] sm:$0xff]
  %v56 = vld [vmem:[%s0 + $0x140] sm:$0xff]
  %v57 = vld [vmem:[%s0 + $0x148] sm:$0xff]
  %v58 = vld [vmem:[%s0 + $0x150] sm:$0xff]
  %v59 = vld [vmem:[%s0 + $0x158] sm:$0xff]
  %v60 = vld [vmem:[%s0 + $0x160] sm:$0xff]
  %v61 = vld [vmem:[%s0 + $0x168] sm:$0xff]
  %v62 = vld [vmem:[%s0 + $0x170] sm:$0xff]
  %v63 = vld [vmem:[%s0 + $0x178] sm:$0xff]
  %v64 = vld [vmem:[%s0 + $0x180] sm:$0xff]
  %v65 = vld [vmem:[%s0 + $0x188] sm:$0xff]
  %v66 = vld [vmem:[%s0 + $0x190] sm:$0xff]
  %v67 = vld [vmem:[%s0 + $0x198] sm:$0xff]
  %v68 = vld [vmem:[%s0 + $0x1a0] sm:$0xff]
  %v69 = vld [vmem:[%s0 + $0x1a8] sm:$0xff]
  %v70 = vld [vmem:[%s0 + $0x1b0] sm:$0xff]
  %v71 = vld [vmem:[%s0 + $0x1b8] sm:$0xff]
  %v72 = vld [vmem:[%s0 + $0x1c0] sm:$0xff]
  %v73 = vld [vmem:[%s0 + $0x1c8] sm:$0xff]
  %v74 = vld [vmem:[%s0 + $0x1d0] sm:$0xff]
  %v75 = vld [vmem:[%s0 + $0x1d8] sm:$0xff]
  %v76 = vld [vmem:[%s0 + $0x1e0] sm:$0xff]
  %v77 = vld [vmem:[%s0 + $0x1e8] sm:$0xff]
  %v78 = vld [vmem:[%s0 + $0x1f0] sm:$0xff]
  %v79 = vld [vmem:[%s0 + $0x1f8] sm:$0xff]
  %v80 = vld [vmem:[%s0 + $0x200] sm:$0xff]
  %v81 = vld [vmem:[%s0 + $0x208] sm:$0xff]
  %v82 = vld [vmem:[%s0 + $0x210] sm:$0xff]
  %v83 = vld [vmem:[%s0 + $0x218] sm:$0xff]
  %v84 = vld [vmem:[%s0 + $0x220] sm:$0xff]
  %v85 = vld [vmem:[%s0 + $0x228] sm:$0xff]
  %v86 = vld [vmem:[%s0 + $0x230] sm:$0xff]
  %v87 = vld [vmem:[%s0 + $0x238] sm:$0xff]
  %v88 = vld [vmem:[%s0 + $0x240] sm:$0xff]
  %v89 = vld [vmem:[%s0 + $0x248] sm:$0xff]
  %v90 = vld [vmem:[%s0 + $0x250] sm:$0xff]
  %v91 = vld [vmem:[%s0 + $0x258] sm:$0xff]
  %v92 = vld [vmem:[%s0 + $0x260] sm:$0xff]
  %v93 = vld [vmem:[%s0 + $0x268] sm:$0xff]
  %v94 = vld [vmem:[%s0 + $0x270] sm:$0xff]
  %v95 = vld [vmem:[%s0 + $0x278] sm:$0xff]
  %v96 = vld [vmem:[%s0 + $0x280] sm:$0xff]
  %v97 = vld [vmem:[%s0 + $0x288] sm:$0xff]
  %v98 = vld [vmem:[%s0 + $0x290] sm:$0xff]
  %v99 = vld [vmem:[%s0 + $0x298] sm:$0xff]
  %v100 = vld [vmem:[%s0 + $0x2a0] sm:$0xff]
  %v101 = vld [vmem:[%s0 + $0x2a8] sm:$0xff]
  %v102 = vld [vmem:[%s0 + $0x2b0] sm:$0xff]
  %v103 = vld [vmem:[%s0 + $0x2b8] sm:$0xff]
  %v104 = vld [vmem:[%s0 + $0x2c0] sm:$0xff]
  %v105 = vld [vmem:[%s0 + $0x2c8] sm:$0xff]
  %v106 = vld [vmem:[%s0 + $0x2d0] sm:$0xff]
  %v107 = vld [vmem:[%s0 + $0x2d8] sm:$0xff]
  %v108 = vld [vmem:[%s0 + $0x2e0] sm:$0xff]
  %v109 = vld [vmem:[%s0 + $0x2e8] sm:$0xff]
  %v110 = vld [vmem:[%s0 + $0x2f0] sm:$0xff]
  %v111 = vld [vmem:[%s0 + $0x2f8] sm:$0xff]
  %v112 = vld [vmem:[%s0 + $0x300] sm:$0xff]
  %v113 = vld [vmem:[%s0 + $0x308] sm:$0xff]
  %v114 = vld [vmem:[%s0 + $0x310] sm:$0xff]
  %v115 = vld [vmem:[%s0 + $0x318] sm:$0xff]
  %v116 = vld [vmem:[%s0 + $0x320] sm:$0xff]
  %v117 = vld [vmem:[%s0 + $0x328] sm:$0xff]
  %v118 = vld [vmem:[%s0 + $0x330] sm:$0xff]
  %v119 = vld [vmem:[%s0 + $0x338] sm:$0xff]
  %v120 = vld [vmem:[%s0 + $0x340] sm:$0xff]
  %v121 = vld [vmem:[%s0 + $0x348] sm:$0xff]
  %v122 = vld [vmem:[%s0 + $0x350] sm:$0xff]
  %v123 = vld [vmem:[%s0 + $0x358] sm:$0xff]
  %v124 = vld [vmem:[%s0 + $0x360] sm:$0xff]
  %v125 = vld [vmem:[%s0 + $0x368] sm:$0xff]
  %v126 = vld [vmem:[%s0 + $0x370] sm:$0xff]
  %v127 = vld [vmem:[%s0 + $0x378] sm:$0xff]
  %v128 = vld [vmem:[%s0 + $0x380] sm:$0xff]
  %v129 = vld [vmem:[%s0 + $0x388] sm:$0xff]
  %v130 = vld [vmem:[%s0 + $0x390] sm:$0xff]
  %v131 = vld [vmem:[%s0 + $0x398] sm:$0xff]
  %v132 = vld [vmem:[%s0 + $0x3a0] sm:$0xff]
  %v133 = vld [vmem:[%s0 + $0x3a8] sm:$0xff]
  %v134 = vld [vmem:[%s0 + $0x3b0] sm:$0xff]
  %v135 = vld [vmem:[%s0 + $0x3b8] sm:$0xff]
  %v136 = vld [vmem:[%s0 + $0x3c0] sm:$0xff]
  %v137 = vld [vmem:[%s0 + $0x3c8] sm:$0xff]
  %v138 = vld [vmem:[%s0 + $0x3d0] sm:$0xff]
  %v139 = vld [vmem:[%s0 + $0x3d8] sm:$0xff]
  %v140 = vld [vmem:[%s0 + $0x3e0] sm:$0xff]
  %v141 = vld [vmem:[%s0 + $0x3e8] sm:$0xff]
  %v142 = vld [vmem:[%s0 + $0x3f0] sm:$0xff]
  %v143 = vld [vmem:[%s0 + $0x3f8] sm:$0xff]
  %v144 = vld [vmem:[%s0 + $0x400] sm:$0xff]
  %v145 = vld [vmem:[%s0 + $0x408] sm:$0xff]
  %v146 = vld [vmem:[%s0 + $0x410] sm:$0xff]
  %v147 = vld [vmem:[%s0 + $0x418] sm:$0xff]
  %v148 = vld [vmem:[%s0 + $0x420] sm:$0xff]
  %v149 = vld [vmem:[%s0 + $0x428] sm:$0xff]
  %v150 = vld [vmem:[%s0 + $0x430] sm:$0xff]
  %v151 = vld [vmem:[%s0 + $0x438] sm:$0xff]
  %v152 = vld [vmem:[%s0 + $0x440] sm:$0xff]
  %v153 = vld [vmem:[%s0 + $0x448] sm:$0xff]
  %v154 = vld [vmem:[%s0 + $0x450] sm:$0xff]
  %v155 = vld [vmem:[%s0 + $0x458] sm:$0xff]
  %v156 = vld [vmem:[%s0 + $0x460] sm:$0xff]
  %v157 = vld [vmem:[%s0 + $0x468] sm:$0xff]
  %v158 = vld [vmem:[%s0 + $0x470] sm:$0xff]
  %v159 = vld [vmem:[%s0 + $0x478] sm:$0xff]
  %v160 = vld [vmem:[%s0 + $0x480] sm:$0xff]
  %v161 = vld [vmem:[%s0 + $0x488] sm:$0xff]
  %v162 = vld [vmem:[%s0 + $0x490] sm:$0xff]
  %v163 = vld [vmem:[%s0 + $0x498] sm:$0xff]
  %v164 = vld [vmem:[%s0 + $0x4a0] sm:$0xff]
  %v165 = vld [vmem:[%s0 + $0x4a8] sm:$0xff]
  %v166 = vld [vmem:[%s0 + $0x4b0] sm:$0xff]
  %v167 = vld [vmem:[%s0 + $0x4b8] sm:$0xff]
  %v168 = vld [vmem:[%s0 + $0x4c0] sm:$0xff]
  %v169 = vld [vmem:[%s0 + $0x4c8] sm:$0xff]
  %v170 = vld [vmem:[%s0 + $0x4d0] sm:$0xff]
  %v171 = vld [vmem:[%s0 + $0x4d8] sm:$0xff]
  %v172 = vld [vmem:[%s0 + $0x4e0] sm:$0xff]
  %v173 = vld [vmem:[%s0 + $0x4e8] sm:$0xff]
  %v174 = vld [vmem:[%s0 + $0x4f0] sm:$0xff]
  %v175 = vld [vmem:[%s0 + $0x4f8] sm:$0xff]
  %v176 = vld [vmem:[%s0 + $0x500] sm:$0xff]
  %v177 = vld [vmem:[%s0 + $0x508] sm:$0xff]
  %v178 = vld [vmem:[%s0 + $0x510] sm:$0xff]
  %v179 = vld [vmem:[%s0 + $0x518] sm:$0xff]
  %v180 = vld [vmem:[%s0 + $0x520] sm:$0xff]
  %v181 = vld [vmem:[%s0 + $0x528] sm:$0xff]
  %v182 = vld [vmem:[%s0 + $0x530] sm:$0xff]
  %v183 = vld [vmem:[%s0 + $0x538] sm:$0xff]
  %v184 = vld [vmem:[%s0 + $0x540] sm:$0xff]
  %v185 = vld [vmem:[%s0 + $0x548] sm:$0xff]
  %v186 = vld [vmem:[%s0 + $0x550] sm:$0xff]
  %v187 = vld [vmem:[%s0 + $0x558] sm:$0xff]
  %v188 = vld [vmem:[%s0 + $0x560] sm:$0xff]
  %v189 = vld [vmem:[%s0 + $0x568] sm:$0xff]
  %v190 = vld [vmem:[%s0 + $0x570] sm:$0xff]
  %v191 = vld [vmem:[%s0 + $0x578] sm:$0xff]
  %v192 = vld [vmem:[%s0 + $0x580] sm:$0xff]
  %v193 = vld [vmem:[%s0 + $0x588] sm:$0xff]
  %v194 = vld [vmem:[%s0 + $0x590] sm:$0xff]
  %v195 = vld [vmem:[%s0 + $0x598] sm:$0xff]
  %v196 = vld [vmem:[%s0 + $0x5a0] sm:$0xff]
  %v197 = vld [vmem:[%s0 + $0x5a8] sm:$0xff]
  %v198 = vld [vmem:[%s0 + $0x5b0] sm:$0xff]
  %v199 = vld [vmem:[%s0 + $0x5b8] sm:$0xff]
  %v200 = vld [vmem:[%s0 + $0x5c0] sm:$0xff]
  %v201 = vld [vmem:[%s0 + $0x5c8] sm:$0xff]
  %v202 = vld [vmem:[%s0 + $0x5d0] sm:$0xff]
  %v203 = vld [vmem:[%s0 + $0x5d8] sm:$0xff]
  %v204 = vld [vmem:[%s0 + $0x5e0] sm:$0xff]
  %v205 = vld [vmem:[%s0 + $0x5e8] sm:$0xff]
  %v206 = vld [vmem:[%s0 + $0x5f0] sm:$0xff]
  %v207 = vld [vmem:[%s0 + $0x5f8] sm:$0xff]
  %v208 = vld [vmem:[%s0 + $0x600] sm:$0xff]
  %v209 = vld [vmem:[%s0 + $0x608] sm:$0xff]
  %v210 = vld [vmem:[%s0 + $0x610] sm:$0xff]
  %v211 = vld [vmem:[%s0 + $0x618] sm:$0xff]
  %v212 = vld [vmem:[%s0 + $0x620] sm:$0xff]
  %v213 = vld [vmem:[%s0 + $0x628] sm:$0xff]
  %v214 = vld [vmem:[%s0 + $0x630] sm:$0xff]
  %v215 = vld [vmem:[%s0 + $0x638] sm:$0xff]
  %v216 = vld [vmem:[%s0 + $0x640] sm:$0xff]
  %v217 = vld [vmem:[%s0 + $0x648] sm:$0xff]
  %v218 = vld [vmem:[%s0 + $0x650] sm:$0xff]
  %v219 = vld [vmem:[%s0 + $0x658] sm:$0xff]
  %v220 = vld [vmem:[%s0 + $0x660] sm:$0xff]
  %v221 = vld [vmem:[%s0 + $0x668] sm:$0xff]
  %v222 = vld [vmem:[%s0 + $0x670] sm:$0xff]
  %v223 = vld [vmem:[%s0 + $0x678] sm:$0xff]
  %v224 = vld [vmem:[%s0 + $0x680] sm:$0xff]
  %v225 = vld [vmem:[%s0 + $0x688] sm:$0xff]
  %v226 = vld [vmem:[%s0 + $0x690] sm:$0xff]
  %v227 = vld [vmem:[%s0 + $0x698] sm:$0xff]
  %v228 = vld [vmem:[%s0 + $0x6a0] sm:$0xff]
  %v229 = vld [vmem:[%s0 + $0x6a8] sm:$0xff]
  %v230 = vld [vmem:[%s0 + $0x6b0] sm:$0xff]
  %v231 = vld [vmem:[%s0 + $0x6b8] sm:$0xff]
  %v232 = vld [vmem:[%s0 + $0x6c0] sm:$0xff]
  %v233 = vld [vmem:[%s0 + $0x6c8] sm:$0xff]
  %v234 = vld [vmem:[%s0 + $0x6d0] sm:$0xff]
  %v235 = vld [vmem:[%s0 + $0x6d8] sm:$0xff]
  %v236 = vld [vmem:[%s0 + $0x6e0] sm:$0xff]
  %v237 = vld [vmem:[%s0 + $0x6e8] sm:$0xff]
  %v238 = vld [vmem:[%s0 + $0x6f0] sm:$0xff]
  %v239 = vld [vmem:[%s0 + $0x6f8] sm:$0xff]
  %v240 = vld [vmem:[%s0 + $0x700] sm:$0xff]
  %v241 = vld [vmem:[%s0 + $0x708] sm:$0xff]
  %v242 = vld [vmem:[%s0 + $0x710] sm:$0xff]
  %v243 = vld [vmem:[%s0 + $0x718] sm:$0xff]
  %v244 = vld [vmem:[%s0 + $0x720] sm:$0xff]
  %v245 = vld [vmem:[%s0 + $0x728] sm:$0xff]
  %v246 = vld [vmem:[%s0 + $0x730] sm:$0xff]
  %v247 = vld [vmem:[%s0 + $0x738] sm:$0xff]
  %v248 = vld [vmem:[%s0 + $0x740] sm:$0xff]
  %v249 = vld [vmem:[%s0 + $0x748] sm:$0xff]
  %v250 = vld [vmem:[%s0 + $0x750] sm:$0xff]
  %v251 = vld [vmem:[%s0 + $0x758] sm:$0xff]
  %v252 = vld [vmem:[%s0 + $0x760] sm:$0xff]
  %v253 = vld [vmem:[%s0 + $0x768] sm:$0xff]
  %v254 = vld [vmem:[%s0 + $0x770] sm:$0xff]
  %v255 = vld [vmem:[%s0 + $0x778] sm:$0xff]
  %v256 = vld [vmem:[%s0 + $0x780] sm:$0xff]
  %v257 = vld [vmem:[%s0 + $0x788] sm:$0xff]
  %v258 = vld [vmem:[%s0 + $0x790] sm:$0xff]
  %v259 = vld [vmem:[%s0 + $0x798] sm:$0xff]
  %v260 = vld [vmem:[%s0 + $0x7a0] sm:$0xff]
  %v261 = vld [vmem:[%s0 + $0x7a8] sm:$0xff]
  %v262 = vld [vmem:[%s0 + $0x7b0] sm:$0xff]
  %v263 = vld [vmem:[%s0 + $0x7b8] sm:$0xff]
  %v264 = vld [vmem:[%s0 + $0x7c0] sm:$0xff]
  %v265 = vld [vmem:[%s0 + $0x7c8] sm:$0xff]
  %v266 = vld [vmem:[%s1] sm:$0xff]
  %v267 = vld [vmem:[%s1 + $0x8] sm:$0xff]
  %v268 = vld [vmem:[%s1 + $0x10] sm:$0xff]
  %v269 = vld [vmem:[%s1 + $0x18] sm:$0xff]
  %v270 = vld [vmem:[%s1 + $0x20] sm:$0xff]
  %v271 = vld [vmem:[%s1 + $0x28] sm:$0xff]
  %v272 = vld [vmem:[%s1 + $0x30] sm:$0xff]
  %v273 = vld [vmem:[%s1 + $0x38] sm:$0xff]
  %v274 = vld [vmem:[%s1 + $0x40] sm:$0xff]
  %v275 = vld [vmem:[%s1 + $0x48] sm:$0xff]
  %v276 = vld [vmem:[%s1 + $0x50] sm:$0xff]
  %v277 = vld [vmem:[%s1 + $0x58] sm:$0xff]
  %v278 = vld [vmem:[%s1 + $0x60] sm:$0xff]
  %v279 = vld [vmem:[%s1 + $0x68] sm:$0xff]
  %v280 = vld [vmem:[%s1 + $0x70] sm:$0xff]
  %v281 = vld [vmem:[%s1 + $0x78] sm:$0xff]
  %v282 = vld [vmem:[%s1 + $0x80] sm:$0xff]
  %v283 = vld [vmem:[%s1 + $0x88] sm:$0xff]
  %v284 = vld [vmem:[%s1 + $0x90] sm:$0xff]
  %v285 = vld [vmem:[%s1 + $0x98] sm:$0xff]
  %v286 = vld [vmem:[%s1 + $0xa0] sm:$0xff]
  %v287 = vld [vmem:[%s1 + $0xa8] sm:$0xff]
  %v288 = vld [vmem:[%s1 + $0xb0] sm:$0xff]
  %v289 = vld [vmem:[%s1 + $0xb8] sm:$0xff]
  %v290 = vld [vmem:[%s1 + $0xc0] sm:$0xff]
  %v291 = vld [vmem:[%s1 + $0xc8] sm:$0xff]
  %v292 = vld [vmem:[%s1 + $0xd0] sm:$0xff]
  %v293 = vld [vmem:[%s1 + $0xd8] sm:$0xff]
  %v294 = vld [vmem:[%s1 + $0xe0] sm:$0xff]
  %v295 = vld [vmem:[%s1 + $0xe8] sm:$0xff]
  %v296 = vld [vmem:[%s1 + $0xf0] sm:$0xff]
  %v297 = vld [vmem:[%s1 + $0xf8] sm:$0xff]
  %v298 = vld [vmem:[%s1 + $0x100] sm:$0xff]
  %v299 = vld [vmem:[%s1 + $0x108] sm:$0xff]
  %v300 = vld [vmem:[%s1 + $0x110] sm:$0xff]
  %v301 = vld [vmem:[%s1 + $0x118] sm:$0xff]
  %v302 = vld [vmem:[%s1 + $0x120] sm:$0xff]
  %v303 = vld [vmem:[%s1 + $0x128] sm:$0xff]
  %v304 = vld [vmem:[%s1 + $0x130] sm:$0xff]
  %v305 = vld [vmem:[%s1 + $0x138] sm:$0xff]
  %v306 = vld [vmem:[%s1 + $0x140] sm:$0xff]
  %v307 = vld [vmem:[%s1 + $0x148] sm:$0xff]
  %v308 = vld [vmem:[%s1 + $0x150] sm:$0xff]
  %v309 = vld [vmem:[%s1 + $0x158] sm:$0xff]
  %v310 = vld [vmem:[%s1 + $0x160] sm:$0xff]
  %v311 = vld [vmem:[%s1 + $0x168] sm:$0xff]
  %v312 = vld [vmem:[%s1 + $0x170] sm:$0xff]
  %v313 = vld [vmem:[%s1 + $0x178] sm:$0xff]
  %v314 = vld [vmem:[%s1 + $0x180] sm:$0xff]
  %v315 = vld [vmem:[%s1 + $0x188] sm:$0xff]
  %v316 = vld [vmem:[%s1 + $0x190] sm:$0xff]
  %v317 = vld [vmem:[%s1 + $0x198] sm:$0xff]
  %v318 = vld [vmem:[%s1 + $0x1a0] sm:$0xff]
  %v319 = vld [vmem:[%s1 + $0x1a8] sm:$0xff]
  %v320 = vld [vmem:[%s1 + $0x1b0] sm:$0xff]
  %v321 = vld [vmem:[%s1 + $0x1b8] sm:$0xff]
  %v322 = vld [vmem:[%s1 + $0x1c0] sm:$0xff]
  %v323 = vld [vmem:[%s1 + $0x1c8] sm:$0xff]
  %v324 = vld [vmem:[%s1 + $0x1d0] sm:$0xff]
  %v325 = vld [vmem:[%s1 + $0x1d8] sm:$0xff]
  %v326 = vld [vmem:[%s1 + $0x1e0] sm:$0xff]
  %v327 = vld [vmem:[%s1 + $0x1e8] sm:$0xff]
  %v328 = vld [vmem:[%s1 + $0x1f0] sm:$0xff]
  %v329 = vld [vmem:[%s1 + $0x1f8] sm:$0xff]
  %v330 = vld [vmem:[%s1 + $0x200] sm:$0xff]
  %v331 = vld [vmem:[%s1 + $0x208] sm:$0xff]
  %v332 = vld [vmem:[%s1 + $0x210] sm:$0xff]
  %v333 = vld [vmem:[%s1 + $0x218] sm:$0xff]
  %v334 = vld [vmem:[%s1 + $0x220] sm:$0xff]
  %v335 = vld [vmem:[%s1 + $0x228] sm:$0xff]
  %v336 = vld [vmem:[%s1 + $0x230] sm:$0xff]
  %v337 = vld [vmem:[%s1 + $0x238] sm:$0xff]
  %v338 = vld [vmem:[%s1 + $0x240] sm:$0xff]
  %v339 = vld [vmem:[%s1 + $0x248] sm:$0xff]
  %v340 = vld [vmem:[%s1 + $0x250] sm:$0xff]
  %v341 = vld [vmem:[%s1 + $0x258] sm:$0xff]
  %v342 = vld [vmem:[%s1 + $0x260] sm:$0xff]
  %v343 = vld [vmem:[%s1 + $0x268] sm:$0xff]
  %v344 = vld [vmem:[%s1 + $0x270] sm:$0xff]
  %v345 = vld [vmem:[%s1 + $0x278] sm:$0xff]
  %v346 = vld [vmem:[%s1 + $0x280] sm:$0xff]
  %v347 = vld [vmem:[%s1 + $0x288] sm:$0xff]
  %v348 = vld [vmem:[%s1 + $0x290] sm:$0xff]
  %v349 = vld [vmem:[%s1 + $0x298] sm:$0xff]
  %v350 = vld [vmem:[%s1 + $0x2a0] sm:$0xff]
  %v351 = vld [vmem:[%s1 + $0x2a8] sm:$0xff]
  %v352 = vld [vmem:[%s1 + $0x2b0] sm:$0xff]
  %v353 = vld [vmem:[%s1 + $0x2b8] sm:$0xff]
  %v354 = vld [vmem:[%s1 + $0x2c0] sm:$0xff]
  %v355 = vld [vmem:[%s1 + $0x2c8] sm:$0xff]
  %v356 = vld [vmem:[%s1 + $0x2d0] sm:$0xff]
  %v357 = vld [vmem:[%s1 + $0x2d8] sm:$0xff]
  %v358 = vld [vmem:[%s1 + $0x2e0] sm:$0xff]
  %v359 = vld [vmem:[%s1 + $0x2e8] sm:$0xff]
  %v360 = vld [vmem:[%s1 + $0x2f0] sm:$0xff]
  %v361 = vld [vmem:[%s1 + $0x2f8] sm:$0xff]
  %v362 = vld [vmem:[%s1 + $0x300] sm:$0xff]
  %v363 = vld [vmem:[%s1 + $0x308] sm:$0xff]
  %v364 = vld [vmem:[%s1 + $0x310] sm:$0xff]
  %v365 = vld [vmem:[%s1 + $0x318] sm:$0xff]
  %v366 = vld [vmem:[%s1 + $0x320] sm:$0xff]
  %v367 = vld [vmem:[%s1 + $0x328] sm:$0xff]
  %v368 = vld [vmem:[%s1 + $0x330] sm:$0xff]
  %v369 = vld [vmem:[%s1 + $0x338] sm:$0xff]
  %v370 = vld [vmem:[%s1 + $0x340] sm:$0xff]
  %v371 = vld [vmem:[%s1 + $0x348] sm:$0xff]
  %v372 = vld [vmem:[%s1 + $0x350] sm:$0xff]
  %v373 = vld [vmem:[%s1 + $0x358] sm:$0xff]
  %v374 = vld [vmem:[%s1 + $0x360] sm:$0xff]
  %v375 = vld [vmem:[%s1 + $0x368] sm:$0xff]
  %v376 = vld [vmem:[%s1 + $0x370] sm:$0xff]
  %v377 = vld [vmem:[%s1 + $0x378] sm:$0xff]
  %v378 = vld [vmem:[%s1 + $0x380] sm:$0xff]
  %v379 = vld [vmem:[%s1 + $0x388] sm:$0xff]
  %v380 = vld [vmem:[%s1 + $0x390] sm:$0xff]
  %v381 = vld [vmem:[%s1 + $0x398] sm:$0xff]
  %v382 = vld [vmem:[%s1 + $0x3a0] sm:$0xff]
  %v383 = vld [vmem:[%s1 + $0x3a8] sm:$0xff]
  %v384 = vld [vmem:[%s1 + $0x3b0] sm:$0xff]
  %v385 = vld [vmem:[%s1 + $0x3b8] sm:$0xff]
  %v386 = vld [vmem:[%s1 + $0x3c0] sm:$0xff]
  %v387 = vld [vmem:[%s1 + $0x3c8] sm:$0xff]
  %v388 = vld [vmem:[%s1 + $0x3d0] sm:$0xff]
  %v389 = vld [vmem:[%s1 + $0x3d8] sm:$0xff]
  %v390 = vld [vmem:[%s1 + $0x3e0] sm:$0xff]
  %v391 = vld [vmem:[%s1 + $0x3e8] sm:$0xff]
  %v392 = vld [vmem:[%s1 + $0x3f0] sm:$0xff]
  %v393 = vld [vmem:[%s1 + $0x3f8] sm:$0xff]
  %v394 = vld [vmem:[%s1 + $0x400] sm:$0xff]
  %v395 = vld [vmem:[%s1 + $0x408] sm:$0xff]
  %v396 = vld [vmem:[%s1 + $0x410] sm:$0xff]
  %v397 = vld [vmem:[%s1 + $0x418] sm:$0xff]
  %v398 = vld [vmem:[%s1 + $0x420] sm:$0xff]
  %v399 = vld [vmem:[%s1 + $0x428] sm:$0xff]
  %v400 = vld [vmem:[%s1 + $0x430] sm:$0xff]
  %v401 = vld [vmem:[%s1 + $0x438] sm:$0xff]
  %v402 = vld [vmem:[%s1 + $0x440] sm:$0xff]
  %v403 = vld [vmem:[%s1 + $0x448] sm:$0xff]
  %v404 = vld [vmem:[%s1 + $0x450] sm:$0xff]
  %v405 = vld [vmem:[%s1 + $0x458] sm:$0xff]
  %v406 = vld [vmem:[%s1 + $0x460] sm:$0xff]
  %v407 = vld [vmem:[%s1 + $0x468] sm:$0xff]
  %v408 = vld [vmem:[%s1 + $0x470] sm:$0xff]
  %v409 = vld [vmem:[%s1 + $0x478] sm:$0xff]
  %v410 = vld [vmem:[%s1 + $0x480] sm:$0xff]
  %v411 = vld [vmem:[%s1 + $0x488] sm:$0xff]
  %v412 = vld [vmem:[%s1 + $0x490] sm:$0xff]
  %v413 = vld [vmem:[%s1 + $0x498] sm:$0xff]
  %v414 = vld [vmem:[%s1 + $0x4a0] sm:$0xff]
  %v415 = vld [vmem:[%s1 + $0x4a8] sm:$0xff]
  %v416 = vld [vmem:[%s1 + $0x4b0] sm:$0xff]
  %v417 = vld [vmem:[%s1 + $0x4b8] sm:$0xff]
  %v418 = vld [vmem:[%s1 + $0x4c0] sm:$0xff]
  %v419 = vld [vmem:[%s1 + $0x4c8] sm:$0xff]
  %v420 = vld [vmem:[%s1 + $0x4d0] sm:$0xff]
  %v421 = vld [vmem:[%s1 + $0x4d8] sm:$0xff]
  %v422 = vld [vmem:[%s1 + $0x4e0] sm:$0xff]
  %v423 = vld [vmem:[%s1 + $0x4e8] sm:$0xff]
  %v424 = vld [vmem:[%s1 + $0x4f0] sm:$0xff]
  %v425 = vld [vmem:[%s1 + $0x4f8] sm:$0xff]
  %v426 = vld [vmem:[%s1 + $0x500] sm:$0xff]
  %v427 = vld [vmem:[%s1 + $0x508] sm:$0xff]
  %v428 = vld [vmem:[%s1 + $0x510] sm:$0xff]
  %v429 = vld [vmem:[%s1 + $0x518] sm:$0xff]
  %v430 = vld [vmem:[%s1 + $0x520] sm:$0xff]
  %v431 = vld [vmem:[%s1 + $0x528] sm:$0xff]
  %v432 = vld [vmem:[%s1 + $0x530] sm:$0xff]
  %v433 = vld [vmem:[%s1 + $0x538] sm:$0xff]
  %v434 = vld [vmem:[%s1 + $0x540] sm:$0xff]
  %v435 = vld [vmem:[%s1 + $0x548] sm:$0xff]
  %v436 = vld [vmem:[%s1 + $0x550] sm:$0xff]
  %v437 = vld [vmem:[%s1 + $0x558] sm:$0xff]
  %v438 = vld [vmem:[%s1 + $0x560] sm:$0xff]
  %v439 = vld [vmem:[%s1 + $0x568] sm:$0xff]
  %v440 = vld [vmem:[%s1 + $0x570] sm:$0xff]
  %v441 = vld [vmem:[%s1 + $0x578] sm:$0xff]
  %v442 = vld [vmem:[%s1 + $0x580] sm:$0xff]
  %v443 = vld [vmem:[%s1 + $0x588] sm:$0xff]
  %v444 = vld [vmem:[%s1 + $0x590] sm:$0xff]
  %v445 = vld [vmem:[%s1 + $0x598] sm:$0xff]
  %v446 = vld [vmem:[%s1 + $0x5a0] sm:$0xff]
  %v447 = vld [vmem:[%s1 + $0x5a8] sm:$0xff]
  %v448 = vld [vmem:[%s1 + $0x5b0] sm:$0xff]
  %v449 = vld [vmem:[%s1 + $0x5b8] sm:$0xff]
  %v450 = vld [vmem:[%s1 + $0x5c0] sm:$0xff]
  %v451 = vld [vmem:[%s1 + $0x5c8] sm:$0xff]
  %v452 = vld [vmem:[%s1 + $0x5d0] sm:$0xff]
  %v453 = vld [vmem:[%s1 + $0x5d8] sm:$0xff]
  %v454 = vld [vmem:[%s1 + $0x5e0] sm:$0xff]
  %v455 = vld [vmem:[%s1 + $0x5e8] sm:$0xff]
  %v456 = vld [vmem:[%s1 + $0x5f0] sm:$0xff]
  %v457 = vld [vmem:[%s1 + $0x5f8] sm:$0xff]
  %v458 = vld [vmem:[%s1 + $0x600] sm:$0xff]
  %v459 = vld [vmem:[%s1 + $0x608] sm:$0xff]
  %v460 = vld [vmem:[%s1 + $0x610] sm:$0xff]
  %v461 = vld [vmem:[%s1 + $0x618] sm:$0xff]
  %v462 = vld [vmem:[%s1 + $0x620] sm:$0xff]
  %v463 = vld [vmem:[%s1 + $0x628] sm:$0xff]
  %v464 = vld [vmem:[%s1 + $0x630] sm:$0xff]
  %v465 = vld [vmem:[%s1 + $0x638] sm:$0xff]
  %v466 = vld [vmem:[%s1 + $0x640] sm:$0xff]
  %v467 = vld [vmem:[%s1 + $0x648] sm:$0xff]
  %v468 = vld [vmem:[%s1 + $0x650] sm:$0xff]
  %v469 = vld [vmem:[%s1 + $0x658] sm:$0xff]
  %v470 = vld [vmem:[%s1 + $0x660] sm:$0xff]
  %v471 = vld [vmem:[%s1 + $0x668] sm:$0xff]
  %v472 = vld [vmem:[%s1 + $0x670] sm:$0xff]
  %v473 = vld [vmem:[%s1 + $0x678] sm:$0xff]
  %v474 = vld [vmem:[%s1 + $0x680] sm:$0xff]
  %v475 = vld [vmem:[%s1 + $0x688] sm:$0xff]
  %v476 = vld [vmem:[%s1 + $0x690] sm:$0xff]
  %v477 = vld [vmem:[%s1 + $0x698] sm:$0xff]
  %v478 = vld [vmem:[%s1 + $0x6a0] sm:$0xff]
  %v479 = vld [vmem:[%s1 + $0x6a8] sm:$0xff]
  %v480 = vld [vmem:[%s1 + $0x6b0] sm:$0xff]
  %v481 = vld [vmem:[%s1 + $0x6b8] sm:$0xff]
  %v482 = vld [vmem:[%s1 + $0x6c0] sm:$0xff]
  %v483 = vld [vmem:[%s1 + $0x6c8] sm:$0xff]
  %v484 = vld [vmem:[%s1 + $0x6d0] sm:$0xff]
  %v485 = vld [vmem:[%s1 + $0x6d8] sm:$0xff]
  %v486 = vld [vmem:[%s1 + $0x6e0] sm:$0xff]
  %v487 = vld [vmem:[%s1 + $0x6e8] sm:$0xff]
  %v488 = vld [vmem:[%s1 + $0x6f0] sm:$0xff]
  %v489 = vld [vmem:[%s1 + $0x6f8] sm:$0xff]
  %v490 = vld [vmem:[%s1 + $0x700] sm:$0xff]
  %v491 = vld [vmem:[%s1 + $0x708] sm:$0xff]
  %v492 = vld [vmem:[%s1 + $0x710] sm:$0xff]
  %v493 = vld [vmem:[%s1 + $0x718] sm:$0xff]
  %v494 = vld [vmem:[%s1 + $0x720] sm:$0xff]
  %v495 = vld [vmem:[%s1 + $0x728] sm:$0xff]
  %v496 = vld [vmem:[%s1 + $0x730] sm:$0xff]
  %v497 = vld [vmem:[%s1 + $0x738] sm:$0xff]
  %v498 = vld [vmem:[%s1 + $0x740] sm:$0xff]
  %v499 = vld [vmem:[%s1 + $0x748] sm:$0xff]
  %v500 = vld [vmem:[%s1 + $0x750] sm:$0xff]
  %v501 = vld [vmem:[%s1 + $0x758] sm:$0xff]
  %v502 = vld [vmem:[%s1 + $0x760] sm:$0xff]
  %v503 = vld [vmem:[%s1 + $0x768] sm:$0xff]
  %v504 = vld [vmem:[%s1 + $0x770] sm:$0xff]
  %v505 = vld [vmem:[%s1 + $0x778] sm:$0xff]
  %v506 = vld [vmem:[%s1 + $0x780] sm:$0xff]
  %v507 = vld [vmem:[%s1 + $0x788] sm:$0xff]
  %v508 = vld [vmem:[%s1 + $0x790] sm:$0xff]
  %v509 = vld [vmem:[%s1 + $0x798] sm:$0xff]
  %v510 = vld [vmem:[%s1 + $0x7a0] sm:$0xff]
  %v511 = vld [vmem:[%s1 + $0x7a8] sm:$0xff]
  %v512 = vld [vmem:[%s1 + $0x7b0] sm:$0xff]
  %v513 = vld [vmem:[%s1 + $0x7b8] sm:$0xff]
  %v514 = vld [vmem:[%s1 + $0x7c0] sm:$0xff]
  %v515 = vld [vmem:[%s1 + $0x7c8] sm:$0xff]
  %vm516 = vcmask 588800
  %v517 = vsel %vm516, %v17, 0.0
  %v518 = vadd.f32 %v16, %v517
  %519 = vadd.xlane.f32.xlu0 %v518
  %v520 = vpop.xlane.xlu0 %519
  %v521 = vsel %vm516, %v19, 0.0
  %v522 = vadd.f32 %v18, %v521
  %523 = vadd.xlane.f32.xlu0 %v522
  %v524 = vpop.xlane.xlu0 %523
  %v525 = vsel %vm516, %v21, 0.0
  %v526 = vadd.f32 %v20, %v525
  %527 = vadd.xlane.f32.xlu0 %v526
  %v528 = vpop.xlane.xlu0 %527
  %v529 = vsel %vm516, %v23, 0.0
  %v530 = vadd.f32 %v22, %v529
  %531 = vadd.xlane.f32.xlu0 %v530
  %v532 = vpop.xlane.xlu0 %531
  %v533 = vsel %vm516, %v25, 0.0
  %v534 = vadd.f32 %v24, %v533
  %535 = vadd.xlane.f32.xlu0 %v534
  %v536 = vpop.xlane.xlu0 %535
  %v537 = vsel %vm516, %v27, 0.0
  %v538 = vadd.f32 %v26, %v537
  %539 = vadd.xlane.f32.xlu0 %v538
  %v540 = vpop.xlane.xlu0 %539
  %v541 = vsel %vm516, %v29, 0.0
  %v542 = vadd.f32 %v28, %v541
  %543 = vadd.xlane.f32.xlu0 %v542
  %v544 = vpop.xlane.xlu0 %543
  %v545 = vsel %vm516, %v31, 0.0
  %v546 = vadd.f32 %v30, %v545
  %547 = vadd.xlane.f32.xlu0 %v546
  %v548 = vpop.xlane.xlu0 %547
  %v549 = vsel %vm516, %v33, 0.0
  %v550 = vadd.f32 %v32, %v549
  %551 = vadd.xlane.f32.xlu0 %v550
  %v552 = vpop.xlane.xlu0 %551
  %v553 = vsel %vm516, %v35, 0.0
  %v554 = vadd.f32 %v34, %v553
  %555 = vadd.xlane.f32.xlu0 %v554
  %v556 = vpop.xlane.xlu0 %555
  %v557 = vsel %vm516, %v37, 0.0
  %v558 = vadd.f32 %v36, %v557
  %559 = vadd.xlane.f32.xlu0 %v558
  %v560 = vpop.xlane.xlu0 %559
  %v561 = vsel %vm516, %v39, 0.0
  %v562 = vadd.f32 %v38, %v561
  %563 = vadd.xlane.f32.xlu0 %v562
  %v564 = vpop.xlane.xlu0 %563
  %v565 = vsel %vm516, %v41, 0.0
  %v566 = vadd.f32 %v40, %v565
  %567 = vadd.xlane.f32.xlu0 %v566
  %v568 = vpop.xlane.xlu0 %567
  %v569 = vsel %vm516, %v43, 0.0
  %v570 = vadd.f32 %v42, %v569
  %571 = vadd.xlane.f32.xlu0 %v570
  %v572 = vpop.xlane.xlu0 %571
  %v573 = vsel %vm516, %v45, 0.0
  %v574 = vadd.f32 %v44, %v573
  %575 = vadd.xlane.f32.xlu0 %v574
  %v576 = vpop.xlane.xlu0 %575
  %v577 = vsel %vm516, %v47, 0.0
  %v578 = vadd.f32 %v46, %v577
  %579 = vadd.xlane.f32.xlu0 %v578
  %v580 = vpop.xlane.xlu0 %579
  %v581 = vsel %vm516, %v49, 0.0
  %v582 = vadd.f32 %v48, %v581
  %583 = vadd.xlane.f32.xlu0 %v582
  %v584 = vpop.xlane.xlu0 %583
  %v585 = vsel %vm516, %v51, 0.0
  %v586 = vadd.f32 %v50, %v585
  %587 = vadd.xlane.f32.xlu0 %v586
  %v588 = vpop.xlane.xlu0 %587
  %v589 = vsel %vm516, %v53, 0.0
  %v590 = vadd.f32 %v52, %v589
  %591 = vadd.xlane.f32.xlu0 %v590
  %v592 = vpop.xlane.xlu0 %591
  %v593 = vsel %vm516, %v55, 0.0
  %v594 = vadd.f32 %v54, %v593
  %595 = vadd.xlane.f32.xlu0 %v594
  %v596 = vpop.xlane.xlu0 %595
  %v597 = vsel %vm516, %v57, 0.0
  %v598 = vadd.f32 %v56, %v597
  %599 = vadd.xlane.f32.xlu0 %v598
  %v600 = vpop.xlane.xlu0 %599
  %v601 = vsel %vm516, %v59, 0.0
  %v602 = vadd.f32 %v58, %v601
  %603 = vadd.xlane.f32.xlu0 %v602
  %v604 = vpop.xlane.xlu0 %603
  %v605 = vsel %vm516, %v61, 0.0
  %v606 = vadd.f32 %v60, %v605
  %607 = vadd.xlane.f32.xlu0 %v606
  %v608 = vpop.xlane.xlu0 %607
  %v609 = vsel %vm516, %v63, 0.0
  %v610 = vadd.f32 %v62, %v609
  %611 = vadd.xlane.f32.xlu0 %v610
  %v612 = vpop.xlane.xlu0 %611
  %v613 = vsel %vm516, %v65, 0.0
  %v614 = vadd.f32 %v64, %v613
  %615 = vadd.xlane.f32.xlu0 %v614
  %v616 = vpop.xlane.xlu0 %615
  %v617 = vsel %vm516, %v67, 0.0
  %v618 = vadd.f32 %v66, %v617
  %619 = vadd.xlane.f32.xlu0 %v618
  %v620 = vpop.xlane.xlu0 %619
  %v621 = vsel %vm516, %v69, 0.0
  %v622 = vadd.f32 %v68, %v621
  %623 = vadd.xlane.f32.xlu0 %v622
  %v624 = vpop.xlane.xlu0 %623
  %v625 = vsel %vm516, %v71, 0.0
  %v626 = vadd.f32 %v70, %v625
  %627 = vadd.xlane.f32.xlu0 %v626
  %v628 = vpop.xlane.xlu0 %627
  %v629 = vsel %vm516, %v73, 0.0
  %v630 = vadd.f32 %v72, %v629
  %631 = vadd.xlane.f32.xlu0 %v630
  %v632 = vpop.xlane.xlu0 %631
  %v633 = vsel %vm516, %v75, 0.0
  %v634 = vadd.f32 %v74, %v633
  %635 = vadd.xlane.f32.xlu0 %v634
  %v636 = vpop.xlane.xlu0 %635
  %v637 = vsel %vm516, %v77, 0.0
  %v638 = vadd.f32 %v76, %v637
  %639 = vadd.xlane.f32.xlu0 %v638
  %v640 = vpop.xlane.xlu0 %639
  %v641 = vsel %vm516, %v79, 0.0
  %v642 = vadd.f32 %v78, %v641
  %643 = vadd.xlane.f32.xlu0 %v642
  %v644 = vpop.xlane.xlu0 %643
  %v645 = vsel %vm516, %v81, 0.0
  %v646 = vadd.f32 %v80, %v645
  %647 = vadd.xlane.f32.xlu0 %v646
  %v648 = vpop.xlane.xlu0 %647
  %v649 = vsel %vm516, %v83, 0.0
  %v650 = vadd.f32 %v82, %v649
  %651 = vadd.xlane.f32.xlu0 %v650
  %v652 = vpop.xlane.xlu0 %651
  %v653 = vsel %vm516, %v85, 0.0
  %v654 = vadd.f32 %v84, %v653
  %655 = vadd.xlane.f32.xlu0 %v654
  %v656 = vpop.xlane.xlu0 %655
  %v657 = vsel %vm516, %v87, 0.0
  %v658 = vadd.f32 %v86, %v657
  %659 = vadd.xlane.f32.xlu0 %v658
  %v660 = vpop.xlane.xlu0 %659
  %v661 = vsel %vm516, %v89, 0.0
  %v662 = vadd.f32 %v88, %v661
  %663 = vadd.xlane.f32.xlu0 %v662
  %v664 = vpop.xlane.xlu0 %663
  %v665 = vsel %vm516, %v91, 0.0
  %v666 = vadd.f32 %v90, %v665
  %667 = vadd.xlane.f32.xlu0 %v666
  %v668 = vpop.xlane.xlu0 %667
  %v669 = vsel %vm516, %v93, 0.0
  %v670 = vadd.f32 %v92, %v669
  %671 = vadd.xlane.f32.xlu0 %v670
  %v672 = vpop.xlane.xlu0 %671
  %v673 = vsel %vm516, %v95, 0.0
  %v674 = vadd.f32 %v94, %v673
  %675 = vadd.xlane.f32.xlu0 %v674
  %v676 = vpop.xlane.xlu0 %675
  %v677 = vsel %vm516, %v97, 0.0
  %v678 = vadd.f32 %v96, %v677
  %679 = vadd.xlane.f32.xlu0 %v678
  %v680 = vpop.xlane.xlu0 %679
  %v681 = vsel %vm516, %v99, 0.0
  %v682 = vadd.f32 %v98, %v681
  %683 = vadd.xlane.f32.xlu0 %v682
  %v684 = vpop.xlane.xlu0 %683
  %v685 = vsel %vm516, %v101, 0.0
  %v686 = vadd.f32 %v100, %v685
  %687 = vadd.xlane.f32.xlu0 %v686
  %v688 = vpop.xlane.xlu0 %687
  %v689 = vsel %vm516, %v103, 0.0
  %v690 = vadd.f32 %v102, %v689
  %691 = vadd.xlane.f32.xlu0 %v690
  %v692 = vpop.xlane.xlu0 %691
  %v693 = vsel %vm516, %v105, 0.0
  %v694 = vadd.f32 %v104, %v693
  %695 = vadd.xlane.f32.xlu0 %v694
  %v696 = vpop.xlane.xlu0 %695
  %v697 = vsel %vm516, %v107, 0.0
  %v698 = vadd.f32 %v106, %v697
  %699 = vadd.xlane.f32.xlu0 %v698
  %v700 = vpop.xlane.xlu0 %699
  %v701 = vsel %vm516, %v109, 0.0
  %v702 = vadd.f32 %v108, %v701
  %703 = vadd.xlane.f32.xlu0 %v702
  %v704 = vpop.xlane.xlu0 %703
  %v705 = vsel %vm516, %v111, 0.0
  %v706 = vadd.f32 %v110, %v705
  %707 = vadd.xlane.f32.xlu0 %v706
  %v708 = vpop.xlane.xlu0 %707
  %v709 = vsel %vm516, %v113, 0.0
  %v710 = vadd.f32 %v112, %v709
  %711 = vadd.xlane.f32.xlu0 %v710
  %v712 = vpop.xlane.xlu0 %711
  %v713 = vsel %vm516, %v115, 0.0
  %v714 = vadd.f32 %v114, %v713
  %715 = vadd.xlane.f32.xlu0 %v714
  %v716 = vpop.xlane.xlu0 %715
  %v717 = vsel %vm516, %v117, 0.0
  %v718 = vadd.f32 %v116, %v717
  %719 = vadd.xlane.f32.xlu0 %v718
  %v720 = vpop.xlane.xlu0 %719
  %v721 = vsel %vm516, %v119, 0.0
  %v722 = vadd.f32 %v118, %v721
  %723 = vadd.xlane.f32.xlu0 %v722
  %v724 = vpop.xlane.xlu0 %723
  %v725 = vsel %vm516, %v121, 0.0
  %v726 = vadd.f32 %v120, %v725
  %727 = vadd.xlane.f32.xlu0 %v726
  %v728 = vpop.xlane.xlu0 %727
  %v729 = vsel %vm516, %v123, 0.0
  %v730 = vadd.f32 %v122, %v729
  %731 = vadd.xlane.f32.xlu0 %v730
  %v732 = vpop.xlane.xlu0 %731
  %v733 = vsel %vm516, %v125, 0.0
  %v734 = vadd.f32 %v124, %v733
  %735 = vadd.xlane.f32.xlu0 %v734
  %v736 = vpop.xlane.xlu0 %735
  %v737 = vsel %vm516, %v127, 0.0
  %v738 = vadd.f32 %v126, %v737
  %739 = vadd.xlane.f32.xlu0 %v738
  %v740 = vpop.xlane.xlu0 %739
  %v741 = vsel %vm516, %v129, 0.0
  %v742 = vadd.f32 %v128, %v741
  %743 = vadd.xlane.f32.xlu0 %v742
  %v744 = vpop.xlane.xlu0 %743
  %v745 = vsel %vm516, %v131, 0.0
  %v746 = vadd.f32 %v130, %v745
  %747 = vadd.xlane.f32.xlu0 %v746
  %v748 = vpop.xlane.xlu0 %747
  %v749 = vsel %vm516, %v133, 0.0
  %v750 = vadd.f32 %v132, %v749
  %751 = vadd.xlane.f32.xlu0 %v750
  %v752 = vpop.xlane.xlu0 %751
  %v753 = vsel %vm516, %v135, 0.0
  %v754 = vadd.f32 %v134, %v753
  %755 = vadd.xlane.f32.xlu0 %v754
  %v756 = vpop.xlane.xlu0 %755
  %v757 = vsel %vm516, %v137, 0.0
  %v758 = vadd.f32 %v136, %v757
  %759 = vadd.xlane.f32.xlu0 %v758
  %v760 = vpop.xlane.xlu0 %759
  %v761 = vsel %vm516, %v139, 0.0
  %v762 = vadd.f32 %v138, %v761
  %763 = vadd.xlane.f32.xlu0 %v762
  %v764 = vpop.xlane.xlu0 %763
  %v765 = vsel %vm516, %v141, 0.0
  %v766 = vadd.f32 %v140, %v765
  %767 = vadd.xlane.f32.xlu0 %v766
  %v768 = vpop.xlane.xlu0 %767
  %v769 = vsel %vm516, %v143, 0.0
  %v770 = vadd.f32 %v142, %v769
  %771 = vadd.xlane.f32.xlu0 %v770
  %v772 = vpop.xlane.xlu0 %771
  %v773 = vsel %vm516, %v145, 0.0
  %v774 = vadd.f32 %v144, %v773
  %775 = vadd.xlane.f32.xlu0 %v774
  %v776 = vpop.xlane.xlu0 %775
  %v777 = vsel %vm516, %v147, 0.0
  %v778 = vadd.f32 %v146, %v777
  %779 = vadd.xlane.f32.xlu0 %v778
  %v780 = vpop.xlane.xlu0 %779
  %v781 = vsel %vm516, %v149, 0.0
  %v782 = vadd.f32 %v148, %v781
  %783 = vadd.xlane.f32.xlu0 %v782
  %v784 = vpop.xlane.xlu0 %783
  %v785 = vsel %vm516, %v151, 0.0
  %v786 = vadd.f32 %v150, %v785
  %787 = vadd.xlane.f32.xlu0 %v786
  %v788 = vpop.xlane.xlu0 %787
  %v789 = vsel %vm516, %v153, 0.0
  %v790 = vadd.f32 %v152, %v789
  %791 = vadd.xlane.f32.xlu0 %v790
  %v792 = vpop.xlane.xlu0 %791
  %v793 = vsel %vm516, %v155, 0.0
  %v794 = vadd.f32 %v154, %v793
  %795 = vadd.xlane.f32.xlu0 %v794
  %v796 = vpop.xlane.xlu0 %795
  %v797 = vsel %vm516, %v157, 0.0
  %v798 = vadd.f32 %v156, %v797
  %799 = vadd.xlane.f32.xlu0 %v798
  %v800 = vpop.xlane.xlu0 %799
  %v801 = vsel %vm516, %v159, 0.0
  %v802 = vadd.f32 %v158, %v801
  %803 = vadd.xlane.f32.xlu0 %v802
  %v804 = vpop.xlane.xlu0 %803
  %v805 = vsel %vm516, %v161, 0.0
  %v806 = vadd.f32 %v160, %v805
  %807 = vadd.xlane.f32.xlu0 %v806
  %v808 = vpop.xlane.xlu0 %807
  %v809 = vsel %vm516, %v163, 0.0
  %v810 = vadd.f32 %v162, %v809
  %811 = vadd.xlane.f32.xlu0 %v810
  %v812 = vpop.xlane.xlu0 %811
  %v813 = vsel %vm516, %v165, 0.0
  %v814 = vadd.f32 %v164, %v813
  %815 = vadd.xlane.f32.xlu0 %v814
  %v816 = vpop.xlane.xlu0 %815
  %v817 = vsel %vm516, %v167, 0.0
  %v818 = vadd.f32 %v166, %v817
  %819 = vadd.xlane.f32.xlu0 %v818
  %v820 = vpop.xlane.xlu0 %819
  %v821 = vsel %vm516, %v169, 0.0
  %v822 = vadd.f32 %v168, %v821
  %823 = vadd.xlane.f32.xlu0 %v822
  %v824 = vpop.xlane.xlu0 %823
  %v825 = vsel %vm516, %v171, 0.0
  %v826 = vadd.f32 %v170, %v825
  %827 = vadd.xlane.f32.xlu0 %v826
  %v828 = vpop.xlane.xlu0 %827
  %v829 = vsel %vm516, %v173, 0.0
  %v830 = vadd.f32 %v172, %v829
  %831 = vadd.xlane.f32.xlu0 %v830
  %v832 = vpop.xlane.xlu0 %831
  %v833 = vsel %vm516, %v175, 0.0
  %v834 = vadd.f32 %v174, %v833
  %835 = vadd.xlane.f32.xlu0 %v834
  %v836 = vpop.xlane.xlu0 %835
  %v837 = vsel %vm516, %v177, 0.0
  %v838 = vadd.f32 %v176, %v837
  %839 = vadd.xlane.f32.xlu0 %v838
  %v840 = vpop.xlane.xlu0 %839
  %v841 = vsel %vm516, %v179, 0.0
  %v842 = vadd.f32 %v178, %v841
  %843 = vadd.xlane.f32.xlu0 %v842
  %v844 = vpop.xlane.xlu0 %843
  %v845 = vsel %vm516, %v181, 0.0
  %v846 = vadd.f32 %v180, %v845
  %847 = vadd.xlane.f32.xlu0 %v846
  %v848 = vpop.xlane.xlu0 %847
  %v849 = vsel %vm516, %v183, 0.0
  %v850 = vadd.f32 %v182, %v849
  %851 = vadd.xlane.f32.xlu0 %v850
  %v852 = vpop.xlane.xlu0 %851
  %v853 = vsel %vm516, %v185, 0.0
  %v854 = vadd.f32 %v184, %v853
  %855 = vadd.xlane.f32.xlu0 %v854
  %v856 = vpop.xlane.xlu0 %855
  %v857 = vsel %vm516, %v187, 0.0
  %v858 = vadd.f32 %v186, %v857
  %859 = vadd.xlane.f32.xlu0 %v858
  %v860 = vpop.xlane.xlu0 %859
  %v861 = vsel %vm516, %v189, 0.0
  %v862 = vadd.f32 %v188, %v861
  %863 = vadd.xlane.f32.xlu0 %v862
  %v864 = vpop.xlane.xlu0 %863
  %v865 = vsel %vm516, %v191, 0.0
  %v866 = vadd.f32 %v190, %v865
  %867 = vadd.xlane.f32.xlu0 %v866
  %v868 = vpop.xlane.xlu0 %867
  %v869 = vsel %vm516, %v193, 0.0
  %v870 = vadd.f32 %v192, %v869
  %871 = vadd.xlane.f32.xlu0 %v870
  %v872 = vpop.xlane.xlu0 %871
  %v873 = vsel %vm516, %v195, 0.0
  %v874 = vadd.f32 %v194, %v873
  %875 = vadd.xlane.f32.xlu0 %v874
  %v876 = vpop.xlane.xlu0 %875
  %v877 = vsel %vm516, %v197, 0.0
  %v878 = vadd.f32 %v196, %v877
  %879 = vadd.xlane.f32.xlu0 %v878
  %v880 = vpop.xlane.xlu0 %879
  %v881 = vsel %vm516, %v199, 0.0
  %v882 = vadd.f32 %v198, %v881
  %883 = vadd.xlane.f32.xlu0 %v882
  %v884 = vpop.xlane.xlu0 %883
  %v885 = vsel %vm516, %v201, 0.0
  %v886 = vadd.f32 %v200, %v885
  %887 = vadd.xlane.f32.xlu0 %v886
  %v888 = vpop.xlane.xlu0 %887
  %v889 = vsel %vm516, %v203, 0.0
  %v890 = vadd.f32 %v202, %v889
  %891 = vadd.xlane.f32.xlu0 %v890
  %v892 = vpop.xlane.xlu0 %891
  %v893 = vsel %vm516, %v205, 0.0
  %v894 = vadd.f32 %v204, %v893
  %895 = vadd.xlane.f32.xlu0 %v894
  %v896 = vpop.xlane.xlu0 %895
  %v897 = vsel %vm516, %v207, 0.0
  %v898 = vadd.f32 %v206, %v897
  %899 = vadd.xlane.f32.xlu0 %v898
  %v900 = vpop.xlane.xlu0 %899
  %v901 = vsel %vm516, %v209, 0.0
  %v902 = vadd.f32 %v208, %v901
  %903 = vadd.xlane.f32.xlu0 %v902
  %v904 = vpop.xlane.xlu0 %903
  %v905 = vsel %vm516, %v211, 0.0
  %v906 = vadd.f32 %v210, %v905
  %907 = vadd.xlane.f32.xlu0 %v906
  %v908 = vpop.xlane.xlu0 %907
  %v909 = vsel %vm516, %v213, 0.0
  %v910 = vadd.f32 %v212, %v909
  %911 = vadd.xlane.f32.xlu0 %v910
  %v912 = vpop.xlane.xlu0 %911
  %v913 = vsel %vm516, %v215, 0.0
  %v914 = vadd.f32 %v214, %v913
  %915 = vadd.xlane.f32.xlu0 %v914
  %v916 = vpop.xlane.xlu0 %915
  %v917 = vsel %vm516, %v217, 0.0
  %v918 = vadd.f32 %v216, %v917
  %919 = vadd.xlane.f32.xlu0 %v918
  %v920 = vpop.xlane.xlu0 %919
  %v921 = vsel %vm516, %v219, 0.0
  %v922 = vadd.f32 %v218, %v921
  %923 = vadd.xlane.f32.xlu0 %v922
  %v924 = vpop.xlane.xlu0 %923
  %v925 = vsel %vm516, %v221, 0.0
  %v926 = vadd.f32 %v220, %v925
  %927 = vadd.xlane.f32.xlu0 %v926
  %v928 = vpop.xlane.xlu0 %927
  %v929 = vsel %vm516, %v223, 0.0
  %v930 = vadd.f32 %v222, %v929
  %931 = vadd.xlane.f32.xlu0 %v930
  %v932 = vpop.xlane.xlu0 %931
  %v933 = vsel %vm516, %v225, 0.0
  %v934 = vadd.f32 %v224, %v933
  %935 = vadd.xlane.f32.xlu0 %v934
  %v936 = vpop.xlane.xlu0 %935
  %v937 = vsel %vm516, %v227, 0.0
  %v938 = vadd.f32 %v226, %v937
  %939 = vadd.xlane.f32.xlu0 %v938
  %v940 = vpop.xlane.xlu0 %939
  %v941 = vsel %vm516, %v229, 0.0
  %v942 = vadd.f32 %v228, %v941
  %943 = vadd.xlane.f32.xlu0 %v942
  %v944 = vpop.xlane.xlu0 %943
  %v945 = vsel %vm516, %v231, 0.0
  %v946 = vadd.f32 %v230, %v945
  %947 = vadd.xlane.f32.xlu0 %v946
  %v948 = vpop.xlane.xlu0 %947
  %v949 = vsel %vm516, %v233, 0.0
  %v950 = vadd.f32 %v232, %v949
  %951 = vadd.xlane.f32.xlu0 %v950
  %v952 = vpop.xlane.xlu0 %951
  %v953 = vsel %vm516, %v235, 0.0
  %v954 = vadd.f32 %v234, %v953
  %955 = vadd.xlane.f32.xlu0 %v954
  %v956 = vpop.xlane.xlu0 %955
  %v957 = vsel %vm516, %v237, 0.0
  %v958 = vadd.f32 %v236, %v957
  %959 = vadd.xlane.f32.xlu0 %v958
  %v960 = vpop.xlane.xlu0 %959
  %v961 = vsel %vm516, %v239, 0.0
  %v962 = vadd.f32 %v238, %v961
  %963 = vadd.xlane.f32.xlu0 %v962
  %v964 = vpop.xlane.xlu0 %963
  %v965 = vsel %vm516, %v241, 0.0
  %v966 = vadd.f32 %v240, %v965
  %967 = vadd.xlane.f32.xlu0 %v966
  %v968 = vpop.xlane.xlu0 %967
  %v969 = vsel %vm516, %v243, 0.0
  %v970 = vadd.f32 %v242, %v969
  %971 = vadd.xlane.f32.xlu0 %v970
  %v972 = vpop.xlane.xlu0 %971
  %v973 = vsel %vm516, %v245, 0.0
  %v974 = vadd.f32 %v244, %v973
  %975 = vadd.xlane.f32.xlu0 %v974
  %v976 = vpop.xlane.xlu0 %975
  %v977 = vsel %vm516, %v247, 0.0
  %v978 = vadd.f32 %v246, %v977
  %979 = vadd.xlane.f32.xlu0 %v978
  %v980 = vpop.xlane.xlu0 %979
  %v981 = vsel %vm516, %v249, 0.0
  %v982 = vadd.f32 %v248, %v981
  %983 = vadd.xlane.f32.xlu0 %v982
  %v984 = vpop.xlane.xlu0 %983
  %v985 = vsel %vm516, %v251, 0.0
  %v986 = vadd.f32 %v250, %v985
  %987 = vadd.xlane.f32.xlu0 %v986
  %v988 = vpop.xlane.xlu0 %987
  %v989 = vsel %vm516, %v253, 0.0
  %v990 = vadd.f32 %v252, %v989
  %991 = vadd.xlane.f32.xlu0 %v990
  %v992 = vpop.xlane.xlu0 %991
  %v993 = vsel %vm516, %v255, 0.0
  %v994 = vadd.f32 %v254, %v993
  %995 = vadd.xlane.f32.xlu0 %v994
  %v996 = vpop.xlane.xlu0 %995
  %v997 = vsel %vm516, %v257, 0.0
  %v998 = vadd.f32 %v256, %v997
  %999 = vadd.xlane.f32.xlu0 %v998
  %v1000 = vpop.xlane.xlu0 %999
  %v1001 = vsel %vm516, %v259, 0.0
  %v1002 = vadd.f32 %v258, %v1001
  %1003 = vadd.xlane.f32.xlu0 %v1002
  %v1004 = vpop.xlane.xlu0 %1003
  %v1005 = vsel %vm516, %v261, 0.0
  %v1006 = vadd.f32 %v260, %v1005
  %1007 = vadd.xlane.f32.xlu0 %v1006
  %v1008 = vpop.xlane.xlu0 %1007
  %v1009 = vsel %vm516, %v263, 0.0
  %v1010 = vadd.f32 %v262, %v1009
  %1011 = vadd.xlane.f32.xlu0 %v1010
  %v1012 = vpop.xlane.xlu0 %1011
  %v1013 = vsel %vm516, %v265, 0.0
  %v1014 = vadd.f32 %v264, %v1013
  %1015 = vadd.xlane.f32.xlu0 %v1014
  %v1016 = vpop.xlane.xlu0 %1015
  %vm1017 = vcmask 7168
  %1018 = vst.msk [vmem:[%s2] sm:$0xff] %vm1017, %v520
  %1019 = vst.msk [vmem:[%s2 + $0x8] sm:$0xff] %vm1017, %v524
  %1020 = vst.msk [vmem:[%s2 + $0x10] sm:$0xff] %vm1017, %v528
  %1021 = vst.msk [vmem:[%s2 + $0x18] sm:$0xff] %vm1017, %v532
  %1022 = vst.msk [vmem:[%s2 + $0x20] sm:$0xff] %vm1017, %v536
  %1023 = vst.msk [vmem:[%s2 + $0x28] sm:$0xff] %vm1017, %v540
  %1024 = vst.msk [vmem:[%s2 + $0x30] sm:$0xff] %vm1017, %v544
  %1025 = vst.msk [vmem:[%s2 + $0x38] sm:$0xff] %vm1017, %v548
  %1026 = vst.msk [vmem:[%s2 + $0x40] sm:$0xff] %vm1017, %v552
  %1027 = vst.msk [vmem:[%s2 + $0x48] sm:$0xff] %vm1017, %v556
  %1028 = vst.msk [vmem:[%s2 + $0x50] sm:$0xff] %vm1017, %v560
  %1029 = vst.msk [vmem:[%s2 + $0x58] sm:$0xff] %vm1017, %v564
  %1030 = vst.msk [vmem:[%s2 + $0x60] sm:$0xff] %vm1017, %v568
  %1031 = vst.msk [vmem:[%s2 + $0x68] sm:$0xff] %vm1017, %v572
  %1032 = vst.msk [vmem:[%s2 + $0x70] sm:$0xff] %vm1017, %v576
  %1033 = vst.msk [vmem:[%s2 + $0x78] sm:$0xff] %vm1017, %v580
  %1034 = vst.msk [vmem:[%s2 + $0x80] sm:$0xff] %vm1017, %v584
  %1035 = vst.msk [vmem:[%s2 + $0x88] sm:$0xff] %vm1017, %v588
  %1036 = vst.msk [vmem:[%s2 + $0x90] sm:$0xff] %vm1017, %v592
  %1037 = vst.msk [vmem:[%s2 + $0x98] sm:$0xff] %vm1017, %v596
  %1038 = vst.msk [vmem:[%s2 + $0xa0] sm:$0xff] %vm1017, %v600
  %1039 = vst.msk [vmem:[%s2 + $0xa8] sm:$0xff] %vm1017, %v604
  %1040 = vst.msk [vmem:[%s2 + $0xb0] sm:$0xff] %vm1017, %v608
  %1041 = vst.msk [vmem:[%s2 + $0xb8] sm:$0xff] %vm1017, %v612
  %1042 = vst.msk [vmem:[%s2 + $0xc0] sm:$0xff] %vm1017, %v616
  %1043 = vst.msk [vmem:[%s2 + $0xc8] sm:$0xff] %vm1017, %v620
  %1044 = vst.msk [vmem:[%s2 + $0xd0] sm:$0xff] %vm1017, %v624
  %1045 = vst.msk [vmem:[%s2 + $0xd8] sm:$0xff] %vm1017, %v628
  %1046 = vst.msk [vmem:[%s2 + $0xe0] sm:$0xff] %vm1017, %v632
  %1047 = vst.msk [vmem:[%s2 + $0xe8] sm:$0xff] %vm1017, %v636
  %1048 = vst.msk [vmem:[%s2 + $0xf0] sm:$0xff] %vm1017, %v640
  %1049 = vst.msk [vmem:[%s2 + $0xf8] sm:$0xff] %vm1017, %v644
  %1050 = vst.msk [vmem:[%s2 + $0x100] sm:$0xff] %vm1017, %v648
  %1051 = vst.msk [vmem:[%s2 + $0x108] sm:$0xff] %vm1017, %v652
  %1052 = vst.msk [vmem:[%s2 + $0x110] sm:$0xff] %vm1017, %v656
  %1053 = vst.msk [vmem:[%s2 + $0x118] sm:$0xff] %vm1017, %v660
  %1054 = vst.msk [vmem:[%s2 + $0x120] sm:$0xff] %vm1017, %v664
  %1055 = vst.msk [vmem:[%s2 + $0x128] sm:$0xff] %vm1017, %v668
  %1056 = vst.msk [vmem:[%s2 + $0x130] sm:$0xff] %vm1017, %v672
  %1057 = vst.msk [vmem:[%s2 + $0x138] sm:$0xff] %vm1017, %v676
  %1058 = vst.msk [vmem:[%s2 + $0x140] sm:$0xff] %vm1017, %v680
  %1059 = vst.msk [vmem:[%s2 + $0x148] sm:$0xff] %vm1017, %v684
  %1060 = vst.msk [vmem:[%s2 + $0x150] sm:$0xff] %vm1017, %v688
  %1061 = vst.msk [vmem:[%s2 + $0x158] sm:$0xff] %vm1017, %v692
  %1062 = vst.msk [vmem:[%s2 + $0x160] sm:$0xff] %vm1017, %v696
  %1063 = vst.msk [vmem:[%s2 + $0x168] sm:$0xff] %vm1017, %v700
  %1064 = vst.msk [vmem:[%s2 + $0x170] sm:$0xff] %vm1017, %v704
  %1065 = vst.msk [vmem:[%s2 + $0x178] sm:$0xff] %vm1017, %v708
  %1066 = vst.msk [vmem:[%s2 + $0x180] sm:$0xff] %vm1017, %v712
  %1067 = vst.msk [vmem:[%s2 + $0x188] sm:$0xff] %vm1017, %v716
  %1068 = vst.msk [vmem:[%s2 + $0x190] sm:$0xff] %vm1017, %v720
  %1069 = vst.msk [vmem:[%s2 + $0x198] sm:$0xff] %vm1017, %v724
  %1070 = vst.msk [vmem:[%s2 + $0x1a0] sm:$0xff] %vm1017, %v728
  %1071 = vst.msk [vmem:[%s2 + $0x1a8] sm:$0xff] %vm1017, %v732
  %1072 = vst.msk [vmem:[%s2 + $0x1b0] sm:$0xff] %vm1017, %v736
  %1073 = vst.msk [vmem:[%s2 + $0x1b8] sm:$0xff] %vm1017, %v740
  %1074 = vst.msk [vmem:[%s2 + $0x1c0] sm:$0xff] %vm1017, %v744
  %1075 = vst.msk [vmem:[%s2 + $0x1c8] sm:$0xff] %vm1017, %v748
  %1076 = vst.msk [vmem:[%s2 + $0x1d0] sm:$0xff] %vm1017, %v752
  %1077 = vst.msk [vmem:[%s2 + $0x1d8] sm:$0xff] %vm1017, %v756
  %1078 = vst.msk [vmem:[%s2 + $0x1e0] sm:$0xff] %vm1017, %v760
  %1079 = vst.msk [vmem:[%s2 + $0x1e8] sm:$0xff] %vm1017, %v764
  %1080 = vst.msk [vmem:[%s2 + $0x1f0] sm:$0xff] %vm1017, %v768
  %1081 = vst.msk [vmem:[%s2 + $0x1f8] sm:$0xff] %vm1017, %v772
  %1082 = vst.msk [vmem:[%s2 + $0x200] sm:$0xff] %vm1017, %v776
  %1083 = vst.msk [vmem:[%s2 + $0x208] sm:$0xff] %vm1017, %v780
  %1084 = vst.msk [vmem:[%s2 + $0x210] sm:$0xff] %vm1017, %v784
  %1085 = vst.msk [vmem:[%s2 + $0x218] sm:$0xff] %vm1017, %v788
  %1086 = vst.msk [vmem:[%s2 + $0x220] sm:$0xff] %vm1017, %v792
  %1087 = vst.msk [vmem:[%s2 + $0x228] sm:$0xff] %vm1017, %v796
  %1088 = vst.msk [vmem:[%s2 + $0x230] sm:$0xff] %vm1017, %v800
  %1089 = vst.msk [vmem:[%s2 + $0x238] sm:$0xff] %vm1017, %v804
  %1090 = vst.msk [vmem:[%s2 + $0x240] sm:$0xff] %vm1017, %v808
  %1091 = vst.msk [vmem:[%s2 + $0x248] sm:$0xff] %vm1017, %v812
  %1092 = vst.msk [vmem:[%s2 + $0x250] sm:$0xff] %vm1017, %v816
  %1093 = vst.msk [vmem:[%s2 + $0x258] sm:$0xff] %vm1017, %v820
  %1094 = vst.msk [vmem:[%s2 + $0x260] sm:$0xff] %vm1017, %v824
  %1095 = vst.msk [vmem:[%s2 + $0x268] sm:$0xff] %vm1017, %v828
  %1096 = vst.msk [vmem:[%s2 + $0x270] sm:$0xff] %vm1017, %v832
  %1097 = vst.msk [vmem:[%s2 + $0x278] sm:$0xff] %vm1017, %v836
  %1098 = vst.msk [vmem:[%s2 + $0x280] sm:$0xff] %vm1017, %v840
  %1099 = vst.msk [vmem:[%s2 + $0x288] sm:$0xff] %vm1017, %v844
  %1100 = vst.msk [vmem:[%s2 + $0x290] sm:$0xff] %vm1017, %v848
  %1101 = vst.msk [vmem:[%s2 + $0x298] sm:$0xff] %vm1017, %v852
  %1102 = vst.msk [vmem:[%s2 + $0x2a0] sm:$0xff] %vm1017, %v856
  %1103 = vst.msk [vmem:[%s2 + $0x2a8] sm:$0xff] %vm1017, %v860
  %1104 = vst.msk [vmem:[%s2 + $0x2b0] sm:$0xff] %vm1017, %v864
  %1105 = vst.msk [vmem:[%s2 + $0x2b8] sm:$0xff] %vm1017, %v868
  %1106 = vst.msk [vmem:[%s2 + $0x2c0] sm:$0xff] %vm1017, %v872
  %1107 = vst.msk [vmem:[%s2 + $0x2c8] sm:$0xff] %vm1017, %v876
  %1108 = vst.msk [vmem:[%s2 + $0x2d0] sm:$0xff] %vm1017, %v880
  %1109 = vst.msk [vmem:[%s2 + $0x2d8] sm:$0xff] %vm1017, %v884
  %1110 = vst.msk [vmem:[%s2 + $0x2e0] sm:$0xff] %vm1017, %v888
  %1111 = vst.msk [vmem:[%s2 + $0x2e8] sm:$0xff] %vm1017, %v892
  %1112 = vst.msk [vmem:[%s2 + $0x2f0] sm:$0xff] %vm1017, %v896
  %1113 = vst.msk [vmem:[%s2 + $0x2f8] sm:$0xff] %vm1017, %v900
  %1114 = vst.msk [vmem:[%s2 + $0x300] sm:$0xff] %vm1017, %v904
  %1115 = vst.msk [vmem:[%s2 + $0x308] sm:$0xff] %vm1017, %v908
  %1116 = vst.msk [vmem:[%s2 + $0x310] sm:$0xff] %vm1017, %v912
  %1117 = vst.msk [vmem:[%s2 + $0x318] sm:$0xff] %vm1017, %v916
  %1118 = vst.msk [vmem:[%s2 + $0x320] sm:$0xff] %vm1017, %v920
  %1119 = vst.msk [vmem:[%s2 + $0x328] sm:$0xff] %vm1017, %v924
  %1120 = vst.msk [vmem:[%s2 + $0x330] sm:$0xff] %vm1017, %v928
  %1121 = vst.msk [vmem:[%s2 + $0x338] sm:$0xff] %vm1017, %v932
  %1122 = vst.msk [vmem:[%s2 + $0x340] sm:$0xff] %vm1017, %v936
  %1123 = vst.msk [vmem:[%s2 + $0x348] sm:$0xff] %vm1017, %v940
  %1124 = vst.msk [vmem:[%s2 + $0x350] sm:$0xff] %vm1017, %v944
  %1125 = vst.msk [vmem:[%s2 + $0x358] sm:$0xff] %vm1017, %v948
  %1126 = vst.msk [vmem:[%s2 + $0x360] sm:$0xff] %vm1017, %v952
  %1127 = vst.msk [vmem:[%s2 + $0x368] sm:$0xff] %vm1017, %v956
  %1128 = vst.msk [vmem:[%s2 + $0x370] sm:$0xff] %vm1017, %v960
  %1129 = vst.msk [vmem:[%s2 + $0x378] sm:$0xff] %vm1017, %v964
  %1130 = vst.msk [vmem:[%s2 + $0x380] sm:$0xff] %vm1017, %v968
  %1131 = vst.msk [vmem:[%s2 + $0x388] sm:$0xff] %vm1017, %v972
  %1132 = vst.msk [vmem:[%s2 + $0x390] sm:$0xff] %vm1017, %v976
  %1133 = vst.msk [vmem:[%s2 + $0x398] sm:$0xff] %vm1017, %v980
  %1134 = vst.msk [vmem:[%s2 + $0x3a0] sm:$0xff] %vm1017, %v984
  %1135 = vst.msk [vmem:[%s2 + $0x3a8] sm:$0xff] %vm1017, %v988
  %1136 = vst.msk [vmem:[%s2 + $0x3b0] sm:$0xff] %vm1017, %v992
  %1137 = vst.msk [vmem:[%s2 + $0x3b8] sm:$0xff] %vm1017, %v996
  %1138 = vst.msk [vmem:[%s2 + $0x3c0] sm:$0xff] %vm1017, %v1000
  %1139 = vst.msk [vmem:[%s2 + $0x3c8] sm:$0xff] %vm1017, %v1004
  %1140 = vst.msk [vmem:[%s2 + $0x3d0] sm:$0xff] %vm1017, %v1008
  %1141 = vst.msk [vmem:[%s2 + $0x3d8] sm:$0xff] %vm1017, %v1012
  %1142 = vst.msk [vmem:[%s2 + $0x3e0] sm:$0xff] %vm1017, %v1016
  %v1143 = vsel %vm516, %v17, inf
  %v1144 = vmin.f32 %v16, %v1143
  %1145 = vmin.xlane.f32.xlu0 %v1144
  %v1146 = vpop.xlane.xlu0 %1145
  %v1147 = vsel %vm516, %v19, inf
  %v1148 = vmin.f32 %v18, %v1147
  %1149 = vmin.xlane.f32.xlu0 %v1148
  %v1150 = vpop.xlane.xlu0 %1149
  %v1151 = vsel %vm516, %v21, inf
  %v1152 = vmin.f32 %v20, %v1151
  %1153 = vmin.xlane.f32.xlu0 %v1152
  %v1154 = vpop.xlane.xlu0 %1153
  %v1155 = vsel %vm516, %v23, inf
  %v1156 = vmin.f32 %v22, %v1155
  %1157 = vmin.xlane.f32.xlu0 %v1156
  %v1158 = vpop.xlane.xlu0 %1157
  %v1159 = vsel %vm516, %v25, inf
  %v1160 = vmin.f32 %v24, %v1159
  %1161 = vmin.xlane.f32.xlu0 %v1160
  %v1162 = vpop.xlane.xlu0 %1161
  %v1163 = vsel %vm516, %v27, inf
  %v1164 = vmin.f32 %v26, %v1163
  %1165 = vmin.xlane.f32.xlu0 %v1164
  %v1166 = vpop.xlane.xlu0 %1165
  %v1167 = vsel %vm516, %v29, inf
  %v1168 = vmin.f32 %v28, %v1167
  %1169 = vmin.xlane.f32.xlu0 %v1168
  %v1170 = vpop.xlane.xlu0 %1169
  %v1171 = vsel %vm516, %v31, inf
  %v1172 = vmin.f32 %v30, %v1171
  %1173 = vmin.xlane.f32.xlu0 %v1172
  %v1174 = vpop.xlane.xlu0 %1173
  %v1175 = vsel %vm516, %v33, inf
  %v1176 = vmin.f32 %v32, %v1175
  %1177 = vmin.xlane.f32.xlu0 %v1176
  %v1178 = vpop.xlane.xlu0 %1177
  %v1179 = vsel %vm516, %v35, inf
  %v1180 = vmin.f32 %v34, %v1179
  %1181 = vmin.xlane.f32.xlu0 %v1180
  %v1182 = vpop.xlane.xlu0 %1181
  %v1183 = vsel %vm516, %v37, inf
  %v1184 = vmin.f32 %v36, %v1183
  %1185 = vmin.xlane.f32.xlu0 %v1184
  %v1186 = vpop.xlane.xlu0 %1185
  %v1187 = vsel %vm516, %v39, inf
  %v1188 = vmin.f32 %v38, %v1187
  %1189 = vmin.xlane.f32.xlu0 %v1188
  %v1190 = vpop.xlane.xlu0 %1189
  %v1191 = vsel %vm516, %v41, inf
  %v1192 = vmin.f32 %v40, %v1191
  %1193 = vmin.xlane.f32.xlu0 %v1192
  %v1194 = vpop.xlane.xlu0 %1193
  %v1195 = vsel %vm516, %v43, inf
  %v1196 = vmin.f32 %v42, %v1195
  %1197 = vmin.xlane.f32.xlu0 %v1196
  %v1198 = vpop.xlane.xlu0 %1197
  %v1199 = vsel %vm516, %v45, inf
  %v1200 = vmin.f32 %v44, %v1199
  %1201 = vmin.xlane.f32.xlu0 %v1200
  %v1202 = vpop.xlane.xlu0 %1201
  %v1203 = vsel %vm516, %v47, inf
  %v1204 = vmin.f32 %v46, %v1203
  %1205 = vmin.xlane.f32.xlu0 %v1204
  %v1206 = vpop.xlane.xlu0 %1205
  %v1207 = vsel %vm516, %v49, inf
  %v1208 = vmin.f32 %v48, %v1207
  %1209 = vmin.xlane.f32.xlu0 %v1208
  %v1210 = vpop.xlane.xlu0 %1209
  %v1211 = vsel %vm516, %v51, inf
  %v1212 = vmin.f32 %v50, %v1211
  %1213 = vmin.xlane.f32.xlu0 %v1212
  %v1214 = vpop.xlane.xlu0 %1213
  %v1215 = vsel %vm516, %v53, inf
  %v1216 = vmin.f32 %v52, %v1215
  %1217 = vmin.xlane.f32.xlu0 %v1216
  %v1218 = vpop.xlane.xlu0 %1217
  %v1219 = vsel %vm516, %v55, inf
  %v1220 = vmin.f32 %v54, %v1219
  %1221 = vmin.xlane.f32.xlu0 %v1220
  %v1222 = vpop.xlane.xlu0 %1221
  %v1223 = vsel %vm516, %v57, inf
  %v1224 = vmin.f32 %v56, %v1223
  %1225 = vmin.xlane.f32.xlu0 %v1224
  %v1226 = vpop.xlane.xlu0 %1225
  %v1227 = vsel %vm516, %v59, inf
  %v1228 = vmin.f32 %v58, %v1227
  %1229 = vmin.xlane.f32.xlu0 %v1228
  %v1230 = vpop.xlane.xlu0 %1229
  %v1231 = vsel %vm516, %v61, inf
  %v1232 = vmin.f32 %v60, %v1231
  %1233 = vmin.xlane.f32.xlu0 %v1232
  %v1234 = vpop.xlane.xlu0 %1233
  %v1235 = vsel %vm516, %v63, inf
  %v1236 = vmin.f32 %v62, %v1235
  %1237 = vmin.xlane.f32.xlu0 %v1236
  %v1238 = vpop.xlane.xlu0 %1237
  %v1239 = vsel %vm516, %v65, inf
  %v1240 = vmin.f32 %v64, %v1239
  %1241 = vmin.xlane.f32.xlu0 %v1240
  %v1242 = vpop.xlane.xlu0 %1241
  %v1243 = vsel %vm516, %v67, inf
  %v1244 = vmin.f32 %v66, %v1243
  %1245 = vmin.xlane.f32.xlu0 %v1244
  %v1246 = vpop.xlane.xlu0 %1245
  %v1247 = vsel %vm516, %v69, inf
  %v1248 = vmin.f32 %v68, %v1247
  %1249 = vmin.xlane.f32.xlu0 %v1248
  %v1250 = vpop.xlane.xlu0 %1249
  %v1251 = vsel %vm516, %v71, inf
  %v1252 = vmin.f32 %v70, %v1251
  %1253 = vmin.xlane.f32.xlu0 %v1252
  %v1254 = vpop.xlane.xlu0 %1253
  %v1255 = vsel %vm516, %v73, inf
  %v1256 = vmin.f32 %v72, %v1255
  %1257 = vmin.xlane.f32.xlu0 %v1256
  %v1258 = vpop.xlane.xlu0 %1257
  %v1259 = vsel %vm516, %v75, inf
  %v1260 = vmin.f32 %v74, %v1259
  %1261 = vmin.xlane.f32.xlu0 %v1260
  %v1262 = vpop.xlane.xlu0 %1261
  %v1263 = vsel %vm516, %v77, inf
  %v1264 = vmin.f32 %v76, %v1263
  %1265 = vmin.xlane.f32.xlu0 %v1264
  %v1266 = vpop.xlane.xlu0 %1265
  %v1267 = vsel %vm516, %v79, inf
  %v1268 = vmin.f32 %v78, %v1267
  %1269 = vmin.xlane.f32.xlu0 %v1268
  %v1270 = vpop.xlane.xlu0 %1269
  %v1271 = vsel %vm516, %v81, inf
  %v1272 = vmin.f32 %v80, %v1271
  %1273 = vmin.xlane.f32.xlu0 %v1272
  %v1274 = vpop.xlane.xlu0 %1273
  %v1275 = vsel %vm516, %v83, inf
  %v1276 = vmin.f32 %v82, %v1275
  %1277 = vmin.xlane.f32.xlu0 %v1276
  %v1278 = vpop.xlane.xlu0 %1277
  %v1279 = vsel %vm516, %v85, inf
  %v1280 = vmin.f32 %v84, %v1279
  %1281 = vmin.xlane.f32.xlu0 %v1280
  %v1282 = vpop.xlane.xlu0 %1281
  %v1283 = vsel %vm516, %v87, inf
  %v1284 = vmin.f32 %v86, %v1283
  %1285 = vmin.xlane.f32.xlu0 %v1284
  %v1286 = vpop.xlane.xlu0 %1285
  %v1287 = vsel %vm516, %v89, inf
  %v1288 = vmin.f32 %v88, %v1287
  %1289 = vmin.xlane.f32.xlu0 %v1288
  %v1290 = vpop.xlane.xlu0 %1289
  %v1291 = vsel %vm516, %v91, inf
  %v1292 = vmin.f32 %v90, %v1291
  %1293 = vmin.xlane.f32.xlu0 %v1292
  %v1294 = vpop.xlane.xlu0 %1293
  %v1295 = vsel %vm516, %v93, inf
  %v1296 = vmin.f32 %v92, %v1295
  %1297 = vmin.xlane.f32.xlu0 %v1296
  %v1298 = vpop.xlane.xlu0 %1297
  %v1299 = vsel %vm516, %v95, inf
  %v1300 = vmin.f32 %v94, %v1299
  %1301 = vmin.xlane.f32.xlu0 %v1300
  %v1302 = vpop.xlane.xlu0 %1301
  %v1303 = vsel %vm516, %v97, inf
  %v1304 = vmin.f32 %v96, %v1303
  %1305 = vmin.xlane.f32.xlu0 %v1304
  %v1306 = vpop.xlane.xlu0 %1305
  %v1307 = vsel %vm516, %v99, inf
  %v1308 = vmin.f32 %v98, %v1307
  %1309 = vmin.xlane.f32.xlu0 %v1308
  %v1310 = vpop.xlane.xlu0 %1309
  %v1311 = vsel %vm516, %v101, inf
  %v1312 = vmin.f32 %v100, %v1311
  %1313 = vmin.xlane.f32.xlu0 %v1312
  %v1314 = vpop.xlane.xlu0 %1313
  %v1315 = vsel %vm516, %v103, inf
  %v1316 = vmin.f32 %v102, %v1315
  %1317 = vmin.xlane.f32.xlu0 %v1316
  %v1318 = vpop.xlane.xlu0 %1317
  %v1319 = vsel %vm516, %v105, inf
  %v1320 = vmin.f32 %v104, %v1319
  %1321 = vmin.xlane.f32.xlu0 %v1320
  %v1322 = vpop.xlane.xlu0 %1321
  %v1323 = vsel %vm516, %v107, inf
  %v1324 = vmin.f32 %v106, %v1323
  %1325 = vmin.xlane.f32.xlu0 %v1324
  %v1326 = vpop.xlane.xlu0 %1325
  %v1327 = vsel %vm516, %v109, inf
  %v1328 = vmin.f32 %v108, %v1327
  %1329 = vmin.xlane.f32.xlu0 %v1328
  %v1330 = vpop.xlane.xlu0 %1329
  %v1331 = vsel %vm516, %v111, inf
  %v1332 = vmin.f32 %v110, %v1331
  %1333 = vmin.xlane.f32.xlu0 %v1332
  %v1334 = vpop.xlane.xlu0 %1333
  %v1335 = vsel %vm516, %v113, inf
  %v1336 = vmin.f32 %v112, %v1335
  %1337 = vmin.xlane.f32.xlu0 %v1336
  %v1338 = vpop.xlane.xlu0 %1337
  %v1339 = vsel %vm516, %v115, inf
  %v1340 = vmin.f32 %v114, %v1339
  %1341 = vmin.xlane.f32.xlu0 %v1340
  %v1342 = vpop.xlane.xlu0 %1341
  %v1343 = vsel %vm516, %v117, inf
  %v1344 = vmin.f32 %v116, %v1343
  %1345 = vmin.xlane.f32.xlu0 %v1344
  %v1346 = vpop.xlane.xlu0 %1345
  %v1347 = vsel %vm516, %v119, inf
  %v1348 = vmin.f32 %v118, %v1347
  %1349 = vmin.xlane.f32.xlu0 %v1348
  %v1350 = vpop.xlane.xlu0 %1349
  %v1351 = vsel %vm516, %v121, inf
  %v1352 = vmin.f32 %v120, %v1351
  %1353 = vmin.xlane.f32.xlu0 %v1352
  %v1354 = vpop.xlane.xlu0 %1353
  %v1355 = vsel %vm516, %v123, inf
  %v1356 = vmin.f32 %v122, %v1355
  %1357 = vmin.xlane.f32.xlu0 %v1356
  %v1358 = vpop.xlane.xlu0 %1357
  %v1359 = vsel %vm516, %v125, inf
  %v1360 = vmin.f32 %v124, %v1359
  %1361 = vmin.xlane.f32.xlu0 %v1360
  %v1362 = vpop.xlane.xlu0 %1361
  %v1363 = vsel %vm516, %v127, inf
  %v1364 = vmin.f32 %v126, %v1363
  %1365 = vmin.xlane.f32.xlu0 %v1364
  %v1366 = vpop.xlane.xlu0 %1365
  %v1367 = vsel %vm516, %v129, inf
  %v1368 = vmin.f32 %v128, %v1367
  %1369 = vmin.xlane.f32.xlu0 %v1368
  %v1370 = vpop.xlane.xlu0 %1369
  %v1371 = vsel %vm516, %v131, inf
  %v1372 = vmin.f32 %v130, %v1371
  %1373 = vmin.xlane.f32.xlu0 %v1372
  %v1374 = vpop.xlane.xlu0 %1373
  %v1375 = vsel %vm516, %v133, inf
  %v1376 = vmin.f32 %v132, %v1375
  %1377 = vmin.xlane.f32.xlu0 %v1376
  %v1378 = vpop.xlane.xlu0 %1377
  %v1379 = vsel %vm516, %v135, inf
  %v1380 = vmin.f32 %v134, %v1379
  %1381 = vmin.xlane.f32.xlu0 %v1380
  %v1382 = vpop.xlane.xlu0 %1381
  %v1383 = vsel %vm516, %v137, inf
  %v1384 = vmin.f32 %v136, %v1383
  %1385 = vmin.xlane.f32.xlu0 %v1384
  %v1386 = vpop.xlane.xlu0 %1385
  %v1387 = vsel %vm516, %v139, inf
  %v1388 = vmin.f32 %v138, %v1387
  %1389 = vmin.xlane.f32.xlu0 %v1388
  %v1390 = vpop.xlane.xlu0 %1389
  %v1391 = vsel %vm516, %v141, inf
  %v1392 = vmin.f32 %v140, %v1391
  %1393 = vmin.xlane.f32.xlu0 %v1392
  %v1394 = vpop.xlane.xlu0 %1393
  %v1395 = vsel %vm516, %v143, inf
  %v1396 = vmin.f32 %v142, %v1395
  %1397 = vmin.xlane.f32.xlu0 %v1396
  %v1398 = vpop.xlane.xlu0 %1397
  %v1399 = vsel %vm516, %v145, inf
  %v1400 = vmin.f32 %v144, %v1399
  %1401 = vmin.xlane.f32.xlu0 %v1400
  %v1402 = vpop.xlane.xlu0 %1401
  %v1403 = vsel %vm516, %v147, inf
  %v1404 = vmin.f32 %v146, %v1403
  %1405 = vmin.xlane.f32.xlu0 %v1404
  %v1406 = vpop.xlane.xlu0 %1405
  %v1407 = vsel %vm516, %v149, inf
  %v1408 = vmin.f32 %v148, %v1407
  %1409 = vmin.xlane.f32.xlu0 %v1408
  %v1410 = vpop.xlane.xlu0 %1409
  %v1411 = vsel %vm516, %v151, inf
  %v1412 = vmin.f32 %v150, %v1411
  %1413 = vmin.xlane.f32.xlu0 %v1412
  %v1414 = vpop.xlane.xlu0 %1413
  %v1415 = vsel %vm516, %v153, inf
  %v1416 = vmin.f32 %v152, %v1415
  %1417 = vmin.xlane.f32.xlu0 %v1416
  %v1418 = vpop.xlane.xlu0 %1417
  %v1419 = vsel %vm516, %v155, inf
  %v1420 = vmin.f32 %v154, %v1419
  %1421 = vmin.xlane.f32.xlu0 %v1420
  %v1422 = vpop.xlane.xlu0 %1421
  %v1423 = vsel %vm516, %v157, inf
  %v1424 = vmin.f32 %v156, %v1423
  %1425 = vmin.xlane.f32.xlu0 %v1424
  %v1426 = vpop.xlane.xlu0 %1425
  %v1427 = vsel %vm516, %v159, inf
  %v1428 = vmin.f32 %v158, %v1427
  %1429 = vmin.xlane.f32.xlu0 %v1428
  %v1430 = vpop.xlane.xlu0 %1429
  %v1431 = vsel %vm516, %v161, inf
  %v1432 = vmin.f32 %v160, %v1431
  %1433 = vmin.xlane.f32.xlu0 %v1432
  %v1434 = vpop.xlane.xlu0 %1433
  %v1435 = vsel %vm516, %v163, inf
  %v1436 = vmin.f32 %v162, %v1435
  %1437 = vmin.xlane.f32.xlu0 %v1436
  %v1438 = vpop.xlane.xlu0 %1437
  %v1439 = vsel %vm516, %v165, inf
  %v1440 = vmin.f32 %v164, %v1439
  %1441 = vmin.xlane.f32.xlu0 %v1440
  %v1442 = vpop.xlane.xlu0 %1441
  %v1443 = vsel %vm516, %v167, inf
  %v1444 = vmin.f32 %v166, %v1443
  %1445 = vmin.xlane.f32.xlu0 %v1444
  %v1446 = vpop.xlane.xlu0 %1445
  %v1447 = vsel %vm516, %v169, inf
  %v1448 = vmin.f32 %v168, %v1447
  %1449 = vmin.xlane.f32.xlu0 %v1448
  %v1450 = vpop.xlane.xlu0 %1449
  %v1451 = vsel %vm516, %v171, inf
  %v1452 = vmin.f32 %v170, %v1451
  %1453 = vmin.xlane.f32.xlu0 %v1452
  %v1454 = vpop.xlane.xlu0 %1453
  %v1455 = vsel %vm516, %v173, inf
  %v1456 = vmin.f32 %v172, %v1455
  %1457 = vmin.xlane.f32.xlu0 %v1456
  %v1458 = vpop.xlane.xlu0 %1457
  %v1459 = vsel %vm516, %v175, inf
  %v1460 = vmin.f32 %v174, %v1459
  %1461 = vmin.xlane.f32.xlu0 %v1460
  %v1462 = vpop.xlane.xlu0 %1461
  %v1463 = vsel %vm516, %v177, inf
  %v1464 = vmin.f32 %v176, %v1463
  %1465 = vmin.xlane.f32.xlu0 %v1464
  %v1466 = vpop.xlane.xlu0 %1465
  %v1467 = vsel %vm516, %v179, inf
  %v1468 = vmin.f32 %v178, %v1467
  %1469 = vmin.xlane.f32.xlu0 %v1468
  %v1470 = vpop.xlane.xlu0 %1469
  %v1471 = vsel %vm516, %v181, inf
  %v1472 = vmin.f32 %v180, %v1471
  %1473 = vmin.xlane.f32.xlu0 %v1472
  %v1474 = vpop.xlane.xlu0 %1473
  %v1475 = vsel %vm516, %v183, inf
  %v1476 = vmin.f32 %v182, %v1475
  %1477 = vmin.xlane.f32.xlu0 %v1476
  %v1478 = vpop.xlane.xlu0 %1477
  %v1479 = vsel %vm516, %v185, inf
  %v1480 = vmin.f32 %v184, %v1479
  %1481 = vmin.xlane.f32.xlu0 %v1480
  %v1482 = vpop.xlane.xlu0 %1481
  %v1483 = vsel %vm516, %v187, inf
  %v1484 = vmin.f32 %v186, %v1483
  %1485 = vmin.xlane.f32.xlu0 %v1484
  %v1486 = vpop.xlane.xlu0 %1485
  %v1487 = vsel %vm516, %v189, inf
  %v1488 = vmin.f32 %v188, %v1487
  %1489 = vmin.xlane.f32.xlu0 %v1488
  %v1490 = vpop.xlane.xlu0 %1489
  %v1491 = vsel %vm516, %v191, inf
  %v1492 = vmin.f32 %v190, %v1491
  %1493 = vmin.xlane.f32.xlu0 %v1492
  %v1494 = vpop.xlane.xlu0 %1493
  %v1495 = vsel %vm516, %v193, inf
  %v1496 = vmin.f32 %v192, %v1495
  %1497 = vmin.xlane.f32.xlu0 %v1496
  %v1498 = vpop.xlane.xlu0 %1497
  %v1499 = vsel %vm516, %v195, inf
  %v1500 = vmin.f32 %v194, %v1499
  %1501 = vmin.xlane.f32.xlu0 %v1500
  %v1502 = vpop.xlane.xlu0 %1501
  %v1503 = vsel %vm516, %v197, inf
  %v1504 = vmin.f32 %v196, %v1503
  %1505 = vmin.xlane.f32.xlu0 %v1504
  %v1506 = vpop.xlane.xlu0 %1505
  %v1507 = vsel %vm516, %v199, inf
  %v1508 = vmin.f32 %v198, %v1507
  %1509 = vmin.xlane.f32.xlu0 %v1508
  %v1510 = vpop.xlane.xlu0 %1509
  %v1511 = vsel %vm516, %v201, inf
  %v1512 = vmin.f32 %v200, %v1511
  %1513 = vmin.xlane.f32.xlu0 %v1512
  %v1514 = vpop.xlane.xlu0 %1513
  %v1515 = vsel %vm516, %v203, inf
  %v1516 = vmin.f32 %v202, %v1515
  %1517 = vmin.xlane.f32.xlu0 %v1516
  %v1518 = vpop.xlane.xlu0 %1517
  %v1519 = vsel %vm516, %v205, inf
  %v1520 = vmin.f32 %v204, %v1519
  %1521 = vmin.xlane.f32.xlu0 %v1520
  %v1522 = vpop.xlane.xlu0 %1521
  %v1523 = vsel %vm516, %v207, inf
  %v1524 = vmin.f32 %v206, %v1523
  %1525 = vmin.xlane.f32.xlu0 %v1524
  %v1526 = vpop.xlane.xlu0 %1525
  %v1527 = vsel %vm516, %v209, inf
  %v1528 = vmin.f32 %v208, %v1527
  %1529 = vmin.xlane.f32.xlu0 %v1528
  %v1530 = vpop.xlane.xlu0 %1529
  %v1531 = vsel %vm516, %v211, inf
  %v1532 = vmin.f32 %v210, %v1531
  %1533 = vmin.xlane.f32.xlu0 %v1532
  %v1534 = vpop.xlane.xlu0 %1533
  %v1535 = vsel %vm516, %v213, inf
  %v1536 = vmin.f32 %v212, %v1535
  %1537 = vmin.xlane.f32.xlu0 %v1536
  %v1538 = vpop.xlane.xlu0 %1537
  %v1539 = vsel %vm516, %v215, inf
  %v1540 = vmin.f32 %v214, %v1539
  %1541 = vmin.xlane.f32.xlu0 %v1540
  %v1542 = vpop.xlane.xlu0 %1541
  %v1543 = vsel %vm516, %v217, inf
  %v1544 = vmin.f32 %v216, %v1543
  %1545 = vmin.xlane.f32.xlu0 %v1544
  %v1546 = vpop.xlane.xlu0 %1545
  %v1547 = vsel %vm516, %v219, inf
  %v1548 = vmin.f32 %v218, %v1547
  %1549 = vmin.xlane.f32.xlu0 %v1548
  %v1550 = vpop.xlane.xlu0 %1549
  %v1551 = vsel %vm516, %v221, inf
  %v1552 = vmin.f32 %v220, %v1551
  %1553 = vmin.xlane.f32.xlu0 %v1552
  %v1554 = vpop.xlane.xlu0 %1553
  %v1555 = vsel %vm516, %v223, inf
  %v1556 = vmin.f32 %v222, %v1555
  %1557 = vmin.xlane.f32.xlu0 %v1556
  %v1558 = vpop.xlane.xlu0 %1557
  %v1559 = vsel %vm516, %v225, inf
  %v1560 = vmin.f32 %v224, %v1559
  %1561 = vmin.xlane.f32.xlu0 %v1560
  %v1562 = vpop.xlane.xlu0 %1561
  %v1563 = vsel %vm516, %v227, inf
  %v1564 = vmin.f32 %v226, %v1563
  %1565 = vmin.xlane.f32.xlu0 %v1564
  %v1566 = vpop.xlane.xlu0 %1565
  %v1567 = vsel %vm516, %v229, inf
  %v1568 = vmin.f32 %v228, %v1567
  %1569 = vmin.xlane.f32.xlu0 %v1568
  %v1570 = vpop.xlane.xlu0 %1569
  %v1571 = vsel %vm516, %v231, inf
  %v1572 = vmin.f32 %v230, %v1571
  %1573 = vmin.xlane.f32.xlu0 %v1572
  %v1574 = vpop.xlane.xlu0 %1573
  %v1575 = vsel %vm516, %v233, inf
  %v1576 = vmin.f32 %v232, %v1575
  %1577 = vmin.xlane.f32.xlu0 %v1576
  %v1578 = vpop.xlane.xlu0 %1577
  %v1579 = vsel %vm516, %v235, inf
  %v1580 = vmin.f32 %v234, %v1579
  %1581 = vmin.xlane.f32.xlu0 %v1580
  %v1582 = vpop.xlane.xlu0 %1581
  %v1583 = vsel %vm516, %v237, inf
  %v1584 = vmin.f32 %v236, %v1583
  %1585 = vmin.xlane.f32.xlu0 %v1584
  %v1586 = vpop.xlane.xlu0 %1585
  %v1587 = vsel %vm516, %v239, inf
  %v1588 = vmin.f32 %v238, %v1587
  %1589 = vmin.xlane.f32.xlu0 %v1588
  %v1590 = vpop.xlane.xlu0 %1589
  %v1591 = vsel %vm516, %v241, inf
  %v1592 = vmin.f32 %v240, %v1591
  %1593 = vmin.xlane.f32.xlu0 %v1592
  %v1594 = vpop.xlane.xlu0 %1593
  %v1595 = vsel %vm516, %v243, inf
  %v1596 = vmin.f32 %v242, %v1595
  %1597 = vmin.xlane.f32.xlu0 %v1596
  %v1598 = vpop.xlane.xlu0 %1597
  %v1599 = vsel %vm516, %v245, inf
  %v1600 = vmin.f32 %v244, %v1599
  %1601 = vmin.xlane.f32.xlu0 %v1600
  %v1602 = vpop.xlane.xlu0 %1601
  %v1603 = vsel %vm516, %v247, inf
  %v1604 = vmin.f32 %v246, %v1603
  %1605 = vmin.xlane.f32.xlu0 %v1604
  %v1606 = vpop.xlane.xlu0 %1605
  %v1607 = vsel %vm516, %v249, inf
  %v1608 = vmin.f32 %v248, %v1607
  %1609 = vmin.xlane.f32.xlu0 %v1608
  %v1610 = vpop.xlane.xlu0 %1609
  %v1611 = vsel %vm516, %v251, inf
  %v1612 = vmin.f32 %v250, %v1611
  %1613 = vmin.xlane.f32.xlu0 %v1612
  %v1614 = vpop.xlane.xlu0 %1613
  %v1615 = vsel %vm516, %v253, inf
  %v1616 = vmin.f32 %v252, %v1615
  %1617 = vmin.xlane.f32.xlu0 %v1616
  %v1618 = vpop.xlane.xlu0 %1617
  %v1619 = vsel %vm516, %v255, inf
  %v1620 = vmin.f32 %v254, %v1619
  %1621 = vmin.xlane.f32.xlu0 %v1620
  %v1622 = vpop.xlane.xlu0 %1621
  %v1623 = vsel %vm516, %v257, inf
  %v1624 = vmin.f32 %v256, %v1623
  %1625 = vmin.xlane.f32.xlu0 %v1624
  %v1626 = vpop.xlane.xlu0 %1625
  %v1627 = vsel %vm516, %v259, inf
  %v1628 = vmin.f32 %v258, %v1627
  %1629 = vmin.xlane.f32.xlu0 %v1628
  %v1630 = vpop.xlane.xlu0 %1629
  %v1631 = vsel %vm516, %v261, inf
  %v1632 = vmin.f32 %v260, %v1631
  %1633 = vmin.xlane.f32.xlu0 %v1632
  %v1634 = vpop.xlane.xlu0 %1633
  %v1635 = vsel %vm516, %v263, inf
  %v1636 = vmin.f32 %v262, %v1635
  %1637 = vmin.xlane.f32.xlu0 %v1636
  %v1638 = vpop.xlane.xlu0 %1637
  %v1639 = vsel %vm516, %v265, inf
  %v1640 = vmin.f32 %v264, %v1639
  %1641 = vmin.xlane.f32.xlu0 %v1640
  %v1642 = vpop.xlane.xlu0 %1641
  %1643 = vst.msk [vmem:[%s3] sm:$0xff] %vm1017, %v1146
  %1644 = vst.msk [vmem:[%s3 + $0x8] sm:$0xff] %vm1017, %v1150
  %1645 = vst.msk [vmem:[%s3 + $0x10] sm:$0xff] %vm1017, %v1154
  %1646 = vst.msk [vmem:[%s3 + $0x18] sm:$0xff] %vm1017, %v1158
  %1647 = vst.msk [vmem:[%s3 + $0x20] sm:$0xff] %vm1017, %v1162
  %1648 = vst.msk [vmem:[%s3 + $0x28] sm:$0xff] %vm1017, %v1166
  %1649 = vst.msk [vmem:[%s3 + $0x30] sm:$0xff] %vm1017, %v1170
  %1650 = vst.msk [vmem:[%s3 + $0x38] sm:$0xff] %vm1017, %v1174
  %1651 = vst.msk [vmem:[%s3 + $0x40] sm:$0xff] %vm1017, %v1178
  %1652 = vst.msk [vmem:[%s3 + $0x48] sm:$0xff] %vm1017, %v1182
  %1653 = vst.msk [vmem:[%s3 + $0x50] sm:$0xff] %vm1017, %v1186
  %1654 = vst.msk [vmem:[%s3 + $0x58] sm:$0xff] %vm1017, %v1190
  %1655 = vst.msk [vmem:[%s3 + $0x60] sm:$0xff] %vm1017, %v1194
  %1656 = vst.msk [vmem:[%s3 + $0x68] sm:$0xff] %vm1017, %v1198
  %1657 = vst.msk [vmem:[%s3 + $0x70] sm:$0xff] %vm1017, %v1202
  %1658 = vst.msk [vmem:[%s3 + $0x78] sm:$0xff] %vm1017, %v1206
  %1659 = vst.msk [vmem:[%s3 + $0x80] sm:$0xff] %vm1017, %v1210
  %1660 = vst.msk [vmem:[%s3 + $0x88] sm:$0xff] %vm1017, %v1214
  %1661 = vst.msk [vmem:[%s3 + $0x90] sm:$0xff] %vm1017, %v1218
  %1662 = vst.msk [vmem:[%s3 + $0x98] sm:$0xff] %vm1017, %v1222
  %1663 = vst.msk [vmem:[%s3 + $0xa0] sm:$0xff] %vm1017, %v1226
  %1664 = vst.msk [vmem:[%s3 + $0xa8] sm:$0xff] %vm1017, %v1230
  %1665 = vst.msk [vmem:[%s3 + $0xb0] sm:$0xff] %vm1017, %v1234
  %1666 = vst.msk [vmem:[%s3 + $0xb8] sm:$0xff] %vm1017, %v1238
  %1667 = vst.msk [vmem:[%s3 + $0xc0] sm:$0xff] %vm1017, %v1242
  %1668 = vst.msk [vmem:[%s3 + $0xc8] sm:$0xff] %vm1017, %v1246
  %1669 = vst.msk [vmem:[%s3 + $0xd0] sm:$0xff] %vm1017, %v1250
  %1670 = vst.msk [vmem:[%s3 + $0xd8] sm:$0xff] %vm1017, %v1254
  %1671 = vst.msk [vmem:[%s3 + $0xe0] sm:$0xff] %vm1017, %v1258
  %1672 = vst.msk [vmem:[%s3 + $0xe8] sm:$0xff] %vm1017, %v1262
  %1673 = vst.msk [vmem:[%s3 + $0xf0] sm:$0xff] %vm1017, %v1266
  %1674 = vst.msk [vmem:[%s3 + $0xf8] sm:$0xff] %vm1017, %v1270
  %1675 = vst.msk [vmem:[%s3 + $0x100] sm:$0xff] %vm1017, %v1274
  %1676 = vst.msk [vmem:[%s3 + $0x108] sm:$0xff] %vm1017, %v1278
  %1677 = vst.msk [vmem:[%s3 + $0x110] sm:$0xff] %vm1017, %v1282
  %1678 = vst.msk [vmem:[%s3 + $0x118] sm:$0xff] %vm1017, %v1286
  %1679 = vst.msk [vmem:[%s3 + $0x120] sm:$0xff] %vm1017, %v1290
  %1680 = vst.msk [vmem:[%s3 + $0x128] sm:$0xff] %vm1017, %v1294
  %1681 = vst.msk [vmem:[%s3 + $0x130] sm:$0xff] %vm1017, %v1298
  %1682 = vst.msk [vmem:[%s3 + $0x138] sm:$0xff] %vm1017, %v1302
  %1683 = vst.msk [vmem:[%s3 + $0x140] sm:$0xff] %vm1017, %v1306
  %1684 = vst.msk [vmem:[%s3 + $0x148] sm:$0xff] %vm1017, %v1310
  %1685 = vst.msk [vmem:[%s3 + $0x150] sm:$0xff] %vm1017, %v1314
  %1686 = vst.msk [vmem:[%s3 + $0x158] sm:$0xff] %vm1017, %v1318
  %1687 = vst.msk [vmem:[%s3 + $0x160] sm:$0xff] %vm1017, %v1322
  %1688 = vst.msk [vmem:[%s3 + $0x168] sm:$0xff] %vm1017, %v1326
  %1689 = vst.msk [vmem:[%s3 + $0x170] sm:$0xff] %vm1017, %v1330
  %1690 = vst.msk [vmem:[%s3 + $0x178] sm:$0xff] %vm1017, %v1334
  %1691 = vst.msk [vmem:[%s3 + $0x180] sm:$0xff] %vm1017, %v1338
  %1692 = vst.msk [vmem:[%s3 + $0x188] sm:$0xff] %vm1017, %v1342
  %1693 = vst.msk [vmem:[%s3 + $0x190] sm:$0xff] %vm1017, %v1346
  %1694 = vst.msk [vmem:[%s3 + $0x198] sm:$0xff] %vm1017, %v1350
  %1695 = vst.msk [vmem:[%s3 + $0x1a0] sm:$0xff] %vm1017, %v1354
  %1696 = vst.msk [vmem:[%s3 + $0x1a8] sm:$0xff] %vm1017, %v1358
  %1697 = vst.msk [vmem:[%s3 + $0x1b0] sm:$0xff] %vm1017, %v1362
  %1698 = vst.msk [vmem:[%s3 + $0x1b8] sm:$0xff] %vm1017, %v1366
  %1699 = vst.msk [vmem:[%s3 + $0x1c0] sm:$0xff] %vm1017, %v1370
  %1700 = vst.msk [vmem:[%s3 + $0x1c8] sm:$0xff] %vm1017, %v1374
  %1701 = vst.msk [vmem:[%s3 + $0x1d0] sm:$0xff] %vm1017, %v1378
  %1702 = vst.msk [vmem:[%s3 + $0x1d8] sm:$0xff] %vm1017, %v1382
  %1703 = vst.msk [vmem:[%s3 + $0x1e0] sm:$0xff] %vm1017, %v1386
  %1704 = vst.msk [vmem:[%s3 + $0x1e8] sm:$0xff] %vm1017, %v1390
  %1705 = vst.msk [vmem:[%s3 + $0x1f0] sm:$0xff] %vm1017, %v1394
  %1706 = vst.msk [vmem:[%s3 + $0x1f8] sm:$0xff] %vm1017, %v1398
  %1707 = vst.msk [vmem:[%s3 + $0x200] sm:$0xff] %vm1017, %v1402
  %1708 = vst.msk [vmem:[%s3 + $0x208] sm:$0xff] %vm1017, %v1406
  %1709 = vst.msk [vmem:[%s3 + $0x210] sm:$0xff] %vm1017, %v1410
  %1710 = vst.msk [vmem:[%s3 + $0x218] sm:$0xff] %vm1017, %v1414
  %1711 = vst.msk [vmem:[%s3 + $0x220] sm:$0xff] %vm1017, %v1418
  %1712 = vst.msk [vmem:[%s3 + $0x228] sm:$0xff] %vm1017, %v1422
  %1713 = vst.msk [vmem:[%s3 + $0x230] sm:$0xff] %vm1017, %v1426
  %1714 = vst.msk [vmem:[%s3 + $0x238] sm:$0xff] %vm1017, %v1430
  %1715 = vst.msk [vmem:[%s3 + $0x240] sm:$0xff] %vm1017, %v1434
  %1716 = vst.msk [vmem:[%s3 + $0x248] sm:$0xff] %vm1017, %v1438
  %1717 = vst.msk [vmem:[%s3 + $0x250] sm:$0xff] %vm1017, %v1442
  %1718 = vst.msk [vmem:[%s3 + $0x258] sm:$0xff] %vm1017, %v1446
  %1719 = vst.msk [vmem:[%s3 + $0x260] sm:$0xff] %vm1017, %v1450
  %1720 = vst.msk [vmem:[%s3 + $0x268] sm:$0xff] %vm1017, %v1454
  %1721 = vst.msk [vmem:[%s3 + $0x270] sm:$0xff] %vm1017, %v1458
  %1722 = vst.msk [vmem:[%s3 + $0x278] sm:$0xff] %vm1017, %v1462
  %1723 = vst.msk [vmem:[%s3 + $0x280] sm:$0xff] %vm1017, %v1466
  %1724 = vst.msk [vmem:[%s3 + $0x288] sm:$0xff] %vm1017, %v1470
  %1725 = vst.msk [vmem:[%s3 + $0x290] sm:$0xff] %vm1017, %v1474
  %1726 = vst.msk [vmem:[%s3 + $0x298] sm:$0xff] %vm1017, %v1478
  %1727 = vst.msk [vmem:[%s3 + $0x2a0] sm:$0xff] %vm1017, %v1482
  %1728 = vst.msk [vmem:[%s3 + $0x2a8] sm:$0xff] %vm1017, %v1486
  %1729 = vst.msk [vmem:[%s3 + $0x2b0] sm:$0xff] %vm1017, %v1490
  %1730 = vst.msk [vmem:[%s3 + $0x2b8] sm:$0xff] %vm1017, %v1494
  %1731 = vst.msk [vmem:[%s3 + $0x2c0] sm:$0xff] %vm1017, %v1498
  %1732 = vst.msk [vmem:[%s3 + $0x2c8] sm:$0xff] %vm1017, %v1502
  %1733 = vst.msk [vmem:[%s3 + $0x2d0] sm:$0xff] %vm1017, %v1506
  %1734 = vst.msk [vmem:[%s3 + $0x2d8] sm:$0xff] %vm1017, %v1510
  %1735 = vst.msk [vmem:[%s3 + $0x2e0] sm:$0xff] %vm1017, %v1514
  %1736 = vst.msk [vmem:[%s3 + $0x2e8] sm:$0xff] %vm1017, %v1518
  %1737 = vst.msk [vmem:[%s3 + $0x2f0] sm:$0xff] %vm1017, %v1522
  %1738 = vst.msk [vmem:[%s3 + $0x2f8] sm:$0xff] %vm1017, %v1526
  %1739 = vst.msk [vmem:[%s3 + $0x300] sm:$0xff] %vm1017, %v1530
  %1740 = vst.msk [vmem:[%s3 + $0x308] sm:$0xff] %vm1017, %v1534
  %1741 = vst.msk [vmem:[%s3 + $0x310] sm:$0xff] %vm1017, %v1538
  %1742 = vst.msk [vmem:[%s3 + $0x318] sm:$0xff] %vm1017, %v1542
  %1743 = vst.msk [vmem:[%s3 + $0x320] sm:$0xff] %vm1017, %v1546
  %1744 = vst.msk [vmem:[%s3 + $0x328] sm:$0xff] %vm1017, %v1550
  %1745 = vst.msk [vmem:[%s3 + $0x330] sm:$0xff] %vm1017, %v1554
  %1746 = vst.msk [vmem:[%s3 + $0x338] sm:$0xff] %vm1017, %v1558
  %1747 = vst.msk [vmem:[%s3 + $0x340] sm:$0xff] %vm1017, %v1562
  %1748 = vst.msk [vmem:[%s3 + $0x348] sm:$0xff] %vm1017, %v1566
  %1749 = vst.msk [vmem:[%s3 + $0x350] sm:$0xff] %vm1017, %v1570
  %1750 = vst.msk [vmem:[%s3 + $0x358] sm:$0xff] %vm1017, %v1574
  %1751 = vst.msk [vmem:[%s3 + $0x360] sm:$0xff] %vm1017, %v1578
  %1752 = vst.msk [vmem:[%s3 + $0x368] sm:$0xff] %vm1017, %v1582
  %1753 = vst.msk [vmem:[%s3 + $0x370] sm:$0xff] %vm1017, %v1586
  %1754 = vst.msk [vmem:[%s3 + $0x378] sm:$0xff] %vm1017, %v1590
  %1755 = vst.msk [vmem:[%s3 + $0x380] sm:$0xff] %vm1017, %v1594
  %1756 = vst.msk [vmem:[%s3 + $0x388] sm:$0xff] %vm1017, %v1598
  %1757 = vst.msk [vmem:[%s3 + $0x390] sm:$0xff] %vm1017, %v1602
  %1758 = vst.msk [vmem:[%s3 + $0x398] sm:$0xff] %vm1017, %v1606
  %1759 = vst.msk [vmem:[%s3 + $0x3a0] sm:$0xff] %vm1017, %v1610
  %1760 = vst.msk [vmem:[%s3 + $0x3a8] sm:$0xff] %vm1017, %v1614
  %1761 = vst.msk [vmem:[%s3 + $0x3b0] sm:$0xff] %vm1017, %v1618
  %1762 = vst.msk [vmem:[%s3 + $0x3b8] sm:$0xff] %vm1017, %v1622
  %1763 = vst.msk [vmem:[%s3 + $0x3c0] sm:$0xff] %vm1017, %v1626
  %1764 = vst.msk [vmem:[%s3 + $0x3c8] sm:$0xff] %vm1017, %v1630
  %1765 = vst.msk [vmem:[%s3 + $0x3d0] sm:$0xff] %vm1017, %v1634
  %1766 = vst.msk [vmem:[%s3 + $0x3d8] sm:$0xff] %vm1017, %v1638
  %1767 = vst.msk [vmem:[%s3 + $0x3e0] sm:$0xff] %vm1017, %v1642
  %v1768 = vsel %vm516, %v17, -inf
  %v1769 = vmax.f32 %v16, %v1768
  %1770 = vmax.xlane.f32.xlu0 %v1769
  %v1771 = vpop.xlane.xlu0 %1770
  %v1772 = vsel %vm516, %v19, -inf
  %v1773 = vmax.f32 %v18, %v1772
  %1774 = vmax.xlane.f32.xlu0 %v1773
  %v1775 = vpop.xlane.xlu0 %1774
  %v1776 = vsel %vm516, %v21, -inf
  %v1777 = vmax.f32 %v20, %v1776
  %1778 = vmax.xlane.f32.xlu0 %v1777
  %v1779 = vpop.xlane.xlu0 %1778
  %v1780 = vsel %vm516, %v23, -inf
  %v1781 = vmax.f32 %v22, %v1780
  %1782 = vmax.xlane.f32.xlu0 %v1781
  %v1783 = vpop.xlane.xlu0 %1782
  %v1784 = vsel %vm516, %v25, -inf
  %v1785 = vmax.f32 %v24, %v1784
  %1786 = vmax.xlane.f32.xlu0 %v1785
  %v1787 = vpop.xlane.xlu0 %1786
  %v1788 = vsel %vm516, %v27, -inf
  %v1789 = vmax.f32 %v26, %v1788
  %1790 = vmax.xlane.f32.xlu0 %v1789
  %v1791 = vpop.xlane.xlu0 %1790
  %v1792 = vsel %vm516, %v29, -inf
  %v1793 = vmax.f32 %v28, %v1792
  %1794 = vmax.xlane.f32.xlu0 %v1793
  %v1795 = vpop.xlane.xlu0 %1794
  %v1796 = vsel %vm516, %v31, -inf
  %v1797 = vmax.f32 %v30, %v1796
  %1798 = vmax.xlane.f32.xlu0 %v1797
  %v1799 = vpop.xlane.xlu0 %1798
  %v1800 = vsel %vm516, %v33, -inf
  %v1801 = vmax.f32 %v32, %v1800
  %1802 = vmax.xlane.f32.xlu0 %v1801
  %v1803 = vpop.xlane.xlu0 %1802
  %v1804 = vsel %vm516, %v35, -inf
  %v1805 = vmax.f32 %v34, %v1804
  %1806 = vmax.xlane.f32.xlu0 %v1805
  %v1807 = vpop.xlane.xlu0 %1806
  %v1808 = vsel %vm516, %v37, -inf
  %v1809 = vmax.f32 %v36, %v1808
  %1810 = vmax.xlane.f32.xlu0 %v1809
  %v1811 = vpop.xlane.xlu0 %1810
  %v1812 = vsel %vm516, %v39, -inf
  %v1813 = vmax.f32 %v38, %v1812
  %1814 = vmax.xlane.f32.xlu0 %v1813
  %v1815 = vpop.xlane.xlu0 %1814
  %v1816 = vsel %vm516, %v41, -inf
  %v1817 = vmax.f32 %v40, %v1816
  %1818 = vmax.xlane.f32.xlu0 %v1817
  %v1819 = vpop.xlane.xlu0 %1818
  %v1820 = vsel %vm516, %v43, -inf
  %v1821 = vmax.f32 %v42, %v1820
  %1822 = vmax.xlane.f32.xlu0 %v1821
  %v1823 = vpop.xlane.xlu0 %1822
  %v1824 = vsel %vm516, %v45, -inf
  %v1825 = vmax.f32 %v44, %v1824
  %1826 = vmax.xlane.f32.xlu0 %v1825
  %v1827 = vpop.xlane.xlu0 %1826
  %v1828 = vsel %vm516, %v47, -inf
  %v1829 = vmax.f32 %v46, %v1828
  %1830 = vmax.xlane.f32.xlu0 %v1829
  %v1831 = vpop.xlane.xlu0 %1830
  %v1832 = vsel %vm516, %v49, -inf
  %v1833 = vmax.f32 %v48, %v1832
  %1834 = vmax.xlane.f32.xlu0 %v1833
  %v1835 = vpop.xlane.xlu0 %1834
  %v1836 = vsel %vm516, %v51, -inf
  %v1837 = vmax.f32 %v50, %v1836
  %1838 = vmax.xlane.f32.xlu0 %v1837
  %v1839 = vpop.xlane.xlu0 %1838
  %v1840 = vsel %vm516, %v53, -inf
  %v1841 = vmax.f32 %v52, %v1840
  %1842 = vmax.xlane.f32.xlu0 %v1841
  %v1843 = vpop.xlane.xlu0 %1842
  %v1844 = vsel %vm516, %v55, -inf
  %v1845 = vmax.f32 %v54, %v1844
  %1846 = vmax.xlane.f32.xlu0 %v1845
  %v1847 = vpop.xlane.xlu0 %1846
  %v1848 = vsel %vm516, %v57, -inf
  %v1849 = vmax.f32 %v56, %v1848
  %1850 = vmax.xlane.f32.xlu0 %v1849
  %v1851 = vpop.xlane.xlu0 %1850
  %v1852 = vsel %vm516, %v59, -inf
  %v1853 = vmax.f32 %v58, %v1852
  %1854 = vmax.xlane.f32.xlu0 %v1853
  %v1855 = vpop.xlane.xlu0 %1854
  %v1856 = vsel %vm516, %v61, -inf
  %v1857 = vmax.f32 %v60, %v1856
  %1858 = vmax.xlane.f32.xlu0 %v1857
  %v1859 = vpop.xlane.xlu0 %1858
  %v1860 = vsel %vm516, %v63, -inf
  %v1861 = vmax.f32 %v62, %v1860
  %1862 = vmax.xlane.f32.xlu0 %v1861
  %v1863 = vpop.xlane.xlu0 %1862
  %v1864 = vsel %vm516, %v65, -inf
  %v1865 = vmax.f32 %v64, %v1864
  %1866 = vmax.xlane.f32.xlu0 %v1865
  %v1867 = vpop.xlane.xlu0 %1866
  %v1868 = vsel %vm516, %v67, -inf
  %v1869 = vmax.f32 %v66, %v1868
  %1870 = vmax.xlane.f32.xlu0 %v1869
  %v1871 = vpop.xlane.xlu0 %1870
  %v1872 = vsel %vm516, %v69, -inf
  %v1873 = vmax.f32 %v68, %v1872
  %1874 = vmax.xlane.f32.xlu0 %v1873
  %v1875 = vpop.xlane.xlu0 %1874
  %v1876 = vsel %vm516, %v71, -inf
  %v1877 = vmax.f32 %v70, %v1876
  %1878 = vmax.xlane.f32.xlu0 %v1877
  %v1879 = vpop.xlane.xlu0 %1878
  %v1880 = vsel %vm516, %v73, -inf
  %v1881 = vmax.f32 %v72, %v1880
  %1882 = vmax.xlane.f32.xlu0 %v1881
  %v1883 = vpop.xlane.xlu0 %1882
  %v1884 = vsel %vm516, %v75, -inf
  %v1885 = vmax.f32 %v74, %v1884
  %1886 = vmax.xlane.f32.xlu0 %v1885
  %v1887 = vpop.xlane.xlu0 %1886
  %v1888 = vsel %vm516, %v77, -inf
  %v1889 = vmax.f32 %v76, %v1888
  %1890 = vmax.xlane.f32.xlu0 %v1889
  %v1891 = vpop.xlane.xlu0 %1890
  %v1892 = vsel %vm516, %v79, -inf
  %v1893 = vmax.f32 %v78, %v1892
  %1894 = vmax.xlane.f32.xlu0 %v1893
  %v1895 = vpop.xlane.xlu0 %1894
  %v1896 = vsel %vm516, %v81, -inf
  %v1897 = vmax.f32 %v80, %v1896
  %1898 = vmax.xlane.f32.xlu0 %v1897
  %v1899 = vpop.xlane.xlu0 %1898
  %v1900 = vsel %vm516, %v83, -inf
  %v1901 = vmax.f32 %v82, %v1900
  %1902 = vmax.xlane.f32.xlu0 %v1901
  %v1903 = vpop.xlane.xlu0 %1902
  %v1904 = vsel %vm516, %v85, -inf
  %v1905 = vmax.f32 %v84, %v1904
  %1906 = vmax.xlane.f32.xlu0 %v1905
  %v1907 = vpop.xlane.xlu0 %1906
  %v1908 = vsel %vm516, %v87, -inf
  %v1909 = vmax.f32 %v86, %v1908
  %1910 = vmax.xlane.f32.xlu0 %v1909
  %v1911 = vpop.xlane.xlu0 %1910
  %v1912 = vsel %vm516, %v89, -inf
  %v1913 = vmax.f32 %v88, %v1912
  %1914 = vmax.xlane.f32.xlu0 %v1913
  %v1915 = vpop.xlane.xlu0 %1914
  %v1916 = vsel %vm516, %v91, -inf
  %v1917 = vmax.f32 %v90, %v1916
  %1918 = vmax.xlane.f32.xlu0 %v1917
  %v1919 = vpop.xlane.xlu0 %1918
  %v1920 = vsel %vm516, %v93, -inf
  %v1921 = vmax.f32 %v92, %v1920
  %1922 = vmax.xlane.f32.xlu0 %v1921
  %v1923 = vpop.xlane.xlu0 %1922
  %v1924 = vsel %vm516, %v95, -inf
  %v1925 = vmax.f32 %v94, %v1924
  %1926 = vmax.xlane.f32.xlu0 %v1925
  %v1927 = vpop.xlane.xlu0 %1926
  %v1928 = vsel %vm516, %v97, -inf
  %v1929 = vmax.f32 %v96, %v1928
  %1930 = vmax.xlane.f32.xlu0 %v1929
  %v1931 = vpop.xlane.xlu0 %1930
  %v1932 = vsel %vm516, %v99, -inf
  %v1933 = vmax.f32 %v98, %v1932
  %1934 = vmax.xlane.f32.xlu0 %v1933
  %v1935 = vpop.xlane.xlu0 %1934
  %v1936 = vsel %vm516, %v101, -inf
  %v1937 = vmax.f32 %v100, %v1936
  %1938 = vmax.xlane.f32.xlu0 %v1937
  %v1939 = vpop.xlane.xlu0 %1938
  %v1940 = vsel %vm516, %v103, -inf
  %v1941 = vmax.f32 %v102, %v1940
  %1942 = vmax.xlane.f32.xlu0 %v1941
  %v1943 = vpop.xlane.xlu0 %1942
  %v1944 = vsel %vm516, %v105, -inf
  %v1945 = vmax.f32 %v104, %v1944
  %1946 = vmax.xlane.f32.xlu0 %v1945
  %v1947 = vpop.xlane.xlu0 %1946
  %v1948 = vsel %vm516, %v107, -inf
  %v1949 = vmax.f32 %v106, %v1948
  %1950 = vmax.xlane.f32.xlu0 %v1949
  %v1951 = vpop.xlane.xlu0 %1950
  %v1952 = vsel %vm516, %v109, -inf
  %v1953 = vmax.f32 %v108, %v1952
  %1954 = vmax.xlane.f32.xlu0 %v1953
  %v1955 = vpop.xlane.xlu0 %1954
  %v1956 = vsel %vm516, %v111, -inf
  %v1957 = vmax.f32 %v110, %v1956
  %1958 = vmax.xlane.f32.xlu0 %v1957
  %v1959 = vpop.xlane.xlu0 %1958
  %v1960 = vsel %vm516, %v113, -inf
  %v1961 = vmax.f32 %v112, %v1960
  %1962 = vmax.xlane.f32.xlu0 %v1961
  %v1963 = vpop.xlane.xlu0 %1962
  %v1964 = vsel %vm516, %v115, -inf
  %v1965 = vmax.f32 %v114, %v1964
  %1966 = vmax.xlane.f32.xlu0 %v1965
  %v1967 = vpop.xlane.xlu0 %1966
  %v1968 = vsel %vm516, %v117, -inf
  %v1969 = vmax.f32 %v116, %v1968
  %1970 = vmax.xlane.f32.xlu0 %v1969
  %v1971 = vpop.xlane.xlu0 %1970
  %v1972 = vsel %vm516, %v119, -inf
  %v1973 = vmax.f32 %v118, %v1972
  %1974 = vmax.xlane.f32.xlu0 %v1973
  %v1975 = vpop.xlane.xlu0 %1974
  %v1976 = vsel %vm516, %v121, -inf
  %v1977 = vmax.f32 %v120, %v1976
  %1978 = vmax.xlane.f32.xlu0 %v1977
  %v1979 = vpop.xlane.xlu0 %1978
  %v1980 = vsel %vm516, %v123, -inf
  %v1981 = vmax.f32 %v122, %v1980
  %1982 = vmax.xlane.f32.xlu0 %v1981
  %v1983 = vpop.xlane.xlu0 %1982
  %v1984 = vsel %vm516, %v125, -inf
  %v1985 = vmax.f32 %v124, %v1984
  %1986 = vmax.xlane.f32.xlu0 %v1985
  %v1987 = vpop.xlane.xlu0 %1986
  %v1988 = vsel %vm516, %v127, -inf
  %v1989 = vmax.f32 %v126, %v1988
  %1990 = vmax.xlane.f32.xlu0 %v1989
  %v1991 = vpop.xlane.xlu0 %1990
  %v1992 = vsel %vm516, %v129, -inf
  %v1993 = vmax.f32 %v128, %v1992
  %1994 = vmax.xlane.f32.xlu0 %v1993
  %v1995 = vpop.xlane.xlu0 %1994
  %v1996 = vsel %vm516, %v131, -inf
  %v1997 = vmax.f32 %v130, %v1996
  %1998 = vmax.xlane.f32.xlu0 %v1997
  %v1999 = vpop.xlane.xlu0 %1998
  %v2000 = vsel %vm516, %v133, -inf
  %v2001 = vmax.f32 %v132, %v2000
  %2002 = vmax.xlane.f32.xlu0 %v2001
  %v2003 = vpop.xlane.xlu0 %2002
  %v2004 = vsel %vm516, %v135, -inf
  %v2005 = vmax.f32 %v134, %v2004
  %2006 = vmax.xlane.f32.xlu0 %v2005
  %v2007 = vpop.xlane.xlu0 %2006
  %v2008 = vsel %vm516, %v137, -inf
  %v2009 = vmax.f32 %v136, %v2008
  %2010 = vmax.xlane.f32.xlu0 %v2009
  %v2011 = vpop.xlane.xlu0 %2010
  %v2012 = vsel %vm516, %v139, -inf
  %v2013 = vmax.f32 %v138, %v2012
  %2014 = vmax.xlane.f32.xlu0 %v2013
  %v2015 = vpop.xlane.xlu0 %2014
  %v2016 = vsel %vm516, %v141, -inf
  %v2017 = vmax.f32 %v140, %v2016
  %2018 = vmax.xlane.f32.xlu0 %v2017
  %v2019 = vpop.xlane.xlu0 %2018
  %v2020 = vsel %vm516, %v143, -inf
  %v2021 = vmax.f32 %v142, %v2020
  %2022 = vmax.xlane.f32.xlu0 %v2021
  %v2023 = vpop.xlane.xlu0 %2022
  %v2024 = vsel %vm516, %v145, -inf
  %v2025 = vmax.f32 %v144, %v2024
  %2026 = vmax.xlane.f32.xlu0 %v2025
  %v2027 = vpop.xlane.xlu0 %2026
  %v2028 = vsel %vm516, %v147, -inf
  %v2029 = vmax.f32 %v146, %v2028
  %2030 = vmax.xlane.f32.xlu0 %v2029
  %v2031 = vpop.xlane.xlu0 %2030
  %v2032 = vsel %vm516, %v149, -inf
  %v2033 = vmax.f32 %v148, %v2032
  %2034 = vmax.xlane.f32.xlu0 %v2033
  %v2035 = vpop.xlane.xlu0 %2034
  %v2036 = vsel %vm516, %v151, -inf
  %v2037 = vmax.f32 %v150, %v2036
  %2038 = vmax.xlane.f32.xlu0 %v2037
  %v2039 = vpop.xlane.xlu0 %2038
  %v2040 = vsel %vm516, %v153, -inf
  %v2041 = vmax.f32 %v152, %v2040
  %2042 = vmax.xlane.f32.xlu0 %v2041
  %v2043 = vpop.xlane.xlu0 %2042
  %v2044 = vsel %vm516, %v155, -inf
  %v2045 = vmax.f32 %v154, %v2044
  %2046 = vmax.xlane.f32.xlu0 %v2045
  %v2047 = vpop.xlane.xlu0 %2046
  %v2048 = vsel %vm516, %v157, -inf
  %v2049 = vmax.f32 %v156, %v2048
  %2050 = vmax.xlane.f32.xlu0 %v2049
  %v2051 = vpop.xlane.xlu0 %2050
  %v2052 = vsel %vm516, %v159, -inf
  %v2053 = vmax.f32 %v158, %v2052
  %2054 = vmax.xlane.f32.xlu0 %v2053
  %v2055 = vpop.xlane.xlu0 %2054
  %v2056 = vsel %vm516, %v161, -inf
  %v2057 = vmax.f32 %v160, %v2056
  %2058 = vmax.xlane.f32.xlu0 %v2057
  %v2059 = vpop.xlane.xlu0 %2058
  %v2060 = vsel %vm516, %v163, -inf
  %v2061 = vmax.f32 %v162, %v2060
  %2062 = vmax.xlane.f32.xlu0 %v2061
  %v2063 = vpop.xlane.xlu0 %2062
  %v2064 = vsel %vm516, %v165, -inf
  %v2065 = vmax.f32 %v164, %v2064
  %2066 = vmax.xlane.f32.xlu0 %v2065
  %v2067 = vpop.xlane.xlu0 %2066
  %v2068 = vsel %vm516, %v167, -inf
  %v2069 = vmax.f32 %v166, %v2068
  %2070 = vmax.xlane.f32.xlu0 %v2069
  %v2071 = vpop.xlane.xlu0 %2070
  %v2072 = vsel %vm516, %v169, -inf
  %v2073 = vmax.f32 %v168, %v2072
  %2074 = vmax.xlane.f32.xlu0 %v2073
  %v2075 = vpop.xlane.xlu0 %2074
  %v2076 = vsel %vm516, %v171, -inf
  %v2077 = vmax.f32 %v170, %v2076
  %2078 = vmax.xlane.f32.xlu0 %v2077
  %v2079 = vpop.xlane.xlu0 %2078
  %v2080 = vsel %vm516, %v173, -inf
  %v2081 = vmax.f32 %v172, %v2080
  %2082 = vmax.xlane.f32.xlu0 %v2081
  %v2083 = vpop.xlane.xlu0 %2082
  %v2084 = vsel %vm516, %v175, -inf
  %v2085 = vmax.f32 %v174, %v2084
  %2086 = vmax.xlane.f32.xlu0 %v2085
  %v2087 = vpop.xlane.xlu0 %2086
  %v2088 = vsel %vm516, %v177, -inf
  %v2089 = vmax.f32 %v176, %v2088
  %2090 = vmax.xlane.f32.xlu0 %v2089
  %v2091 = vpop.xlane.xlu0 %2090
  %v2092 = vsel %vm516, %v179, -inf
  %v2093 = vmax.f32 %v178, %v2092
  %2094 = vmax.xlane.f32.xlu0 %v2093
  %v2095 = vpop.xlane.xlu0 %2094
  %v2096 = vsel %vm516, %v181, -inf
  %v2097 = vmax.f32 %v180, %v2096
  %2098 = vmax.xlane.f32.xlu0 %v2097
  %v2099 = vpop.xlane.xlu0 %2098
  %v2100 = vsel %vm516, %v183, -inf
  %v2101 = vmax.f32 %v182, %v2100
  %2102 = vmax.xlane.f32.xlu0 %v2101
  %v2103 = vpop.xlane.xlu0 %2102
  %v2104 = vsel %vm516, %v185, -inf
  %v2105 = vmax.f32 %v184, %v2104
  %2106 = vmax.xlane.f32.xlu0 %v2105
  %v2107 = vpop.xlane.xlu0 %2106
  %v2108 = vsel %vm516, %v187, -inf
  %v2109 = vmax.f32 %v186, %v2108
  %2110 = vmax.xlane.f32.xlu0 %v2109
  %v2111 = vpop.xlane.xlu0 %2110
  %v2112 = vsel %vm516, %v189, -inf
  %v2113 = vmax.f32 %v188, %v2112
  %2114 = vmax.xlane.f32.xlu0 %v2113
  %v2115 = vpop.xlane.xlu0 %2114
  %v2116 = vsel %vm516, %v191, -inf
  %v2117 = vmax.f32 %v190, %v2116
  %2118 = vmax.xlane.f32.xlu0 %v2117
  %v2119 = vpop.xlane.xlu0 %2118
  %v2120 = vsel %vm516, %v193, -inf
  %v2121 = vmax.f32 %v192, %v2120
  %2122 = vmax.xlane.f32.xlu0 %v2121
  %v2123 = vpop.xlane.xlu0 %2122
  %v2124 = vsel %vm516, %v195, -inf
  %v2125 = vmax.f32 %v194, %v2124
  %2126 = vmax.xlane.f32.xlu0 %v2125
  %v2127 = vpop.xlane.xlu0 %2126
  %v2128 = vsel %vm516, %v197, -inf
  %v2129 = vmax.f32 %v196, %v2128
  %2130 = vmax.xlane.f32.xlu0 %v2129
  %v2131 = vpop.xlane.xlu0 %2130
  %v2132 = vsel %vm516, %v199, -inf
  %v2133 = vmax.f32 %v198, %v2132
  %2134 = vmax.xlane.f32.xlu0 %v2133
  %v2135 = vpop.xlane.xlu0 %2134
  %v2136 = vsel %vm516, %v201, -inf
  %v2137 = vmax.f32 %v200, %v2136
  %2138 = vmax.xlane.f32.xlu0 %v2137
  %v2139 = vpop.xlane.xlu0 %2138
  %v2140 = vsel %vm516, %v203, -inf
  %v2141 = vmax.f32 %v202, %v2140
  %2142 = vmax.xlane.f32.xlu0 %v2141
  %v2143 = vpop.xlane.xlu0 %2142
  %v2144 = vsel %vm516, %v205, -inf
  %v2145 = vmax.f32 %v204, %v2144
  %2146 = vmax.xlane.f32.xlu0 %v2145
  %v2147 = vpop.xlane.xlu0 %2146
  %v2148 = vsel %vm516, %v207, -inf
  %v2149 = vmax.f32 %v206, %v2148
  %2150 = vmax.xlane.f32.xlu0 %v2149
  %v2151 = vpop.xlane.xlu0 %2150
  %v2152 = vsel %vm516, %v209, -inf
  %v2153 = vmax.f32 %v208, %v2152
  %2154 = vmax.xlane.f32.xlu0 %v2153
  %v2155 = vpop.xlane.xlu0 %2154
  %v2156 = vsel %vm516, %v211, -inf
  %v2157 = vmax.f32 %v210, %v2156
  %2158 = vmax.xlane.f32.xlu0 %v2157
  %v2159 = vpop.xlane.xlu0 %2158
  %v2160 = vsel %vm516, %v213, -inf
  %v2161 = vmax.f32 %v212, %v2160
  %2162 = vmax.xlane.f32.xlu0 %v2161
  %v2163 = vpop.xlane.xlu0 %2162
  %v2164 = vsel %vm516, %v215, -inf
  %v2165 = vmax.f32 %v214, %v2164
  %2166 = vmax.xlane.f32.xlu0 %v2165
  %v2167 = vpop.xlane.xlu0 %2166
  %v2168 = vsel %vm516, %v217, -inf
  %v2169 = vmax.f32 %v216, %v2168
  %2170 = vmax.xlane.f32.xlu0 %v2169
  %v2171 = vpop.xlane.xlu0 %2170
  %v2172 = vsel %vm516, %v219, -inf
  %v2173 = vmax.f32 %v218, %v2172
  %2174 = vmax.xlane.f32.xlu0 %v2173
  %v2175 = vpop.xlane.xlu0 %2174
  %v2176 = vsel %vm516, %v221, -inf
  %v2177 = vmax.f32 %v220, %v2176
  %2178 = vmax.xlane.f32.xlu0 %v2177
  %v2179 = vpop.xlane.xlu0 %2178
  %v2180 = vsel %vm516, %v223, -inf
  %v2181 = vmax.f32 %v222, %v2180
  %2182 = vmax.xlane.f32.xlu0 %v2181
  %v2183 = vpop.xlane.xlu0 %2182
  %v2184 = vsel %vm516, %v225, -inf
  %v2185 = vmax.f32 %v224, %v2184
  %2186 = vmax.xlane.f32.xlu0 %v2185
  %v2187 = vpop.xlane.xlu0 %2186
  %v2188 = vsel %vm516, %v227, -inf
  %v2189 = vmax.f32 %v226, %v2188
  %2190 = vmax.xlane.f32.xlu0 %v2189
  %v2191 = vpop.xlane.xlu0 %2190
  %v2192 = vsel %vm516, %v229, -inf
  %v2193 = vmax.f32 %v228, %v2192
  %2194 = vmax.xlane.f32.xlu0 %v2193
  %v2195 = vpop.xlane.xlu0 %2194
  %v2196 = vsel %vm516, %v231, -inf
  %v2197 = vmax.f32 %v230, %v2196
  %2198 = vmax.xlane.f32.xlu0 %v2197
  %v2199 = vpop.xlane.xlu0 %2198
  %v2200 = vsel %vm516, %v233, -inf
  %v2201 = vmax.f32 %v232, %v2200
  %2202 = vmax.xlane.f32.xlu0 %v2201
  %v2203 = vpop.xlane.xlu0 %2202
  %v2204 = vsel %vm516, %v235, -inf
  %v2205 = vmax.f32 %v234, %v2204
  %2206 = vmax.xlane.f32.xlu0 %v2205
  %v2207 = vpop.xlane.xlu0 %2206
  %v2208 = vsel %vm516, %v237, -inf
  %v2209 = vmax.f32 %v236, %v2208
  %2210 = vmax.xlane.f32.xlu0 %v2209
  %v2211 = vpop.xlane.xlu0 %2210
  %v2212 = vsel %vm516, %v239, -inf
  %v2213 = vmax.f32 %v238, %v2212
  %2214 = vmax.xlane.f32.xlu0 %v2213
  %v2215 = vpop.xlane.xlu0 %2214
  %v2216 = vsel %vm516, %v241, -inf
  %v2217 = vmax.f32 %v240, %v2216
  %2218 = vmax.xlane.f32.xlu0 %v2217
  %v2219 = vpop.xlane.xlu0 %2218
  %v2220 = vsel %vm516, %v243, -inf
  %v2221 = vmax.f32 %v242, %v2220
  %2222 = vmax.xlane.f32.xlu0 %v2221
  %v2223 = vpop.xlane.xlu0 %2222
  %v2224 = vsel %vm516, %v245, -inf
  %v2225 = vmax.f32 %v244, %v2224
  %2226 = vmax.xlane.f32.xlu0 %v2225
  %v2227 = vpop.xlane.xlu0 %2226
  %v2228 = vsel %vm516, %v247, -inf
  %v2229 = vmax.f32 %v246, %v2228
  %2230 = vmax.xlane.f32.xlu0 %v2229
  %v2231 = vpop.xlane.xlu0 %2230
  %v2232 = vsel %vm516, %v249, -inf
  %v2233 = vmax.f32 %v248, %v2232
  %2234 = vmax.xlane.f32.xlu0 %v2233
  %v2235 = vpop.xlane.xlu0 %2234
  %v2236 = vsel %vm516, %v251, -inf
  %v2237 = vmax.f32 %v250, %v2236
  %2238 = vmax.xlane.f32.xlu0 %v2237
  %v2239 = vpop.xlane.xlu0 %2238
  %v2240 = vsel %vm516, %v253, -inf
  %v2241 = vmax.f32 %v252, %v2240
  %2242 = vmax.xlane.f32.xlu0 %v2241
  %v2243 = vpop.xlane.xlu0 %2242
  %v2244 = vsel %vm516, %v255, -inf
  %v2245 = vmax.f32 %v254, %v2244
  %2246 = vmax.xlane.f32.xlu0 %v2245
  %v2247 = vpop.xlane.xlu0 %2246
  %v2248 = vsel %vm516, %v257, -inf
  %v2249 = vmax.f32 %v256, %v2248
  %2250 = vmax.xlane.f32.xlu0 %v2249
  %v2251 = vpop.xlane.xlu0 %2250
  %v2252 = vsel %vm516, %v259, -inf
  %v2253 = vmax.f32 %v258, %v2252
  %2254 = vmax.xlane.f32.xlu0 %v2253
  %v2255 = vpop.xlane.xlu0 %2254
  %v2256 = vsel %vm516, %v261, -inf
  %v2257 = vmax.f32 %v260, %v2256
  %2258 = vmax.xlane.f32.xlu0 %v2257
  %v2259 = vpop.xlane.xlu0 %2258
  %v2260 = vsel %vm516, %v263, -inf
  %v2261 = vmax.f32 %v262, %v2260
  %2262 = vmax.xlane.f32.xlu0 %v2261
  %v2263 = vpop.xlane.xlu0 %2262
  %v2264 = vsel %vm516, %v265, -inf
  %v2265 = vmax.f32 %v264, %v2264
  %2266 = vmax.xlane.f32.xlu0 %v2265
  %v2267 = vpop.xlane.xlu0 %2266
  %2268 = vst.msk [vmem:[%s4] sm:$0xff] %vm1017, %v1771
  %2269 = vst.msk [vmem:[%s4 + $0x8] sm:$0xff] %vm1017, %v1775
  %2270 = vst.msk [vmem:[%s4 + $0x10] sm:$0xff] %vm1017, %v1779
  %2271 = vst.msk [vmem:[%s4 + $0x18] sm:$0xff] %vm1017, %v1783
  %2272 = vst.msk [vmem:[%s4 + $0x20] sm:$0xff] %vm1017, %v1787
  %2273 = vst.msk [vmem:[%s4 + $0x28] sm:$0xff] %vm1017, %v1791
  %2274 = vst.msk [vmem:[%s4 + $0x30] sm:$0xff] %vm1017, %v1795
  %2275 = vst.msk [vmem:[%s4 + $0x38] sm:$0xff] %vm1017, %v1799
  %2276 = vst.msk [vmem:[%s4 + $0x40] sm:$0xff] %vm1017, %v1803
  %2277 = vst.msk [vmem:[%s4 + $0x48] sm:$0xff] %vm1017, %v1807
  %2278 = vst.msk [vmem:[%s4 + $0x50] sm:$0xff] %vm1017, %v1811
  %2279 = vst.msk [vmem:[%s4 + $0x58] sm:$0xff] %vm1017, %v1815
  %2280 = vst.msk [vmem:[%s4 + $0x60] sm:$0xff] %vm1017, %v1819
  %2281 = vst.msk [vmem:[%s4 + $0x68] sm:$0xff] %vm1017, %v1823
  %2282 = vst.msk [vmem:[%s4 + $0x70] sm:$0xff] %vm1017, %v1827
  %2283 = vst.msk [vmem:[%s4 + $0x78] sm:$0xff] %vm1017, %v1831
  %2284 = vst.msk [vmem:[%s4 + $0x80] sm:$0xff] %vm1017, %v1835
  %2285 = vst.msk [vmem:[%s4 + $0x88] sm:$0xff] %vm1017, %v1839
  %2286 = vst.msk [vmem:[%s4 + $0x90] sm:$0xff] %vm1017, %v1843
  %2287 = vst.msk [vmem:[%s4 + $0x98] sm:$0xff] %vm1017, %v1847
  %2288 = vst.msk [vmem:[%s4 + $0xa0] sm:$0xff] %vm1017, %v1851
  %2289 = vst.msk [vmem:[%s4 + $0xa8] sm:$0xff] %vm1017, %v1855
  %2290 = vst.msk [vmem:[%s4 + $0xb0] sm:$0xff] %vm1017, %v1859
  %2291 = vst.msk [vmem:[%s4 + $0xb8] sm:$0xff] %vm1017, %v1863
  %2292 = vst.msk [vmem:[%s4 + $0xc0] sm:$0xff] %vm1017, %v1867
  %2293 = vst.msk [vmem:[%s4 + $0xc8] sm:$0xff] %vm1017, %v1871
  %2294 = vst.msk [vmem:[%s4 + $0xd0] sm:$0xff] %vm1017, %v1875
  %2295 = vst.msk [vmem:[%s4 + $0xd8] sm:$0xff] %vm1017, %v1879
  %2296 = vst.msk [vmem:[%s4 + $0xe0] sm:$0xff] %vm1017, %v1883
  %2297 = vst.msk [vmem:[%s4 + $0xe8] sm:$0xff] %vm1017, %v1887
  %2298 = vst.msk [vmem:[%s4 + $0xf0] sm:$0xff] %vm1017, %v1891
  %2299 = vst.msk [vmem:[%s4 + $0xf8] sm:$0xff] %vm1017, %v1895
  %2300 = vst.msk [vmem:[%s4 + $0x100] sm:$0xff] %vm1017, %v1899
  %2301 = vst.msk [vmem:[%s4 + $0x108] sm:$0xff] %vm1017, %v1903
  %2302 = vst.msk [vmem:[%s4 + $0x110] sm:$0xff] %vm1017, %v1907
  %2303 = vst.msk [vmem:[%s4 + $0x118] sm:$0xff] %vm1017, %v1911
  %2304 = vst.msk [vmem:[%s4 + $0x120] sm:$0xff] %vm1017, %v1915
  %2305 = vst.msk [vmem:[%s4 + $0x128] sm:$0xff] %vm1017, %v1919
  %2306 = vst.msk [vmem:[%s4 + $0x130] sm:$0xff] %vm1017, %v1923
  %2307 = vst.msk [vmem:[%s4 + $0x138] sm:$0xff] %vm1017, %v1927
  %2308 = vst.msk [vmem:[%s4 + $0x140] sm:$0xff] %vm1017, %v1931
  %2309 = vst.msk [vmem:[%s4 + $0x148] sm:$0xff] %vm1017, %v1935
  %2310 = vst.msk [vmem:[%s4 + $0x150] sm:$0xff] %vm1017, %v1939
  %2311 = vst.msk [vmem:[%s4 + $0x158] sm:$0xff] %vm1017, %v1943
  %2312 = vst.msk [vmem:[%s4 + $0x160] sm:$0xff] %vm1017, %v1947
  %2313 = vst.msk [vmem:[%s4 + $0x168] sm:$0xff] %vm1017, %v1951
  %2314 = vst.msk [vmem:[%s4 + $0x170] sm:$0xff] %vm1017, %v1955
  %2315 = vst.msk [vmem:[%s4 + $0x178] sm:$0xff] %vm1017, %v1959
  %2316 = vst.msk [vmem:[%s4 + $0x180] sm:$0xff] %vm1017, %v1963
  %2317 = vst.msk [vmem:[%s4 + $0x188] sm:$0xff] %vm1017, %v1967
  %2318 = vst.msk [vmem:[%s4 + $0x190] sm:$0xff] %vm1017, %v1971
  %2319 = vst.msk [vmem:[%s4 + $0x198] sm:$0xff] %vm1017, %v1975
  %2320 = vst.msk [vmem:[%s4 + $0x1a0] sm:$0xff] %vm1017, %v1979
  %2321 = vst.msk [vmem:[%s4 + $0x1a8] sm:$0xff] %vm1017, %v1983
  %2322 = vst.msk [vmem:[%s4 + $0x1b0] sm:$0xff] %vm1017, %v1987
  %2323 = vst.msk [vmem:[%s4 + $0x1b8] sm:$0xff] %vm1017, %v1991
  %2324 = vst.msk [vmem:[%s4 + $0x1c0] sm:$0xff] %vm1017, %v1995
  %2325 = vst.msk [vmem:[%s4 + $0x1c8] sm:$0xff] %vm1017, %v1999
  %2326 = vst.msk [vmem:[%s4 + $0x1d0] sm:$0xff] %vm1017, %v2003
  %2327 = vst.msk [vmem:[%s4 + $0x1d8] sm:$0xff] %vm1017, %v2007
  %2328 = vst.msk [vmem:[%s4 + $0x1e0] sm:$0xff] %vm1017, %v2011
  %2329 = vst.msk [vmem:[%s4 + $0x1e8] sm:$0xff] %vm1017, %v2015
  %2330 = vst.msk [vmem:[%s4 + $0x1f0] sm:$0xff] %vm1017, %v2019
  %2331 = vst.msk [vmem:[%s4 + $0x1f8] sm:$0xff] %vm1017, %v2023
  %2332 = vst.msk [vmem:[%s4 + $0x200] sm:$0xff] %vm1017, %v2027
  %2333 = vst.msk [vmem:[%s4 + $0x208] sm:$0xff] %vm1017, %v2031
  %2334 = vst.msk [vmem:[%s4 + $0x210] sm:$0xff] %vm1017, %v2035
  %2335 = vst.msk [vmem:[%s4 + $0x218] sm:$0xff] %vm1017, %v2039
  %2336 = vst.msk [vmem:[%s4 + $0x220] sm:$0xff] %vm1017, %v2043
  %2337 = vst.msk [vmem:[%s4 + $0x228] sm:$0xff] %vm1017, %v2047
  %2338 = vst.msk [vmem:[%s4 + $0x230] sm:$0xff] %vm1017, %v2051
  %2339 = vst.msk [vmem:[%s4 + $0x238] sm:$0xff] %vm1017, %v2055
  %2340 = vst.msk [vmem:[%s4 + $0x240] sm:$0xff] %vm1017, %v2059
  %2341 = vst.msk [vmem:[%s4 + $0x248] sm:$0xff] %vm1017, %v2063
  %2342 = vst.msk [vmem:[%s4 + $0x250] sm:$0xff] %vm1017, %v2067
  %2343 = vst.msk [vmem:[%s4 + $0x258] sm:$0xff] %vm1017, %v2071
  %2344 = vst.msk [vmem:[%s4 + $0x260] sm:$0xff] %vm1017, %v2075
  %2345 = vst.msk [vmem:[%s4 + $0x268] sm:$0xff] %vm1017, %v2079
  %2346 = vst.msk [vmem:[%s4 + $0x270] sm:$0xff] %vm1017, %v2083
  %2347 = vst.msk [vmem:[%s4 + $0x278] sm:$0xff] %vm1017, %v2087
  %2348 = vst.msk [vmem:[%s4 + $0x280] sm:$0xff] %vm1017, %v2091
  %2349 = vst.msk [vmem:[%s4 + $0x288] sm:$0xff] %vm1017, %v2095
  %2350 = vst.msk [vmem:[%s4 + $0x290] sm:$0xff] %vm1017, %v2099
  %2351 = vst.msk [vmem:[%s4 + $0x298] sm:$0xff] %vm1017, %v2103
  %2352 = vst.msk [vmem:[%s4 + $0x2a0] sm:$0xff] %vm1017, %v2107
  %2353 = vst.msk [vmem:[%s4 + $0x2a8] sm:$0xff] %vm1017, %v2111
  %2354 = vst.msk [vmem:[%s4 + $0x2b0] sm:$0xff] %vm1017, %v2115
  %2355 = vst.msk [vmem:[%s4 + $0x2b8] sm:$0xff] %vm1017, %v2119
  %2356 = vst.msk [vmem:[%s4 + $0x2c0] sm:$0xff] %vm1017, %v2123
  %2357 = vst.msk [vmem:[%s4 + $0x2c8] sm:$0xff] %vm1017, %v2127
  %2358 = vst.msk [vmem:[%s4 + $0x2d0] sm:$0xff] %vm1017, %v2131
  %2359 = vst.msk [vmem:[%s4 + $0x2d8] sm:$0xff] %vm1017, %v2135
  %2360 = vst.msk [vmem:[%s4 + $0x2e0] sm:$0xff] %vm1017, %v2139
  %2361 = vst.msk [vmem:[%s4 + $0x2e8] sm:$0xff] %vm1017, %v2143
  %2362 = vst.msk [vmem:[%s4 + $0x2f0] sm:$0xff] %vm1017, %v2147
  %2363 = vst.msk [vmem:[%s4 + $0x2f8] sm:$0xff] %vm1017, %v2151
  %2364 = vst.msk [vmem:[%s4 + $0x300] sm:$0xff] %vm1017, %v2155
  %2365 = vst.msk [vmem:[%s4 + $0x308] sm:$0xff] %vm1017, %v2159
  %2366 = vst.msk [vmem:[%s4 + $0x310] sm:$0xff] %vm1017, %v2163
  %2367 = vst.msk [vmem:[%s4 + $0x318] sm:$0xff] %vm1017, %v2167
  %2368 = vst.msk [vmem:[%s4 + $0x320] sm:$0xff] %vm1017, %v2171
  %2369 = vst.msk [vmem:[%s4 + $0x328] sm:$0xff] %vm1017, %v2175
  %2370 = vst.msk [vmem:[%s4 + $0x330] sm:$0xff] %vm1017, %v2179
  %2371 = vst.msk [vmem:[%s4 + $0x338] sm:$0xff] %vm1017, %v2183
  %2372 = vst.msk [vmem:[%s4 + $0x340] sm:$0xff] %vm1017, %v2187
  %2373 = vst.msk [vmem:[%s4 + $0x348] sm:$0xff] %vm1017, %v2191
  %2374 = vst.msk [vmem:[%s4 + $0x350] sm:$0xff] %vm1017, %v2195
  %2375 = vst.msk [vmem:[%s4 + $0x358] sm:$0xff] %vm1017, %v2199
  %2376 = vst.msk [vmem:[%s4 + $0x360] sm:$0xff] %vm1017, %v2203
  %2377 = vst.msk [vmem:[%s4 + $0x368] sm:$0xff] %vm1017, %v2207
  %2378 = vst.msk [vmem:[%s4 + $0x370] sm:$0xff] %vm1017, %v2211
  %2379 = vst.msk [vmem:[%s4 + $0x378] sm:$0xff] %vm1017, %v2215
  %2380 = vst.msk [vmem:[%s4 + $0x380] sm:$0xff] %vm1017, %v2219
  %2381 = vst.msk [vmem:[%s4 + $0x388] sm:$0xff] %vm1017, %v2223
  %2382 = vst.msk [vmem:[%s4 + $0x390] sm:$0xff] %vm1017, %v2227
  %2383 = vst.msk [vmem:[%s4 + $0x398] sm:$0xff] %vm1017, %v2231
  %2384 = vst.msk [vmem:[%s4 + $0x3a0] sm:$0xff] %vm1017, %v2235
  %2385 = vst.msk [vmem:[%s4 + $0x3a8] sm:$0xff] %vm1017, %v2239
  %2386 = vst.msk [vmem:[%s4 + $0x3b0] sm:$0xff] %vm1017, %v2243
  %2387 = vst.msk [vmem:[%s4 + $0x3b8] sm:$0xff] %vm1017, %v2247
  %2388 = vst.msk [vmem:[%s4 + $0x3c0] sm:$0xff] %vm1017, %v2251
  %2389 = vst.msk [vmem:[%s4 + $0x3c8] sm:$0xff] %vm1017, %v2255
  %2390 = vst.msk [vmem:[%s4 + $0x3d0] sm:$0xff] %vm1017, %v2259
  %2391 = vst.msk [vmem:[%s4 + $0x3d8] sm:$0xff] %vm1017, %v2263
  %2392 = vst.msk [vmem:[%s4 + $0x3e0] sm:$0xff] %vm1017, %v2267
  %v2393 = vsel %vm516, %v267, 0.0
  %v2394 = vadd.f32 %v266, %v2393
  %2395 = vadd.xlane.f32.xlu0 %v2394
  %v2396 = vpop.xlane.xlu0 %2395
  %v2397 = vsel %vm516, %v269, 0.0
  %v2398 = vadd.f32 %v268, %v2397
  %2399 = vadd.xlane.f32.xlu0 %v2398
  %v2400 = vpop.xlane.xlu0 %2399
  %v2401 = vsel %vm516, %v271, 0.0
  %v2402 = vadd.f32 %v270, %v2401
  %2403 = vadd.xlane.f32.xlu0 %v2402
  %v2404 = vpop.xlane.xlu0 %2403
  %v2405 = vsel %vm516, %v273, 0.0
  %v2406 = vadd.f32 %v272, %v2405
  %2407 = vadd.xlane.f32.xlu0 %v2406
  %v2408 = vpop.xlane.xlu0 %2407
  %v2409 = vsel %vm516, %v275, 0.0
  %v2410 = vadd.f32 %v274, %v2409
  %2411 = vadd.xlane.f32.xlu0 %v2410
  %v2412 = vpop.xlane.xlu0 %2411
  %v2413 = vsel %vm516, %v277, 0.0
  %v2414 = vadd.f32 %v276, %v2413
  %2415 = vadd.xlane.f32.xlu0 %v2414
  %v2416 = vpop.xlane.xlu0 %2415
  %v2417 = vsel %vm516, %v279, 0.0
  %v2418 = vadd.f32 %v278, %v2417
  %2419 = vadd.xlane.f32.xlu0 %v2418
  %v2420 = vpop.xlane.xlu0 %2419
  %v2421 = vsel %vm516, %v281, 0.0
  %v2422 = vadd.f32 %v280, %v2421
  %2423 = vadd.xlane.f32.xlu0 %v2422
  %v2424 = vpop.xlane.xlu0 %2423
  %v2425 = vsel %vm516, %v283, 0.0
  %v2426 = vadd.f32 %v282, %v2425
  %2427 = vadd.xlane.f32.xlu0 %v2426
  %v2428 = vpop.xlane.xlu0 %2427
  %v2429 = vsel %vm516, %v285, 0.0
  %v2430 = vadd.f32 %v284, %v2429
  %2431 = vadd.xlane.f32.xlu0 %v2430
  %v2432 = vpop.xlane.xlu0 %2431
  %v2433 = vsel %vm516, %v287, 0.0
  %v2434 = vadd.f32 %v286, %v2433
  %2435 = vadd.xlane.f32.xlu0 %v2434
  %v2436 = vpop.xlane.xlu0 %2435
  %v2437 = vsel %vm516, %v289, 0.0
  %v2438 = vadd.f32 %v288, %v2437
  %2439 = vadd.xlane.f32.xlu0 %v2438
  %v2440 = vpop.xlane.xlu0 %2439
  %v2441 = vsel %vm516, %v291, 0.0
  %v2442 = vadd.f32 %v290, %v2441
  %2443 = vadd.xlane.f32.xlu0 %v2442
  %v2444 = vpop.xlane.xlu0 %2443
  %v2445 = vsel %vm516, %v293, 0.0
  %v2446 = vadd.f32 %v292, %v2445
  %2447 = vadd.xlane.f32.xlu0 %v2446
  %v2448 = vpop.xlane.xlu0 %2447
  %v2449 = vsel %vm516, %v295, 0.0
  %v2450 = vadd.f32 %v294, %v2449
  %2451 = vadd.xlane.f32.xlu0 %v2450
  %v2452 = vpop.xlane.xlu0 %2451
  %v2453 = vsel %vm516, %v297, 0.0
  %v2454 = vadd.f32 %v296, %v2453
  %2455 = vadd.xlane.f32.xlu0 %v2454
  %v2456 = vpop.xlane.xlu0 %2455
  %v2457 = vsel %vm516, %v299, 0.0
  %v2458 = vadd.f32 %v298, %v2457
  %2459 = vadd.xlane.f32.xlu0 %v2458
  %v2460 = vpop.xlane.xlu0 %2459
  %v2461 = vsel %vm516, %v301, 0.0
  %v2462 = vadd.f32 %v300, %v2461
  %2463 = vadd.xlane.f32.xlu0 %v2462
  %v2464 = vpop.xlane.xlu0 %2463
  %v2465 = vsel %vm516, %v303, 0.0
  %v2466 = vadd.f32 %v302, %v2465
  %2467 = vadd.xlane.f32.xlu0 %v2466
  %v2468 = vpop.xlane.xlu0 %2467
  %v2469 = vsel %vm516, %v305, 0.0
  %v2470 = vadd.f32 %v304, %v2469
  %2471 = vadd.xlane.f32.xlu0 %v2470
  %v2472 = vpop.xlane.xlu0 %2471
  %v2473 = vsel %vm516, %v307, 0.0
  %v2474 = vadd.f32 %v306, %v2473
  %2475 = vadd.xlane.f32.xlu0 %v2474
  %v2476 = vpop.xlane.xlu0 %2475
  %v2477 = vsel %vm516, %v309, 0.0
  %v2478 = vadd.f32 %v308, %v2477
  %2479 = vadd.xlane.f32.xlu0 %v2478
  %v2480 = vpop.xlane.xlu0 %2479
  %v2481 = vsel %vm516, %v311, 0.0
  %v2482 = vadd.f32 %v310, %v2481
  %2483 = vadd.xlane.f32.xlu0 %v2482
  %v2484 = vpop.xlane.xlu0 %2483
  %v2485 = vsel %vm516, %v313, 0.0
  %v2486 = vadd.f32 %v312, %v2485
  %2487 = vadd.xlane.f32.xlu0 %v2486
  %v2488 = vpop.xlane.xlu0 %2487
  %v2489 = vsel %vm516, %v315, 0.0
  %v2490 = vadd.f32 %v314, %v2489
  %2491 = vadd.xlane.f32.xlu0 %v2490
  %v2492 = vpop.xlane.xlu0 %2491
  %v2493 = vsel %vm516, %v317, 0.0
  %v2494 = vadd.f32 %v316, %v2493
  %2495 = vadd.xlane.f32.xlu0 %v2494
  %v2496 = vpop.xlane.xlu0 %2495
  %v2497 = vsel %vm516, %v319, 0.0
  %v2498 = vadd.f32 %v318, %v2497
  %2499 = vadd.xlane.f32.xlu0 %v2498
  %v2500 = vpop.xlane.xlu0 %2499
  %v2501 = vsel %vm516, %v321, 0.0
  %v2502 = vadd.f32 %v320, %v2501
  %2503 = vadd.xlane.f32.xlu0 %v2502
  %v2504 = vpop.xlane.xlu0 %2503
  %v2505 = vsel %vm516, %v323, 0.0
  %v2506 = vadd.f32 %v322, %v2505
  %2507 = vadd.xlane.f32.xlu0 %v2506
  %v2508 = vpop.xlane.xlu0 %2507
  %v2509 = vsel %vm516, %v325, 0.0
  %v2510 = vadd.f32 %v324, %v2509
  %2511 = vadd.xlane.f32.xlu0 %v2510
  %v2512 = vpop.xlane.xlu0 %2511
  %v2513 = vsel %vm516, %v327, 0.0
  %v2514 = vadd.f32 %v326, %v2513
  %2515 = vadd.xlane.f32.xlu0 %v2514
  %v2516 = vpop.xlane.xlu0 %2515
  %v2517 = vsel %vm516, %v329, 0.0
  %v2518 = vadd.f32 %v328, %v2517
  %2519 = vadd.xlane.f32.xlu0 %v2518
  %v2520 = vpop.xlane.xlu0 %2519
  %v2521 = vsel %vm516, %v331, 0.0
  %v2522 = vadd.f32 %v330, %v2521
  %2523 = vadd.xlane.f32.xlu0 %v2522
  %v2524 = vpop.xlane.xlu0 %2523
  %v2525 = vsel %vm516, %v333, 0.0
  %v2526 = vadd.f32 %v332, %v2525
  %2527 = vadd.xlane.f32.xlu0 %v2526
  %v2528 = vpop.xlane.xlu0 %2527
  %v2529 = vsel %vm516, %v335, 0.0
  %v2530 = vadd.f32 %v334, %v2529
  %2531 = vadd.xlane.f32.xlu0 %v2530
  %v2532 = vpop.xlane.xlu0 %2531
  %v2533 = vsel %vm516, %v337, 0.0
  %v2534 = vadd.f32 %v336, %v2533
  %2535 = vadd.xlane.f32.xlu0 %v2534
  %v2536 = vpop.xlane.xlu0 %2535
  %v2537 = vsel %vm516, %v339, 0.0
  %v2538 = vadd.f32 %v338, %v2537
  %2539 = vadd.xlane.f32.xlu0 %v2538
  %v2540 = vpop.xlane.xlu0 %2539
  %v2541 = vsel %vm516, %v341, 0.0
  %v2542 = vadd.f32 %v340, %v2541
  %2543 = vadd.xlane.f32.xlu0 %v2542
  %v2544 = vpop.xlane.xlu0 %2543
  %v2545 = vsel %vm516, %v343, 0.0
  %v2546 = vadd.f32 %v342, %v2545
  %2547 = vadd.xlane.f32.xlu0 %v2546
  %v2548 = vpop.xlane.xlu0 %2547
  %v2549 = vsel %vm516, %v345, 0.0
  %v2550 = vadd.f32 %v344, %v2549
  %2551 = vadd.xlane.f32.xlu0 %v2550
  %v2552 = vpop.xlane.xlu0 %2551
  %v2553 = vsel %vm516, %v347, 0.0
  %v2554 = vadd.f32 %v346, %v2553
  %2555 = vadd.xlane.f32.xlu0 %v2554
  %v2556 = vpop.xlane.xlu0 %2555
  %v2557 = vsel %vm516, %v349, 0.0
  %v2558 = vadd.f32 %v348, %v2557
  %2559 = vadd.xlane.f32.xlu0 %v2558
  %v2560 = vpop.xlane.xlu0 %2559
  %v2561 = vsel %vm516, %v351, 0.0
  %v2562 = vadd.f32 %v350, %v2561
  %2563 = vadd.xlane.f32.xlu0 %v2562
  %v2564 = vpop.xlane.xlu0 %2563
  %v2565 = vsel %vm516, %v353, 0.0
  %v2566 = vadd.f32 %v352, %v2565
  %2567 = vadd.xlane.f32.xlu0 %v2566
  %v2568 = vpop.xlane.xlu0 %2567
  %v2569 = vsel %vm516, %v355, 0.0
  %v2570 = vadd.f32 %v354, %v2569
  %2571 = vadd.xlane.f32.xlu0 %v2570
  %v2572 = vpop.xlane.xlu0 %2571
  %v2573 = vsel %vm516, %v357, 0.0
  %v2574 = vadd.f32 %v356, %v2573
  %2575 = vadd.xlane.f32.xlu0 %v2574
  %v2576 = vpop.xlane.xlu0 %2575
  %v2577 = vsel %vm516, %v359, 0.0
  %v2578 = vadd.f32 %v358, %v2577
  %2579 = vadd.xlane.f32.xlu0 %v2578
  %v2580 = vpop.xlane.xlu0 %2579
  %v2581 = vsel %vm516, %v361, 0.0
  %v2582 = vadd.f32 %v360, %v2581
  %2583 = vadd.xlane.f32.xlu0 %v2582
  %v2584 = vpop.xlane.xlu0 %2583
  %v2585 = vsel %vm516, %v363, 0.0
  %v2586 = vadd.f32 %v362, %v2585
  %2587 = vadd.xlane.f32.xlu0 %v2586
  %v2588 = vpop.xlane.xlu0 %2587
  %v2589 = vsel %vm516, %v365, 0.0
  %v2590 = vadd.f32 %v364, %v2589
  %2591 = vadd.xlane.f32.xlu0 %v2590
  %v2592 = vpop.xlane.xlu0 %2591
  %v2593 = vsel %vm516, %v367, 0.0
  %v2594 = vadd.f32 %v366, %v2593
  %2595 = vadd.xlane.f32.xlu0 %v2594
  %v2596 = vpop.xlane.xlu0 %2595
  %v2597 = vsel %vm516, %v369, 0.0
  %v2598 = vadd.f32 %v368, %v2597
  %2599 = vadd.xlane.f32.xlu0 %v2598
  %v2600 = vpop.xlane.xlu0 %2599
  %v2601 = vsel %vm516, %v371, 0.0
  %v2602 = vadd.f32 %v370, %v2601
  %2603 = vadd.xlane.f32.xlu0 %v2602
  %v2604 = vpop.xlane.xlu0 %2603
  %v2605 = vsel %vm516, %v373, 0.0
  %v2606 = vadd.f32 %v372, %v2605
  %2607 = vadd.xlane.f32.xlu0 %v2606
  %v2608 = vpop.xlane.xlu0 %2607
  %v2609 = vsel %vm516, %v375, 0.0
  %v2610 = vadd.f32 %v374, %v2609
  %2611 = vadd.xlane.f32.xlu0 %v2610
  %v2612 = vpop.xlane.xlu0 %2611
  %v2613 = vsel %vm516, %v377, 0.0
  %v2614 = vadd.f32 %v376, %v2613
  %2615 = vadd.xlane.f32.xlu0 %v2614
  %v2616 = vpop.xlane.xlu0 %2615
  %v2617 = vsel %vm516, %v379, 0.0
  %v2618 = vadd.f32 %v378, %v2617
  %2619 = vadd.xlane.f32.xlu0 %v2618
  %v2620 = vpop.xlane.xlu0 %2619
  %v2621 = vsel %vm516, %v381, 0.0
  %v2622 = vadd.f32 %v380, %v2621
  %2623 = vadd.xlane.f32.xlu0 %v2622
  %v2624 = vpop.xlane.xlu0 %2623
  %v2625 = vsel %vm516, %v383, 0.0
  %v2626 = vadd.f32 %v382, %v2625
  %2627 = vadd.xlane.f32.xlu0 %v2626
  %v2628 = vpop.xlane.xlu0 %2627
  %v2629 = vsel %vm516, %v385, 0.0
  %v2630 = vadd.f32 %v384, %v2629
  %2631 = vadd.xlane.f32.xlu0 %v2630
  %v2632 = vpop.xlane.xlu0 %2631
  %v2633 = vsel %vm516, %v387, 0.0
  %v2634 = vadd.f32 %v386, %v2633
  %2635 = vadd.xlane.f32.xlu0 %v2634
  %v2636 = vpop.xlane.xlu0 %2635
  %v2637 = vsel %vm516, %v389, 0.0
  %v2638 = vadd.f32 %v388, %v2637
  %2639 = vadd.xlane.f32.xlu0 %v2638
  %v2640 = vpop.xlane.xlu0 %2639
  %v2641 = vsel %vm516, %v391, 0.0
  %v2642 = vadd.f32 %v390, %v2641
  %2643 = vadd.xlane.f32.xlu0 %v2642
  %v2644 = vpop.xlane.xlu0 %2643
  %v2645 = vsel %vm516, %v393, 0.0
  %v2646 = vadd.f32 %v392, %v2645
  %2647 = vadd.xlane.f32.xlu0 %v2646
  %v2648 = vpop.xlane.xlu0 %2647
  %v2649 = vsel %vm516, %v395, 0.0
  %v2650 = vadd.f32 %v394, %v2649
  %2651 = vadd.xlane.f32.xlu0 %v2650
  %v2652 = vpop.xlane.xlu0 %2651
  %v2653 = vsel %vm516, %v397, 0.0
  %v2654 = vadd.f32 %v396, %v2653
  %2655 = vadd.xlane.f32.xlu0 %v2654
  %v2656 = vpop.xlane.xlu0 %2655
  %v2657 = vsel %vm516, %v399, 0.0
  %v2658 = vadd.f32 %v398, %v2657
  %2659 = vadd.xlane.f32.xlu0 %v2658
  %v2660 = vpop.xlane.xlu0 %2659
  %v2661 = vsel %vm516, %v401, 0.0
  %v2662 = vadd.f32 %v400, %v2661
  %2663 = vadd.xlane.f32.xlu0 %v2662
  %v2664 = vpop.xlane.xlu0 %2663
  %v2665 = vsel %vm516, %v403, 0.0
  %v2666 = vadd.f32 %v402, %v2665
  %2667 = vadd.xlane.f32.xlu0 %v2666
  %v2668 = vpop.xlane.xlu0 %2667
  %v2669 = vsel %vm516, %v405, 0.0
  %v2670 = vadd.f32 %v404, %v2669
  %2671 = vadd.xlane.f32.xlu0 %v2670
  %v2672 = vpop.xlane.xlu0 %2671
  %v2673 = vsel %vm516, %v407, 0.0
  %v2674 = vadd.f32 %v406, %v2673
  %2675 = vadd.xlane.f32.xlu0 %v2674
  %v2676 = vpop.xlane.xlu0 %2675
  %v2677 = vsel %vm516, %v409, 0.0
  %v2678 = vadd.f32 %v408, %v2677
  %2679 = vadd.xlane.f32.xlu0 %v2678
  %v2680 = vpop.xlane.xlu0 %2679
  %v2681 = vsel %vm516, %v411, 0.0
  %v2682 = vadd.f32 %v410, %v2681
  %2683 = vadd.xlane.f32.xlu0 %v2682
  %v2684 = vpop.xlane.xlu0 %2683
  %v2685 = vsel %vm516, %v413, 0.0
  %v2686 = vadd.f32 %v412, %v2685
  %2687 = vadd.xlane.f32.xlu0 %v2686
  %v2688 = vpop.xlane.xlu0 %2687
  %v2689 = vsel %vm516, %v415, 0.0
  %v2690 = vadd.f32 %v414, %v2689
  %2691 = vadd.xlane.f32.xlu0 %v2690
  %v2692 = vpop.xlane.xlu0 %2691
  %v2693 = vsel %vm516, %v417, 0.0
  %v2694 = vadd.f32 %v416, %v2693
  %2695 = vadd.xlane.f32.xlu0 %v2694
  %v2696 = vpop.xlane.xlu0 %2695
  %v2697 = vsel %vm516, %v419, 0.0
  %v2698 = vadd.f32 %v418, %v2697
  %2699 = vadd.xlane.f32.xlu0 %v2698
  %v2700 = vpop.xlane.xlu0 %2699
  %v2701 = vsel %vm516, %v421, 0.0
  %v2702 = vadd.f32 %v420, %v2701
  %2703 = vadd.xlane.f32.xlu0 %v2702
  %v2704 = vpop.xlane.xlu0 %2703
  %v2705 = vsel %vm516, %v423, 0.0
  %v2706 = vadd.f32 %v422, %v2705
  %2707 = vadd.xlane.f32.xlu0 %v2706
  %v2708 = vpop.xlane.xlu0 %2707
  %v2709 = vsel %vm516, %v425, 0.0
  %v2710 = vadd.f32 %v424, %v2709
  %2711 = vadd.xlane.f32.xlu0 %v2710
  %v2712 = vpop.xlane.xlu0 %2711
  %v2713 = vsel %vm516, %v427, 0.0
  %v2714 = vadd.f32 %v426, %v2713
  %2715 = vadd.xlane.f32.xlu0 %v2714
  %v2716 = vpop.xlane.xlu0 %2715
  %v2717 = vsel %vm516, %v429, 0.0
  %v2718 = vadd.f32 %v428, %v2717
  %2719 = vadd.xlane.f32.xlu0 %v2718
  %v2720 = vpop.xlane.xlu0 %2719
  %v2721 = vsel %vm516, %v431, 0.0
  %v2722 = vadd.f32 %v430, %v2721
  %2723 = vadd.xlane.f32.xlu0 %v2722
  %v2724 = vpop.xlane.xlu0 %2723
  %v2725 = vsel %vm516, %v433, 0.0
  %v2726 = vadd.f32 %v432, %v2725
  %2727 = vadd.xlane.f32.xlu0 %v2726
  %v2728 = vpop.xlane.xlu0 %2727
  %v2729 = vsel %vm516, %v435, 0.0
  %v2730 = vadd.f32 %v434, %v2729
  %2731 = vadd.xlane.f32.xlu0 %v2730
  %v2732 = vpop.xlane.xlu0 %2731
  %v2733 = vsel %vm516, %v437, 0.0
  %v2734 = vadd.f32 %v436, %v2733
  %2735 = vadd.xlane.f32.xlu0 %v2734
  %v2736 = vpop.xlane.xlu0 %2735
  %v2737 = vsel %vm516, %v439, 0.0
  %v2738 = vadd.f32 %v438, %v2737
  %2739 = vadd.xlane.f32.xlu0 %v2738
  %v2740 = vpop.xlane.xlu0 %2739
  %v2741 = vsel %vm516, %v441, 0.0
  %v2742 = vadd.f32 %v440, %v2741
  %2743 = vadd.xlane.f32.xlu0 %v2742
  %v2744 = vpop.xlane.xlu0 %2743
  %v2745 = vsel %vm516, %v443, 0.0
  %v2746 = vadd.f32 %v442, %v2745
  %2747 = vadd.xlane.f32.xlu0 %v2746
  %v2748 = vpop.xlane.xlu0 %2747
  %v2749 = vsel %vm516, %v445, 0.0
  %v2750 = vadd.f32 %v444, %v2749
  %2751 = vadd.xlane.f32.xlu0 %v2750
  %v2752 = vpop.xlane.xlu0 %2751
  %v2753 = vsel %vm516, %v447, 0.0
  %v2754 = vadd.f32 %v446, %v2753
  %2755 = vadd.xlane.f32.xlu0 %v2754
  %v2756 = vpop.xlane.xlu0 %2755
  %v2757 = vsel %vm516, %v449, 0.0
  %v2758 = vadd.f32 %v448, %v2757
  %2759 = vadd.xlane.f32.xlu0 %v2758
  %v2760 = vpop.xlane.xlu0 %2759
  %v2761 = vsel %vm516, %v451, 0.0
  %v2762 = vadd.f32 %v450, %v2761
  %2763 = vadd.xlane.f32.xlu0 %v2762
  %v2764 = vpop.xlane.xlu0 %2763
  %v2765 = vsel %vm516, %v453, 0.0
  %v2766 = vadd.f32 %v452, %v2765
  %2767 = vadd.xlane.f32.xlu0 %v2766
  %v2768 = vpop.xlane.xlu0 %2767
  %v2769 = vsel %vm516, %v455, 0.0
  %v2770 = vadd.f32 %v454, %v2769
  %2771 = vadd.xlane.f32.xlu0 %v2770
  %v2772 = vpop.xlane.xlu0 %2771
  %v2773 = vsel %vm516, %v457, 0.0
  %v2774 = vadd.f32 %v456, %v2773
  %2775 = vadd.xlane.f32.xlu0 %v2774
  %v2776 = vpop.xlane.xlu0 %2775
  %v2777 = vsel %vm516, %v459, 0.0
  %v2778 = vadd.f32 %v458, %v2777
  %2779 = vadd.xlane.f32.xlu0 %v2778
  %v2780 = vpop.xlane.xlu0 %2779
  %v2781 = vsel %vm516, %v461, 0.0
  %v2782 = vadd.f32 %v460, %v2781
  %2783 = vadd.xlane.f32.xlu0 %v2782
  %v2784 = vpop.xlane.xlu0 %2783
  %v2785 = vsel %vm516, %v463, 0.0
  %v2786 = vadd.f32 %v462, %v2785
  %2787 = vadd.xlane.f32.xlu0 %v2786
  %v2788 = vpop.xlane.xlu0 %2787
  %v2789 = vsel %vm516, %v465, 0.0
  %v2790 = vadd.f32 %v464, %v2789
  %2791 = vadd.xlane.f32.xlu0 %v2790
  %v2792 = vpop.xlane.xlu0 %2791
  %v2793 = vsel %vm516, %v467, 0.0
  %v2794 = vadd.f32 %v466, %v2793
  %2795 = vadd.xlane.f32.xlu0 %v2794
  %v2796 = vpop.xlane.xlu0 %2795
  %v2797 = vsel %vm516, %v469, 0.0
  %v2798 = vadd.f32 %v468, %v2797
  %2799 = vadd.xlane.f32.xlu0 %v2798
  %v2800 = vpop.xlane.xlu0 %2799
  %v2801 = vsel %vm516, %v471, 0.0
  %v2802 = vadd.f32 %v470, %v2801
  %2803 = vadd.xlane.f32.xlu0 %v2802
  %v2804 = vpop.xlane.xlu0 %2803
  %v2805 = vsel %vm516, %v473, 0.0
  %v2806 = vadd.f32 %v472, %v2805
  %2807 = vadd.xlane.f32.xlu0 %v2806
  %v2808 = vpop.xlane.xlu0 %2807
  %v2809 = vsel %vm516, %v475, 0.0
  %v2810 = vadd.f32 %v474, %v2809
  %2811 = vadd.xlane.f32.xlu0 %v2810
  %v2812 = vpop.xlane.xlu0 %2811
  %v2813 = vsel %vm516, %v477, 0.0
  %v2814 = vadd.f32 %v476, %v2813
  %2815 = vadd.xlane.f32.xlu0 %v2814
  %v2816 = vpop.xlane.xlu0 %2815
  %v2817 = vsel %vm516, %v479, 0.0
  %v2818 = vadd.f32 %v478, %v2817
  %2819 = vadd.xlane.f32.xlu0 %v2818
  %v2820 = vpop.xlane.xlu0 %2819
  %v2821 = vsel %vm516, %v481, 0.0
  %v2822 = vadd.f32 %v480, %v2821
  %2823 = vadd.xlane.f32.xlu0 %v2822
  %v2824 = vpop.xlane.xlu0 %2823
  %v2825 = vsel %vm516, %v483, 0.0
  %v2826 = vadd.f32 %v482, %v2825
  %2827 = vadd.xlane.f32.xlu0 %v2826
  %v2828 = vpop.xlane.xlu0 %2827
  %v2829 = vsel %vm516, %v485, 0.0
  %v2830 = vadd.f32 %v484, %v2829
  %2831 = vadd.xlane.f32.xlu0 %v2830
  %v2832 = vpop.xlane.xlu0 %2831
  %v2833 = vsel %vm516, %v487, 0.0
  %v2834 = vadd.f32 %v486, %v2833
  %2835 = vadd.xlane.f32.xlu0 %v2834
  %v2836 = vpop.xlane.xlu0 %2835
  %v2837 = vsel %vm516, %v489, 0.0
  %v2838 = vadd.f32 %v488, %v2837
  %2839 = vadd.xlane.f32.xlu0 %v2838
  %v2840 = vpop.xlane.xlu0 %2839
  %v2841 = vsel %vm516, %v491, 0.0
  %v2842 = vadd.f32 %v490, %v2841
  %2843 = vadd.xlane.f32.xlu0 %v2842
  %v2844 = vpop.xlane.xlu0 %2843
  %v2845 = vsel %vm516, %v493, 0.0
  %v2846 = vadd.f32 %v492, %v2845
  %2847 = vadd.xlane.f32.xlu0 %v2846
  %v2848 = vpop.xlane.xlu0 %2847
  %v2849 = vsel %vm516, %v495, 0.0
  %v2850 = vadd.f32 %v494, %v2849
  %2851 = vadd.xlane.f32.xlu0 %v2850
  %v2852 = vpop.xlane.xlu0 %2851
  %v2853 = vsel %vm516, %v497, 0.0
  %v2854 = vadd.f32 %v496, %v2853
  %2855 = vadd.xlane.f32.xlu0 %v2854
  %v2856 = vpop.xlane.xlu0 %2855
  %v2857 = vsel %vm516, %v499, 0.0
  %v2858 = vadd.f32 %v498, %v2857
  %2859 = vadd.xlane.f32.xlu0 %v2858
  %v2860 = vpop.xlane.xlu0 %2859
  %v2861 = vsel %vm516, %v501, 0.0
  %v2862 = vadd.f32 %v500, %v2861
  %2863 = vadd.xlane.f32.xlu0 %v2862
  %v2864 = vpop.xlane.xlu0 %2863
  %v2865 = vsel %vm516, %v503, 0.0
  %v2866 = vadd.f32 %v502, %v2865
  %2867 = vadd.xlane.f32.xlu0 %v2866
  %v2868 = vpop.xlane.xlu0 %2867
  %v2869 = vsel %vm516, %v505, 0.0
  %v2870 = vadd.f32 %v504, %v2869
  %2871 = vadd.xlane.f32.xlu0 %v2870
  %v2872 = vpop.xlane.xlu0 %2871
  %v2873 = vsel %vm516, %v507, 0.0
  %v2874 = vadd.f32 %v506, %v2873
  %2875 = vadd.xlane.f32.xlu0 %v2874
  %v2876 = vpop.xlane.xlu0 %2875
  %v2877 = vsel %vm516, %v509, 0.0
  %v2878 = vadd.f32 %v508, %v2877
  %2879 = vadd.xlane.f32.xlu0 %v2878
  %v2880 = vpop.xlane.xlu0 %2879
  %v2881 = vsel %vm516, %v511, 0.0
  %v2882 = vadd.f32 %v510, %v2881
  %2883 = vadd.xlane.f32.xlu0 %v2882
  %v2884 = vpop.xlane.xlu0 %2883
  %v2885 = vsel %vm516, %v513, 0.0
  %v2886 = vadd.f32 %v512, %v2885
  %2887 = vadd.xlane.f32.xlu0 %v2886
  %v2888 = vpop.xlane.xlu0 %2887
  %v2889 = vsel %vm516, %v515, 0.0
  %v2890 = vadd.f32 %v514, %v2889
  %2891 = vadd.xlane.f32.xlu0 %v2890
  %v2892 = vpop.xlane.xlu0 %2891
  %2893 = vst.msk [vmem:[%s5] sm:$0xff] %vm1017, %v2396
  %2894 = vst.msk [vmem:[%s5 + $0x8] sm:$0xff] %vm1017, %v2400
  %2895 = vst.msk [vmem:[%s5 + $0x10] sm:$0xff] %vm1017, %v2404
  %2896 = vst.msk [vmem:[%s5 + $0x18] sm:$0xff] %vm1017, %v2408
  %2897 = vst.msk [vmem:[%s5 + $0x20] sm:$0xff] %vm1017, %v2412
  %2898 = vst.msk [vmem:[%s5 + $0x28] sm:$0xff] %vm1017, %v2416
  %2899 = vst.msk [vmem:[%s5 + $0x30] sm:$0xff] %vm1017, %v2420
  %2900 = vst.msk [vmem:[%s5 + $0x38] sm:$0xff] %vm1017, %v2424
  %2901 = vst.msk [vmem:[%s5 + $0x40] sm:$0xff] %vm1017, %v2428
  %2902 = vst.msk [vmem:[%s5 + $0x48] sm:$0xff] %vm1017, %v2432
  %2903 = vst.msk [vmem:[%s5 + $0x50] sm:$0xff] %vm1017, %v2436
  %2904 = vst.msk [vmem:[%s5 + $0x58] sm:$0xff] %vm1017, %v2440
  %2905 = vst.msk [vmem:[%s5 + $0x60] sm:$0xff] %vm1017, %v2444
  %2906 = vst.msk [vmem:[%s5 + $0x68] sm:$0xff] %vm1017, %v2448
  %2907 = vst.msk [vmem:[%s5 + $0x70] sm:$0xff] %vm1017, %v2452
  %2908 = vst.msk [vmem:[%s5 + $0x78] sm:$0xff] %vm1017, %v2456
  %2909 = vst.msk [vmem:[%s5 + $0x80] sm:$0xff] %vm1017, %v2460
  %2910 = vst.msk [vmem:[%s5 + $0x88] sm:$0xff] %vm1017, %v2464
  %2911 = vst.msk [vmem:[%s5 + $0x90] sm:$0xff] %vm1017, %v2468
  %2912 = vst.msk [vmem:[%s5 + $0x98] sm:$0xff] %vm1017, %v2472
  %2913 = vst.msk [vmem:[%s5 + $0xa0] sm:$0xff] %vm1017, %v2476
  %2914 = vst.msk [vmem:[%s5 + $0xa8] sm:$0xff] %vm1017, %v2480
  %2915 = vst.msk [vmem:[%s5 + $0xb0] sm:$0xff] %vm1017, %v2484
  %2916 = vst.msk [vmem:[%s5 + $0xb8] sm:$0xff] %vm1017, %v2488
  %2917 = vst.msk [vmem:[%s5 + $0xc0] sm:$0xff] %vm1017, %v2492
  %2918 = vst.msk [vmem:[%s5 + $0xc8] sm:$0xff] %vm1017, %v2496
  %2919 = vst.msk [vmem:[%s5 + $0xd0] sm:$0xff] %vm1017, %v2500
  %2920 = vst.msk [vmem:[%s5 + $0xd8] sm:$0xff] %vm1017, %v2504
  %2921 = vst.msk [vmem:[%s5 + $0xe0] sm:$0xff] %vm1017, %v2508
  %2922 = vst.msk [vmem:[%s5 + $0xe8] sm:$0xff] %vm1017, %v2512
  %2923 = vst.msk [vmem:[%s5 + $0xf0] sm:$0xff] %vm1017, %v2516
  %2924 = vst.msk [vmem:[%s5 + $0xf8] sm:$0xff] %vm1017, %v2520
  %2925 = vst.msk [vmem:[%s5 + $0x100] sm:$0xff] %vm1017, %v2524
  %2926 = vst.msk [vmem:[%s5 + $0x108] sm:$0xff] %vm1017, %v2528
  %2927 = vst.msk [vmem:[%s5 + $0x110] sm:$0xff] %vm1017, %v2532
  %2928 = vst.msk [vmem:[%s5 + $0x118] sm:$0xff] %vm1017, %v2536
  %2929 = vst.msk [vmem:[%s5 + $0x120] sm:$0xff] %vm1017, %v2540
  %2930 = vst.msk [vmem:[%s5 + $0x128] sm:$0xff] %vm1017, %v2544
  %2931 = vst.msk [vmem:[%s5 + $0x130] sm:$0xff] %vm1017, %v2548
  %2932 = vst.msk [vmem:[%s5 + $0x138] sm:$0xff] %vm1017, %v2552
  %2933 = vst.msk [vmem:[%s5 + $0x140] sm:$0xff] %vm1017, %v2556
  %2934 = vst.msk [vmem:[%s5 + $0x148] sm:$0xff] %vm1017, %v2560
  %2935 = vst.msk [vmem:[%s5 + $0x150] sm:$0xff] %vm1017, %v2564
  %2936 = vst.msk [vmem:[%s5 + $0x158] sm:$0xff] %vm1017, %v2568
  %2937 = vst.msk [vmem:[%s5 + $0x160] sm:$0xff] %vm1017, %v2572
  %2938 = vst.msk [vmem:[%s5 + $0x168] sm:$0xff] %vm1017, %v2576
  %2939 = vst.msk [vmem:[%s5 + $0x170] sm:$0xff] %vm1017, %v2580
  %2940 = vst.msk [vmem:[%s5 + $0x178] sm:$0xff] %vm1017, %v2584
  %2941 = vst.msk [vmem:[%s5 + $0x180] sm:$0xff] %vm1017, %v2588
  %2942 = vst.msk [vmem:[%s5 + $0x188] sm:$0xff] %vm1017, %v2592
  %2943 = vst.msk [vmem:[%s5 + $0x190] sm:$0xff] %vm1017, %v2596
  %2944 = vst.msk [vmem:[%s5 + $0x198] sm:$0xff] %vm1017, %v2600
  %2945 = vst.msk [vmem:[%s5 + $0x1a0] sm:$0xff] %vm1017, %v2604
  %2946 = vst.msk [vmem:[%s5 + $0x1a8] sm:$0xff] %vm1017, %v2608
  %2947 = vst.msk [vmem:[%s5 + $0x1b0] sm:$0xff] %vm1017, %v2612
  %2948 = vst.msk [vmem:[%s5 + $0x1b8] sm:$0xff] %vm1017, %v2616
  %2949 = vst.msk [vmem:[%s5 + $0x1c0] sm:$0xff] %vm1017, %v2620
  %2950 = vst.msk [vmem:[%s5 + $0x1c8] sm:$0xff] %vm1017, %v2624
  %2951 = vst.msk [vmem:[%s5 + $0x1d0] sm:$0xff] %vm1017, %v2628
  %2952 = vst.msk [vmem:[%s5 + $0x1d8] sm:$0xff] %vm1017, %v2632
  %2953 = vst.msk [vmem:[%s5 + $0x1e0] sm:$0xff] %vm1017, %v2636
  %2954 = vst.msk [vmem:[%s5 + $0x1e8] sm:$0xff] %vm1017, %v2640
  %2955 = vst.msk [vmem:[%s5 + $0x1f0] sm:$0xff] %vm1017, %v2644
  %2956 = vst.msk [vmem:[%s5 + $0x1f8] sm:$0xff] %vm1017, %v2648
  %2957 = vst.msk [vmem:[%s5 + $0x200] sm:$0xff] %vm1017, %v2652
  %2958 = vst.msk [vmem:[%s5 + $0x208] sm:$0xff] %vm1017, %v2656
  %2959 = vst.msk [vmem:[%s5 + $0x210] sm:$0xff] %vm1017, %v2660
  %2960 = vst.msk [vmem:[%s5 + $0x218] sm:$0xff] %vm1017, %v2664
  %2961 = vst.msk [vmem:[%s5 + $0x220] sm:$0xff] %vm1017, %v2668
  %2962 = vst.msk [vmem:[%s5 + $0x228] sm:$0xff] %vm1017, %v2672
  %2963 = vst.msk [vmem:[%s5 + $0x230] sm:$0xff] %vm1017, %v2676
  %2964 = vst.msk [vmem:[%s5 + $0x238] sm:$0xff] %vm1017, %v2680
  %2965 = vst.msk [vmem:[%s5 + $0x240] sm:$0xff] %vm1017, %v2684
  %2966 = vst.msk [vmem:[%s5 + $0x248] sm:$0xff] %vm1017, %v2688
  %2967 = vst.msk [vmem:[%s5 + $0x250] sm:$0xff] %vm1017, %v2692
  %2968 = vst.msk [vmem:[%s5 + $0x258] sm:$0xff] %vm1017, %v2696
  %2969 = vst.msk [vmem:[%s5 + $0x260] sm:$0xff] %vm1017, %v2700
  %2970 = vst.msk [vmem:[%s5 + $0x268] sm:$0xff] %vm1017, %v2704
  %2971 = vst.msk [vmem:[%s5 + $0x270] sm:$0xff] %vm1017, %v2708
  %2972 = vst.msk [vmem:[%s5 + $0x278] sm:$0xff] %vm1017, %v2712
  %2973 = vst.msk [vmem:[%s5 + $0x280] sm:$0xff] %vm1017, %v2716
  %2974 = vst.msk [vmem:[%s5 + $0x288] sm:$0xff] %vm1017, %v2720
  %2975 = vst.msk [vmem:[%s5 + $0x290] sm:$0xff] %vm1017, %v2724
  %2976 = vst.msk [vmem:[%s5 + $0x298] sm:$0xff] %vm1017, %v2728
  %2977 = vst.msk [vmem:[%s5 + $0x2a0] sm:$0xff] %vm1017, %v2732
  %2978 = vst.msk [vmem:[%s5 + $0x2a8] sm:$0xff] %vm1017, %v2736
  %2979 = vst.msk [vmem:[%s5 + $0x2b0] sm:$0xff] %vm1017, %v2740
  %2980 = vst.msk [vmem:[%s5 + $0x2b8] sm:$0xff] %vm1017, %v2744
  %2981 = vst.msk [vmem:[%s5 + $0x2c0] sm:$0xff] %vm1017, %v2748
  %2982 = vst.msk [vmem:[%s5 + $0x2c8] sm:$0xff] %vm1017, %v2752
  %2983 = vst.msk [vmem:[%s5 + $0x2d0] sm:$0xff] %vm1017, %v2756
  %2984 = vst.msk [vmem:[%s5 + $0x2d8] sm:$0xff] %vm1017, %v2760
  %2985 = vst.msk [vmem:[%s5 + $0x2e0] sm:$0xff] %vm1017, %v2764
  %2986 = vst.msk [vmem:[%s5 + $0x2e8] sm:$0xff] %vm1017, %v2768
  %2987 = vst.msk [vmem:[%s5 + $0x2f0] sm:$0xff] %vm1017, %v2772
  %2988 = vst.msk [vmem:[%s5 + $0x2f8] sm:$0xff] %vm1017, %v2776
  %2989 = vst.msk [vmem:[%s5 + $0x300] sm:$0xff] %vm1017, %v2780
  %2990 = vst.msk [vmem:[%s5 + $0x308] sm:$0xff] %vm1017, %v2784
  %2991 = vst.msk [vmem:[%s5 + $0x310] sm:$0xff] %vm1017, %v2788
  %2992 = vst.msk [vmem:[%s5 + $0x318] sm:$0xff] %vm1017, %v2792
  %2993 = vst.msk [vmem:[%s5 + $0x320] sm:$0xff] %vm1017, %v2796
  %2994 = vst.msk [vmem:[%s5 + $0x328] sm:$0xff] %vm1017, %v2800
  %2995 = vst.msk [vmem:[%s5 + $0x330] sm:$0xff] %vm1017, %v2804
  %2996 = vst.msk [vmem:[%s5 + $0x338] sm:$0xff] %vm1017, %v2808
  %2997 = vst.msk [vmem:[%s5 + $0x340] sm:$0xff] %vm1017, %v2812
  %2998 = vst.msk [vmem:[%s5 + $0x348] sm:$0xff] %vm1017, %v2816
  %2999 = vst.msk [vmem:[%s5 + $0x350] sm:$0xff] %vm1017, %v2820
  %3000 = vst.msk [vmem:[%s5 + $0x358] sm:$0xff] %vm1017, %v2824
  %3001 = vst.msk [vmem:[%s5 + $0x360] sm:$0xff] %vm1017, %v2828
  %3002 = vst.msk [vmem:[%s5 + $0x368] sm:$0xff] %vm1017, %v2832
  %3003 = vst.msk [vmem:[%s5 + $0x370] sm:$0xff] %vm1017, %v2836
  %3004 = vst.msk [vmem:[%s5 + $0x378] sm:$0xff] %vm1017, %v2840
  %3005 = vst.msk [vmem:[%s5 + $0x380] sm:$0xff] %vm1017, %v2844
  %3006 = vst.msk [vmem:[%s5 + $0x388] sm:$0xff] %vm1017, %v2848
  %3007 = vst.msk [vmem:[%s5 + $0x390] sm:$0xff] %vm1017, %v2852
  %3008 = vst.msk [vmem:[%s5 + $0x398] sm:$0xff] %vm1017, %v2856
  %3009 = vst.msk [vmem:[%s5 + $0x3a0] sm:$0xff] %vm1017, %v2860
  %3010 = vst.msk [vmem:[%s5 + $0x3a8] sm:$0xff] %vm1017, %v2864
  %3011 = vst.msk [vmem:[%s5 + $0x3b0] sm:$0xff] %vm1017, %v2868
  %3012 = vst.msk [vmem:[%s5 + $0x3b8] sm:$0xff] %vm1017, %v2872
  %3013 = vst.msk [vmem:[%s5 + $0x3c0] sm:$0xff] %vm1017, %v2876
  %3014 = vst.msk [vmem:[%s5 + $0x3c8] sm:$0xff] %vm1017, %v2880
  %3015 = vst.msk [vmem:[%s5 + $0x3d0] sm:$0xff] %vm1017, %v2884
  %3016 = vst.msk [vmem:[%s5 + $0x3d8] sm:$0xff] %vm1017, %v2888
  %3017 = vst.msk [vmem:[%s5 + $0x3e0] sm:$0xff] %vm1017, %v2892
  %v3018 = vmul.f32 %v16, %v16
  %v3019 = vmul.f32 %v17, %v17
  %v3020 = vmul.f32 %v18, %v18
  %v3021 = vmul.f32 %v19, %v19
  %v3022 = vmul.f32 %v20, %v20
  %v3023 = vmul.f32 %v21, %v21
  %v3024 = vmul.f32 %v22, %v22
  %v3025 = vmul.f32 %v23, %v23
  %v3026 = vmul.f32 %v24, %v24
  %v3027 = vmul.f32 %v25, %v25
  %v3028 = vmul.f32 %v26, %v26
  %v3029 = vmul.f32 %v27, %v27
  %v3030 = vmul.f32 %v28, %v28
  %v3031 = vmul.f32 %v29, %v29
  %v3032 = vmul.f32 %v30, %v30
  %v3033 = vmul.f32 %v31, %v31
  %v3034 = vmul.f32 %v32, %v32
  %v3035 = vmul.f32 %v33, %v33
  %v3036 = vmul.f32 %v34, %v34
  %v3037 = vmul.f32 %v35, %v35
  %v3038 = vmul.f32 %v36, %v36
  %v3039 = vmul.f32 %v37, %v37
  %v3040 = vmul.f32 %v38, %v38
  %v3041 = vmul.f32 %v39, %v39
  %v3042 = vmul.f32 %v40, %v40
  %v3043 = vmul.f32 %v41, %v41
  %v3044 = vmul.f32 %v42, %v42
  %v3045 = vmul.f32 %v43, %v43
  %v3046 = vmul.f32 %v44, %v44
  %v3047 = vmul.f32 %v45, %v45
  %v3048 = vmul.f32 %v46, %v46
  %v3049 = vmul.f32 %v47, %v47
  %v3050 = vmul.f32 %v48, %v48
  %v3051 = vmul.f32 %v49, %v49
  %v3052 = vmul.f32 %v50, %v50
  %v3053 = vmul.f32 %v51, %v51
  %v3054 = vmul.f32 %v52, %v52
  %v3055 = vmul.f32 %v53, %v53
  %v3056 = vmul.f32 %v54, %v54
  %v3057 = vmul.f32 %v55, %v55
  %v3058 = vmul.f32 %v56, %v56
  %v3059 = vmul.f32 %v57, %v57
  %v3060 = vmul.f32 %v58, %v58
  %v3061 = vmul.f32 %v59, %v59
  %v3062 = vmul.f32 %v60, %v60
  %v3063 = vmul.f32 %v61, %v61
  %v3064 = vmul.f32 %v62, %v62
  %v3065 = vmul.f32 %v63, %v63
  %v3066 = vmul.f32 %v64, %v64
  %v3067 = vmul.f32 %v65, %v65
  %v3068 = vmul.f32 %v66, %v66
  %v3069 = vmul.f32 %v67, %v67
  %v3070 = vmul.f32 %v68, %v68
  %v3071 = vmul.f32 %v69, %v69
  %v3072 = vmul.f32 %v70, %v70
  %v3073 = vmul.f32 %v71, %v71
  %v3074 = vmul.f32 %v72, %v72
  %v3075 = vmul.f32 %v73, %v73
  %v3076 = vmul.f32 %v74, %v74
  %v3077 = vmul.f32 %v75, %v75
  %v3078 = vmul.f32 %v76, %v76
  %v3079 = vmul.f32 %v77, %v77
  %v3080 = vmul.f32 %v78, %v78
  %v3081 = vmul.f32 %v79, %v79
  %v3082 = vmul.f32 %v80, %v80
  %v3083 = vmul.f32 %v81, %v81
  %v3084 = vmul.f32 %v82, %v82
  %v3085 = vmul.f32 %v83, %v83
  %v3086 = vmul.f32 %v84, %v84
  %v3087 = vmul.f32 %v85, %v85
  %v3088 = vmul.f32 %v86, %v86
  %v3089 = vmul.f32 %v87, %v87
  %v3090 = vmul.f32 %v88, %v88
  %v3091 = vmul.f32 %v89, %v89
  %v3092 = vmul.f32 %v90, %v90
  %v3093 = vmul.f32 %v91, %v91
  %v3094 = vmul.f32 %v92, %v92
  %v3095 = vmul.f32 %v93, %v93
  %v3096 = vmul.f32 %v94, %v94
  %v3097 = vmul.f32 %v95, %v95
  %v3098 = vmul.f32 %v96, %v96
  %v3099 = vmul.f32 %v97, %v97
  %v3100 = vmul.f32 %v98, %v98
  %v3101 = vmul.f32 %v99, %v99
  %v3102 = vmul.f32 %v100, %v100
  %v3103 = vmul.f32 %v101, %v101
  %v3104 = vmul.f32 %v102, %v102
  %v3105 = vmul.f32 %v103, %v103
  %v3106 = vmul.f32 %v104, %v104
  %v3107 = vmul.f32 %v105, %v105
  %v3108 = vmul.f32 %v106, %v106
  %v3109 = vmul.f32 %v107, %v107
  %v3110 = vmul.f32 %v108, %v108
  %v3111 = vmul.f32 %v109, %v109
  %v3112 = vmul.f32 %v110, %v110
  %v3113 = vmul.f32 %v111, %v111
  %v3114 = vmul.f32 %v112, %v112
  %v3115 = vmul.f32 %v113, %v113
  %v3116 = vmul.f32 %v114, %v114
  %v3117 = vmul.f32 %v115, %v115
  %v3118 = vmul.f32 %v116, %v116
  %v3119 = vmul.f32 %v117, %v117
  %v3120 = vmul.f32 %v118, %v118
  %v3121 = vmul.f32 %v119, %v119
  %v3122 = vmul.f32 %v120, %v120
  %v3123 = vmul.f32 %v121, %v121
  %v3124 = vmul.f32 %v122, %v122
  %v3125 = vmul.f32 %v123, %v123
  %v3126 = vmul.f32 %v124, %v124
  %v3127 = vmul.f32 %v125, %v125
  %v3128 = vmul.f32 %v126, %v126
  %v3129 = vmul.f32 %v127, %v127
  %v3130 = vmul.f32 %v128, %v128
  %v3131 = vmul.f32 %v129, %v129
  %v3132 = vmul.f32 %v130, %v130
  %v3133 = vmul.f32 %v131, %v131
  %v3134 = vmul.f32 %v132, %v132
  %v3135 = vmul.f32 %v133, %v133
  %v3136 = vmul.f32 %v134, %v134
  %v3137 = vmul.f32 %v135, %v135
  %v3138 = vmul.f32 %v136, %v136
  %v3139 = vmul.f32 %v137, %v137
  %v3140 = vmul.f32 %v138, %v138
  %v3141 = vmul.f32 %v139, %v139
  %v3142 = vmul.f32 %v140, %v140
  %v3143 = vmul.f32 %v141, %v141
  %v3144 = vmul.f32 %v142, %v142
  %v3145 = vmul.f32 %v143, %v143
  %v3146 = vmul.f32 %v144, %v144
  %v3147 = vmul.f32 %v145, %v145
  %v3148 = vmul.f32 %v146, %v146
  %v3149 = vmul.f32 %v147, %v147
  %v3150 = vmul.f32 %v148, %v148
  %v3151 = vmul.f32 %v149, %v149
  %v3152 = vmul.f32 %v150, %v150
  %v3153 = vmul.f32 %v151, %v151
  %v3154 = vmul.f32 %v152, %v152
  %v3155 = vmul.f32 %v153, %v153
  %v3156 = vmul.f32 %v154, %v154
  %v3157 = vmul.f32 %v155, %v155
  %v3158 = vmul.f32 %v156, %v156
  %v3159 = vmul.f32 %v157, %v157
  %v3160 = vmul.f32 %v158, %v158
  %v3161 = vmul.f32 %v159, %v159
  %v3162 = vmul.f32 %v160, %v160
  %v3163 = vmul.f32 %v161, %v161
  %v3164 = vmul.f32 %v162, %v162
  %v3165 = vmul.f32 %v163, %v163
  %v3166 = vmul.f32 %v164, %v164
  %v3167 = vmul.f32 %v165, %v165
  %v3168 = vmul.f32 %v166, %v166
  %v3169 = vmul.f32 %v167, %v167
  %v3170 = vmul.f32 %v168, %v168
  %v3171 = vmul.f32 %v169, %v169
  %v3172 = vmul.f32 %v170, %v170
  %v3173 = vmul.f32 %v171, %v171
  %v3174 = vmul.f32 %v172, %v172
  %v3175 = vmul.f32 %v173, %v173
  %v3176 = vmul.f32 %v174, %v174
  %v3177 = vmul.f32 %v175, %v175
  %v3178 = vmul.f32 %v176, %v176
  %v3179 = vmul.f32 %v177, %v177
  %v3180 = vmul.f32 %v178, %v178
  %v3181 = vmul.f32 %v179, %v179
  %v3182 = vmul.f32 %v180, %v180
  %v3183 = vmul.f32 %v181, %v181
  %v3184 = vmul.f32 %v182, %v182
  %v3185 = vmul.f32 %v183, %v183
  %v3186 = vmul.f32 %v184, %v184
  %v3187 = vmul.f32 %v185, %v185
  %v3188 = vmul.f32 %v186, %v186
  %v3189 = vmul.f32 %v187, %v187
  %v3190 = vmul.f32 %v188, %v188
  %v3191 = vmul.f32 %v189, %v189
  %v3192 = vmul.f32 %v190, %v190
  %v3193 = vmul.f32 %v191, %v191
  %v3194 = vmul.f32 %v192, %v192
  %v3195 = vmul.f32 %v193, %v193
  %v3196 = vmul.f32 %v194, %v194
  %v3197 = vmul.f32 %v195, %v195
  %v3198 = vmul.f32 %v196, %v196
  %v3199 = vmul.f32 %v197, %v197
  %v3200 = vmul.f32 %v198, %v198
  %v3201 = vmul.f32 %v199, %v199
  %v3202 = vmul.f32 %v200, %v200
  %v3203 = vmul.f32 %v201, %v201
  %v3204 = vmul.f32 %v202, %v202
  %v3205 = vmul.f32 %v203, %v203
  %v3206 = vmul.f32 %v204, %v204
  %v3207 = vmul.f32 %v205, %v205
  %v3208 = vmul.f32 %v206, %v206
  %v3209 = vmul.f32 %v207, %v207
  %v3210 = vmul.f32 %v208, %v208
  %v3211 = vmul.f32 %v209, %v209
  %v3212 = vmul.f32 %v210, %v210
  %v3213 = vmul.f32 %v211, %v211
  %v3214 = vmul.f32 %v212, %v212
  %v3215 = vmul.f32 %v213, %v213
  %v3216 = vmul.f32 %v214, %v214
  %v3217 = vmul.f32 %v215, %v215
  %v3218 = vmul.f32 %v216, %v216
  %v3219 = vmul.f32 %v217, %v217
  %v3220 = vmul.f32 %v218, %v218
  %v3221 = vmul.f32 %v219, %v219
  %v3222 = vmul.f32 %v220, %v220
  %v3223 = vmul.f32 %v221, %v221
  %v3224 = vmul.f32 %v222, %v222
  %v3225 = vmul.f32 %v223, %v223
  %v3226 = vmul.f32 %v224, %v224
  %v3227 = vmul.f32 %v225, %v225
  %v3228 = vmul.f32 %v226, %v226
  %v3229 = vmul.f32 %v227, %v227
  %v3230 = vmul.f32 %v228, %v228
  %v3231 = vmul.f32 %v229, %v229
  %v3232 = vmul.f32 %v230, %v230
  %v3233 = vmul.f32 %v231, %v231
  %v3234 = vmul.f32 %v232, %v232
  %v3235 = vmul.f32 %v233, %v233
  %v3236 = vmul.f32 %v234, %v234
  %v3237 = vmul.f32 %v235, %v235
  %v3238 = vmul.f32 %v236, %v236
  %v3239 = vmul.f32 %v237, %v237
  %v3240 = vmul.f32 %v238, %v238
  %v3241 = vmul.f32 %v239, %v239
  %v3242 = vmul.f32 %v240, %v240
  %v3243 = vmul.f32 %v241, %v241
  %v3244 = vmul.f32 %v242, %v242
  %v3245 = vmul.f32 %v243, %v243
  %v3246 = vmul.f32 %v244, %v244
  %v3247 = vmul.f32 %v245, %v245
  %v3248 = vmul.f32 %v246, %v246
  %v3249 = vmul.f32 %v247, %v247
  %v3250 = vmul.f32 %v248, %v248
  %v3251 = vmul.f32 %v249, %v249
  %v3252 = vmul.f32 %v250, %v250
  %v3253 = vmul.f32 %v251, %v251
  %v3254 = vmul.f32 %v252, %v252
  %v3255 = vmul.f32 %v253, %v253
  %v3256 = vmul.f32 %v254, %v254
  %v3257 = vmul.f32 %v255, %v255
  %v3258 = vmul.f32 %v256, %v256
  %v3259 = vmul.f32 %v257, %v257
  %v3260 = vmul.f32 %v258, %v258
  %v3261 = vmul.f32 %v259, %v259
  %v3262 = vmul.f32 %v260, %v260
  %v3263 = vmul.f32 %v261, %v261
  %v3264 = vmul.f32 %v262, %v262
  %v3265 = vmul.f32 %v263, %v263
  %v3266 = vmul.f32 %v264, %v264
  %v3267 = vmul.f32 %v265, %v265
  %v3268 = vsel %vm516, %v3019, 0.0
  %v3269 = vadd.f32 %v3018, %v3268
  %3270 = vadd.xlane.f32.xlu0 %v3269
  %v3271 = vpop.xlane.xlu0 %3270
  %v3272 = vsel %vm516, %v3021, 0.0
  %v3273 = vadd.f32 %v3020, %v3272
  %3274 = vadd.xlane.f32.xlu0 %v3273
  %v3275 = vpop.xlane.xlu0 %3274
  %v3276 = vsel %vm516, %v3023, 0.0
  %v3277 = vadd.f32 %v3022, %v3276
  %3278 = vadd.xlane.f32.xlu0 %v3277
  %v3279 = vpop.xlane.xlu0 %3278
  %v3280 = vsel %vm516, %v3025, 0.0
  %v3281 = vadd.f32 %v3024, %v3280
  %3282 = vadd.xlane.f32.xlu0 %v3281
  %v3283 = vpop.xlane.xlu0 %3282
  %v3284 = vsel %vm516, %v3027, 0.0
  %v3285 = vadd.f32 %v3026, %v3284
  %3286 = vadd.xlane.f32.xlu0 %v3285
  %v3287 = vpop.xlane.xlu0 %3286
  %v3288 = vsel %vm516, %v3029, 0.0
  %v3289 = vadd.f32 %v3028, %v3288
  %3290 = vadd.xlane.f32.xlu0 %v3289
  %v3291 = vpop.xlane.xlu0 %3290
  %v3292 = vsel %vm516, %v3031, 0.0
  %v3293 = vadd.f32 %v3030, %v3292
  %3294 = vadd.xlane.f32.xlu0 %v3293
  %v3295 = vpop.xlane.xlu0 %3294
  %v3296 = vsel %vm516, %v3033, 0.0
  %v3297 = vadd.f32 %v3032, %v3296
  %3298 = vadd.xlane.f32.xlu0 %v3297
  %v3299 = vpop.xlane.xlu0 %3298
  %v3300 = vsel %vm516, %v3035, 0.0
  %v3301 = vadd.f32 %v3034, %v3300
  %3302 = vadd.xlane.f32.xlu0 %v3301
  %v3303 = vpop.xlane.xlu0 %3302
  %v3304 = vsel %vm516, %v3037, 0.0
  %v3305 = vadd.f32 %v3036, %v3304
  %3306 = vadd.xlane.f32.xlu0 %v3305
  %v3307 = vpop.xlane.xlu0 %3306
  %v3308 = vsel %vm516, %v3039, 0.0
  %v3309 = vadd.f32 %v3038, %v3308
  %3310 = vadd.xlane.f32.xlu0 %v3309
  %v3311 = vpop.xlane.xlu0 %3310
  %v3312 = vsel %vm516, %v3041, 0.0
  %v3313 = vadd.f32 %v3040, %v3312
  %3314 = vadd.xlane.f32.xlu0 %v3313
  %v3315 = vpop.xlane.xlu0 %3314
  %v3316 = vsel %vm516, %v3043, 0.0
  %v3317 = vadd.f32 %v3042, %v3316
  %3318 = vadd.xlane.f32.xlu0 %v3317
  %v3319 = vpop.xlane.xlu0 %3318
  %v3320 = vsel %vm516, %v3045, 0.0
  %v3321 = vadd.f32 %v3044, %v3320
  %3322 = vadd.xlane.f32.xlu0 %v3321
  %v3323 = vpop.xlane.xlu0 %3322
  %v3324 = vsel %vm516, %v3047, 0.0
  %v3325 = vadd.f32 %v3046, %v3324
  %3326 = vadd.xlane.f32.xlu0 %v3325
  %v3327 = vpop.xlane.xlu0 %3326
  %v3328 = vsel %vm516, %v3049, 0.0
  %v3329 = vadd.f32 %v3048, %v3328
  %3330 = vadd.xlane.f32.xlu0 %v3329
  %v3331 = vpop.xlane.xlu0 %3330
  %v3332 = vsel %vm516, %v3051, 0.0
  %v3333 = vadd.f32 %v3050, %v3332
  %3334 = vadd.xlane.f32.xlu0 %v3333
  %v3335 = vpop.xlane.xlu0 %3334
  %v3336 = vsel %vm516, %v3053, 0.0
  %v3337 = vadd.f32 %v3052, %v3336
  %3338 = vadd.xlane.f32.xlu0 %v3337
  %v3339 = vpop.xlane.xlu0 %3338
  %v3340 = vsel %vm516, %v3055, 0.0
  %v3341 = vadd.f32 %v3054, %v3340
  %3342 = vadd.xlane.f32.xlu0 %v3341
  %v3343 = vpop.xlane.xlu0 %3342
  %v3344 = vsel %vm516, %v3057, 0.0
  %v3345 = vadd.f32 %v3056, %v3344
  %3346 = vadd.xlane.f32.xlu0 %v3345
  %v3347 = vpop.xlane.xlu0 %3346
  %v3348 = vsel %vm516, %v3059, 0.0
  %v3349 = vadd.f32 %v3058, %v3348
  %3350 = vadd.xlane.f32.xlu0 %v3349
  %v3351 = vpop.xlane.xlu0 %3350
  %v3352 = vsel %vm516, %v3061, 0.0
  %v3353 = vadd.f32 %v3060, %v3352
  %3354 = vadd.xlane.f32.xlu0 %v3353
  %v3355 = vpop.xlane.xlu0 %3354
  %v3356 = vsel %vm516, %v3063, 0.0
  %v3357 = vadd.f32 %v3062, %v3356
  %3358 = vadd.xlane.f32.xlu0 %v3357
  %v3359 = vpop.xlane.xlu0 %3358
  %v3360 = vsel %vm516, %v3065, 0.0
  %v3361 = vadd.f32 %v3064, %v3360
  %3362 = vadd.xlane.f32.xlu0 %v3361
  %v3363 = vpop.xlane.xlu0 %3362
  %v3364 = vsel %vm516, %v3067, 0.0
  %v3365 = vadd.f32 %v3066, %v3364
  %3366 = vadd.xlane.f32.xlu0 %v3365
  %v3367 = vpop.xlane.xlu0 %3366
  %v3368 = vsel %vm516, %v3069, 0.0
  %v3369 = vadd.f32 %v3068, %v3368
  %3370 = vadd.xlane.f32.xlu0 %v3369
  %v3371 = vpop.xlane.xlu0 %3370
  %v3372 = vsel %vm516, %v3071, 0.0
  %v3373 = vadd.f32 %v3070, %v3372
  %3374 = vadd.xlane.f32.xlu0 %v3373
  %v3375 = vpop.xlane.xlu0 %3374
  %v3376 = vsel %vm516, %v3073, 0.0
  %v3377 = vadd.f32 %v3072, %v3376
  %3378 = vadd.xlane.f32.xlu0 %v3377
  %v3379 = vpop.xlane.xlu0 %3378
  %v3380 = vsel %vm516, %v3075, 0.0
  %v3381 = vadd.f32 %v3074, %v3380
  %3382 = vadd.xlane.f32.xlu0 %v3381
  %v3383 = vpop.xlane.xlu0 %3382
  %v3384 = vsel %vm516, %v3077, 0.0
  %v3385 = vadd.f32 %v3076, %v3384
  %3386 = vadd.xlane.f32.xlu0 %v3385
  %v3387 = vpop.xlane.xlu0 %3386
  %v3388 = vsel %vm516, %v3079, 0.0
  %v3389 = vadd.f32 %v3078, %v3388
  %3390 = vadd.xlane.f32.xlu0 %v3389
  %v3391 = vpop.xlane.xlu0 %3390
  %v3392 = vsel %vm516, %v3081, 0.0
  %v3393 = vadd.f32 %v3080, %v3392
  %3394 = vadd.xlane.f32.xlu0 %v3393
  %v3395 = vpop.xlane.xlu0 %3394
  %v3396 = vsel %vm516, %v3083, 0.0
  %v3397 = vadd.f32 %v3082, %v3396
  %3398 = vadd.xlane.f32.xlu0 %v3397
  %v3399 = vpop.xlane.xlu0 %3398
  %v3400 = vsel %vm516, %v3085, 0.0
  %v3401 = vadd.f32 %v3084, %v3400
  %3402 = vadd.xlane.f32.xlu0 %v3401
  %v3403 = vpop.xlane.xlu0 %3402
  %v3404 = vsel %vm516, %v3087, 0.0
  %v3405 = vadd.f32 %v3086, %v3404
  %3406 = vadd.xlane.f32.xlu0 %v3405
  %v3407 = vpop.xlane.xlu0 %3406
  %v3408 = vsel %vm516, %v3089, 0.0
  %v3409 = vadd.f32 %v3088, %v3408
  %3410 = vadd.xlane.f32.xlu0 %v3409
  %v3411 = vpop.xlane.xlu0 %3410
  %v3412 = vsel %vm516, %v3091, 0.0
  %v3413 = vadd.f32 %v3090, %v3412
  %3414 = vadd.xlane.f32.xlu0 %v3413
  %v3415 = vpop.xlane.xlu0 %3414
  %v3416 = vsel %vm516, %v3093, 0.0
  %v3417 = vadd.f32 %v3092, %v3416
  %3418 = vadd.xlane.f32.xlu0 %v3417
  %v3419 = vpop.xlane.xlu0 %3418
  %v3420 = vsel %vm516, %v3095, 0.0
  %v3421 = vadd.f32 %v3094, %v3420
  %3422 = vadd.xlane.f32.xlu0 %v3421
  %v3423 = vpop.xlane.xlu0 %3422
  %v3424 = vsel %vm516, %v3097, 0.0
  %v3425 = vadd.f32 %v3096, %v3424
  %3426 = vadd.xlane.f32.xlu0 %v3425
  %v3427 = vpop.xlane.xlu0 %3426
  %v3428 = vsel %vm516, %v3099, 0.0
  %v3429 = vadd.f32 %v3098, %v3428
  %3430 = vadd.xlane.f32.xlu0 %v3429
  %v3431 = vpop.xlane.xlu0 %3430
  %v3432 = vsel %vm516, %v3101, 0.0
  %v3433 = vadd.f32 %v3100, %v3432
  %3434 = vadd.xlane.f32.xlu0 %v3433
  %v3435 = vpop.xlane.xlu0 %3434
  %v3436 = vsel %vm516, %v3103, 0.0
  %v3437 = vadd.f32 %v3102, %v3436
  %3438 = vadd.xlane.f32.xlu0 %v3437
  %v3439 = vpop.xlane.xlu0 %3438
  %v3440 = vsel %vm516, %v3105, 0.0
  %v3441 = vadd.f32 %v3104, %v3440
  %3442 = vadd.xlane.f32.xlu0 %v3441
  %v3443 = vpop.xlane.xlu0 %3442
  %v3444 = vsel %vm516, %v3107, 0.0
  %v3445 = vadd.f32 %v3106, %v3444
  %3446 = vadd.xlane.f32.xlu0 %v3445
  %v3447 = vpop.xlane.xlu0 %3446
  %v3448 = vsel %vm516, %v3109, 0.0
  %v3449 = vadd.f32 %v3108, %v3448
  %3450 = vadd.xlane.f32.xlu0 %v3449
  %v3451 = vpop.xlane.xlu0 %3450
  %v3452 = vsel %vm516, %v3111, 0.0
  %v3453 = vadd.f32 %v3110, %v3452
  %3454 = vadd.xlane.f32.xlu0 %v3453
  %v3455 = vpop.xlane.xlu0 %3454
  %v3456 = vsel %vm516, %v3113, 0.0
  %v3457 = vadd.f32 %v3112, %v3456
  %3458 = vadd.xlane.f32.xlu0 %v3457
  %v3459 = vpop.xlane.xlu0 %3458
  %v3460 = vsel %vm516, %v3115, 0.0
  %v3461 = vadd.f32 %v3114, %v3460
  %3462 = vadd.xlane.f32.xlu0 %v3461
  %v3463 = vpop.xlane.xlu0 %3462
  %v3464 = vsel %vm516, %v3117, 0.0
  %v3465 = vadd.f32 %v3116, %v3464
  %3466 = vadd.xlane.f32.xlu0 %v3465
  %v3467 = vpop.xlane.xlu0 %3466
  %v3468 = vsel %vm516, %v3119, 0.0
  %v3469 = vadd.f32 %v3118, %v3468
  %3470 = vadd.xlane.f32.xlu0 %v3469
  %v3471 = vpop.xlane.xlu0 %3470
  %v3472 = vsel %vm516, %v3121, 0.0
  %v3473 = vadd.f32 %v3120, %v3472
  %3474 = vadd.xlane.f32.xlu0 %v3473
  %v3475 = vpop.xlane.xlu0 %3474
  %v3476 = vsel %vm516, %v3123, 0.0
  %v3477 = vadd.f32 %v3122, %v3476
  %3478 = vadd.xlane.f32.xlu0 %v3477
  %v3479 = vpop.xlane.xlu0 %3478
  %v3480 = vsel %vm516, %v3125, 0.0
  %v3481 = vadd.f32 %v3124, %v3480
  %3482 = vadd.xlane.f32.xlu0 %v3481
  %v3483 = vpop.xlane.xlu0 %3482
  %v3484 = vsel %vm516, %v3127, 0.0
  %v3485 = vadd.f32 %v3126, %v3484
  %3486 = vadd.xlane.f32.xlu0 %v3485
  %v3487 = vpop.xlane.xlu0 %3486
  %v3488 = vsel %vm516, %v3129, 0.0
  %v3489 = vadd.f32 %v3128, %v3488
  %3490 = vadd.xlane.f32.xlu0 %v3489
  %v3491 = vpop.xlane.xlu0 %3490
  %v3492 = vsel %vm516, %v3131, 0.0
  %v3493 = vadd.f32 %v3130, %v3492
  %3494 = vadd.xlane.f32.xlu0 %v3493
  %v3495 = vpop.xlane.xlu0 %3494
  %v3496 = vsel %vm516, %v3133, 0.0
  %v3497 = vadd.f32 %v3132, %v3496
  %3498 = vadd.xlane.f32.xlu0 %v3497
  %v3499 = vpop.xlane.xlu0 %3498
  %v3500 = vsel %vm516, %v3135, 0.0
  %v3501 = vadd.f32 %v3134, %v3500
  %3502 = vadd.xlane.f32.xlu0 %v3501
  %v3503 = vpop.xlane.xlu0 %3502
  %v3504 = vsel %vm516, %v3137, 0.0
  %v3505 = vadd.f32 %v3136, %v3504
  %3506 = vadd.xlane.f32.xlu0 %v3505
  %v3507 = vpop.xlane.xlu0 %3506
  %v3508 = vsel %vm516, %v3139, 0.0
  %v3509 = vadd.f32 %v3138, %v3508
  %3510 = vadd.xlane.f32.xlu0 %v3509
  %v3511 = vpop.xlane.xlu0 %3510
  %v3512 = vsel %vm516, %v3141, 0.0
  %v3513 = vadd.f32 %v3140, %v3512
  %3514 = vadd.xlane.f32.xlu0 %v3513
  %v3515 = vpop.xlane.xlu0 %3514
  %v3516 = vsel %vm516, %v3143, 0.0
  %v3517 = vadd.f32 %v3142, %v3516
  %3518 = vadd.xlane.f32.xlu0 %v3517
  %v3519 = vpop.xlane.xlu0 %3518
  %v3520 = vsel %vm516, %v3145, 0.0
  %v3521 = vadd.f32 %v3144, %v3520
  %3522 = vadd.xlane.f32.xlu0 %v3521
  %v3523 = vpop.xlane.xlu0 %3522
  %v3524 = vsel %vm516, %v3147, 0.0
  %v3525 = vadd.f32 %v3146, %v3524
  %3526 = vadd.xlane.f32.xlu0 %v3525
  %v3527 = vpop.xlane.xlu0 %3526
  %v3528 = vsel %vm516, %v3149, 0.0
  %v3529 = vadd.f32 %v3148, %v3528
  %3530 = vadd.xlane.f32.xlu0 %v3529
  %v3531 = vpop.xlane.xlu0 %3530
  %v3532 = vsel %vm516, %v3151, 0.0
  %v3533 = vadd.f32 %v3150, %v3532
  %3534 = vadd.xlane.f32.xlu0 %v3533
  %v3535 = vpop.xlane.xlu0 %3534
  %v3536 = vsel %vm516, %v3153, 0.0
  %v3537 = vadd.f32 %v3152, %v3536
  %3538 = vadd.xlane.f32.xlu0 %v3537
  %v3539 = vpop.xlane.xlu0 %3538
  %v3540 = vsel %vm516, %v3155, 0.0
  %v3541 = vadd.f32 %v3154, %v3540
  %3542 = vadd.xlane.f32.xlu0 %v3541
  %v3543 = vpop.xlane.xlu0 %3542
  %v3544 = vsel %vm516, %v3157, 0.0
  %v3545 = vadd.f32 %v3156, %v3544
  %3546 = vadd.xlane.f32.xlu0 %v3545
  %v3547 = vpop.xlane.xlu0 %3546
  %v3548 = vsel %vm516, %v3159, 0.0
  %v3549 = vadd.f32 %v3158, %v3548
  %3550 = vadd.xlane.f32.xlu0 %v3549
  %v3551 = vpop.xlane.xlu0 %3550
  %v3552 = vsel %vm516, %v3161, 0.0
  %v3553 = vadd.f32 %v3160, %v3552
  %3554 = vadd.xlane.f32.xlu0 %v3553
  %v3555 = vpop.xlane.xlu0 %3554
  %v3556 = vsel %vm516, %v3163, 0.0
  %v3557 = vadd.f32 %v3162, %v3556
  %3558 = vadd.xlane.f32.xlu0 %v3557
  %v3559 = vpop.xlane.xlu0 %3558
  %v3560 = vsel %vm516, %v3165, 0.0
  %v3561 = vadd.f32 %v3164, %v3560
  %3562 = vadd.xlane.f32.xlu0 %v3561
  %v3563 = vpop.xlane.xlu0 %3562
  %v3564 = vsel %vm516, %v3167, 0.0
  %v3565 = vadd.f32 %v3166, %v3564
  %3566 = vadd.xlane.f32.xlu0 %v3565
  %v3567 = vpop.xlane.xlu0 %3566
  %v3568 = vsel %vm516, %v3169, 0.0
  %v3569 = vadd.f32 %v3168, %v3568
  %3570 = vadd.xlane.f32.xlu0 %v3569
  %v3571 = vpop.xlane.xlu0 %3570
  %v3572 = vsel %vm516, %v3171, 0.0
  %v3573 = vadd.f32 %v3170, %v3572
  %3574 = vadd.xlane.f32.xlu0 %v3573
  %v3575 = vpop.xlane.xlu0 %3574
  %v3576 = vsel %vm516, %v3173, 0.0
  %v3577 = vadd.f32 %v3172, %v3576
  %3578 = vadd.xlane.f32.xlu0 %v3577
  %v3579 = vpop.xlane.xlu0 %3578
  %v3580 = vsel %vm516, %v3175, 0.0
  %v3581 = vadd.f32 %v3174, %v3580
  %3582 = vadd.xlane.f32.xlu0 %v3581
  %v3583 = vpop.xlane.xlu0 %3582
  %v3584 = vsel %vm516, %v3177, 0.0
  %v3585 = vadd.f32 %v3176, %v3584
  %3586 = vadd.xlane.f32.xlu0 %v3585
  %v3587 = vpop.xlane.xlu0 %3586
  %v3588 = vsel %vm516, %v3179, 0.0
  %v3589 = vadd.f32 %v3178, %v3588
  %3590 = vadd.xlane.f32.xlu0 %v3589
  %v3591 = vpop.xlane.xlu0 %3590
  %v3592 = vsel %vm516, %v3181, 0.0
  %v3593 = vadd.f32 %v3180, %v3592
  %3594 = vadd.xlane.f32.xlu0 %v3593
  %v3595 = vpop.xlane.xlu0 %3594
  %v3596 = vsel %vm516, %v3183, 0.0
  %v3597 = vadd.f32 %v3182, %v3596
  %3598 = vadd.xlane.f32.xlu0 %v3597
  %v3599 = vpop.xlane.xlu0 %3598
  %v3600 = vsel %vm516, %v3185, 0.0
  %v3601 = vadd.f32 %v3184, %v3600
  %3602 = vadd.xlane.f32.xlu0 %v3601
  %v3603 = vpop.xlane.xlu0 %3602
  %v3604 = vsel %vm516, %v3187, 0.0
  %v3605 = vadd.f32 %v3186, %v3604
  %3606 = vadd.xlane.f32.xlu0 %v3605
  %v3607 = vpop.xlane.xlu0 %3606
  %v3608 = vsel %vm516, %v3189, 0.0
  %v3609 = vadd.f32 %v3188, %v3608
  %3610 = vadd.xlane.f32.xlu0 %v3609
  %v3611 = vpop.xlane.xlu0 %3610
  %v3612 = vsel %vm516, %v3191, 0.0
  %v3613 = vadd.f32 %v3190, %v3612
  %3614 = vadd.xlane.f32.xlu0 %v3613
  %v3615 = vpop.xlane.xlu0 %3614
  %v3616 = vsel %vm516, %v3193, 0.0
  %v3617 = vadd.f32 %v3192, %v3616
  %3618 = vadd.xlane.f32.xlu0 %v3617
  %v3619 = vpop.xlane.xlu0 %3618
  %v3620 = vsel %vm516, %v3195, 0.0
  %v3621 = vadd.f32 %v3194, %v3620
  %3622 = vadd.xlane.f32.xlu0 %v3621
  %v3623 = vpop.xlane.xlu0 %3622
  %v3624 = vsel %vm516, %v3197, 0.0
  %v3625 = vadd.f32 %v3196, %v3624
  %3626 = vadd.xlane.f32.xlu0 %v3625
  %v3627 = vpop.xlane.xlu0 %3626
  %v3628 = vsel %vm516, %v3199, 0.0
  %v3629 = vadd.f32 %v3198, %v3628
  %3630 = vadd.xlane.f32.xlu0 %v3629
  %v3631 = vpop.xlane.xlu0 %3630
  %v3632 = vsel %vm516, %v3201, 0.0
  %v3633 = vadd.f32 %v3200, %v3632
  %3634 = vadd.xlane.f32.xlu0 %v3633
  %v3635 = vpop.xlane.xlu0 %3634
  %v3636 = vsel %vm516, %v3203, 0.0
  %v3637 = vadd.f32 %v3202, %v3636
  %3638 = vadd.xlane.f32.xlu0 %v3637
  %v3639 = vpop.xlane.xlu0 %3638
  %v3640 = vsel %vm516, %v3205, 0.0
  %v3641 = vadd.f32 %v3204, %v3640
  %3642 = vadd.xlane.f32.xlu0 %v3641
  %v3643 = vpop.xlane.xlu0 %3642
  %v3644 = vsel %vm516, %v3207, 0.0
  %v3645 = vadd.f32 %v3206, %v3644
  %3646 = vadd.xlane.f32.xlu0 %v3645
  %v3647 = vpop.xlane.xlu0 %3646
  %v3648 = vsel %vm516, %v3209, 0.0
  %v3649 = vadd.f32 %v3208, %v3648
  %3650 = vadd.xlane.f32.xlu0 %v3649
  %v3651 = vpop.xlane.xlu0 %3650
  %v3652 = vsel %vm516, %v3211, 0.0
  %v3653 = vadd.f32 %v3210, %v3652
  %3654 = vadd.xlane.f32.xlu0 %v3653
  %v3655 = vpop.xlane.xlu0 %3654
  %v3656 = vsel %vm516, %v3213, 0.0
  %v3657 = vadd.f32 %v3212, %v3656
  %3658 = vadd.xlane.f32.xlu0 %v3657
  %v3659 = vpop.xlane.xlu0 %3658
  %v3660 = vsel %vm516, %v3215, 0.0
  %v3661 = vadd.f32 %v3214, %v3660
  %3662 = vadd.xlane.f32.xlu0 %v3661
  %v3663 = vpop.xlane.xlu0 %3662
  %v3664 = vsel %vm516, %v3217, 0.0
  %v3665 = vadd.f32 %v3216, %v3664
  %3666 = vadd.xlane.f32.xlu0 %v3665
  %v3667 = vpop.xlane.xlu0 %3666
  %v3668 = vsel %vm516, %v3219, 0.0
  %v3669 = vadd.f32 %v3218, %v3668
  %3670 = vadd.xlane.f32.xlu0 %v3669
  %v3671 = vpop.xlane.xlu0 %3670
  %v3672 = vsel %vm516, %v3221, 0.0
  %v3673 = vadd.f32 %v3220, %v3672
  %3674 = vadd.xlane.f32.xlu0 %v3673
  %v3675 = vpop.xlane.xlu0 %3674
  %v3676 = vsel %vm516, %v3223, 0.0
  %v3677 = vadd.f32 %v3222, %v3676
  %3678 = vadd.xlane.f32.xlu0 %v3677
  %v3679 = vpop.xlane.xlu0 %3678
  %v3680 = vsel %vm516, %v3225, 0.0
  %v3681 = vadd.f32 %v3224, %v3680
  %3682 = vadd.xlane.f32.xlu0 %v3681
  %v3683 = vpop.xlane.xlu0 %3682
  %v3684 = vsel %vm516, %v3227, 0.0
  %v3685 = vadd.f32 %v3226, %v3684
  %3686 = vadd.xlane.f32.xlu0 %v3685
  %v3687 = vpop.xlane.xlu0 %3686
  %v3688 = vsel %vm516, %v3229, 0.0
  %v3689 = vadd.f32 %v3228, %v3688
  %3690 = vadd.xlane.f32.xlu0 %v3689
  %v3691 = vpop.xlane.xlu0 %3690
  %v3692 = vsel %vm516, %v3231, 0.0
  %v3693 = vadd.f32 %v3230, %v3692
  %3694 = vadd.xlane.f32.xlu0 %v3693
  %v3695 = vpop.xlane.xlu0 %3694
  %v3696 = vsel %vm516, %v3233, 0.0
  %v3697 = vadd.f32 %v3232, %v3696
  %3698 = vadd.xlane.f32.xlu0 %v3697
  %v3699 = vpop.xlane.xlu0 %3698
  %v3700 = vsel %vm516, %v3235, 0.0
  %v3701 = vadd.f32 %v3234, %v3700
  %3702 = vadd.xlane.f32.xlu0 %v3701
  %v3703 = vpop.xlane.xlu0 %3702
  %v3704 = vsel %vm516, %v3237, 0.0
  %v3705 = vadd.f32 %v3236, %v3704
  %3706 = vadd.xlane.f32.xlu0 %v3705
  %v3707 = vpop.xlane.xlu0 %3706
  %v3708 = vsel %vm516, %v3239, 0.0
  %v3709 = vadd.f32 %v3238, %v3708
  %3710 = vadd.xlane.f32.xlu0 %v3709
  %v3711 = vpop.xlane.xlu0 %3710
  %v3712 = vsel %vm516, %v3241, 0.0
  %v3713 = vadd.f32 %v3240, %v3712
  %3714 = vadd.xlane.f32.xlu0 %v3713
  %v3715 = vpop.xlane.xlu0 %3714
  %v3716 = vsel %vm516, %v3243, 0.0
  %v3717 = vadd.f32 %v3242, %v3716
  %3718 = vadd.xlane.f32.xlu0 %v3717
  %v3719 = vpop.xlane.xlu0 %3718
  %v3720 = vsel %vm516, %v3245, 0.0
  %v3721 = vadd.f32 %v3244, %v3720
  %3722 = vadd.xlane.f32.xlu0 %v3721
  %v3723 = vpop.xlane.xlu0 %3722
  %v3724 = vsel %vm516, %v3247, 0.0
  %v3725 = vadd.f32 %v3246, %v3724
  %3726 = vadd.xlane.f32.xlu0 %v3725
  %v3727 = vpop.xlane.xlu0 %3726
  %v3728 = vsel %vm516, %v3249, 0.0
  %v3729 = vadd.f32 %v3248, %v3728
  %3730 = vadd.xlane.f32.xlu0 %v3729
  %v3731 = vpop.xlane.xlu0 %3730
  %v3732 = vsel %vm516, %v3251, 0.0
  %v3733 = vadd.f32 %v3250, %v3732
  %3734 = vadd.xlane.f32.xlu0 %v3733
  %v3735 = vpop.xlane.xlu0 %3734
  %v3736 = vsel %vm516, %v3253, 0.0
  %v3737 = vadd.f32 %v3252, %v3736
  %3738 = vadd.xlane.f32.xlu0 %v3737
  %v3739 = vpop.xlane.xlu0 %3738
  %v3740 = vsel %vm516, %v3255, 0.0
  %v3741 = vadd.f32 %v3254, %v3740
  %3742 = vadd.xlane.f32.xlu0 %v3741
  %v3743 = vpop.xlane.xlu0 %3742
  %v3744 = vsel %vm516, %v3257, 0.0
  %v3745 = vadd.f32 %v3256, %v3744
  %3746 = vadd.xlane.f32.xlu0 %v3745
  %v3747 = vpop.xlane.xlu0 %3746
  %v3748 = vsel %vm516, %v3259, 0.0
  %v3749 = vadd.f32 %v3258, %v3748
  %3750 = vadd.xlane.f32.xlu0 %v3749
  %v3751 = vpop.xlane.xlu0 %3750
  %v3752 = vsel %vm516, %v3261, 0.0
  %v3753 = vadd.f32 %v3260, %v3752
  %3754 = vadd.xlane.f32.xlu0 %v3753
  %v3755 = vpop.xlane.xlu0 %3754
  %v3756 = vsel %vm516, %v3263, 0.0
  %v3757 = vadd.f32 %v3262, %v3756
  %3758 = vadd.xlane.f32.xlu0 %v3757
  %v3759 = vpop.xlane.xlu0 %3758
  %v3760 = vsel %vm516, %v3265, 0.0
  %v3761 = vadd.f32 %v3264, %v3760
  %3762 = vadd.xlane.f32.xlu0 %v3761
  %v3763 = vpop.xlane.xlu0 %3762
  %v3764 = vsel %vm516, %v3267, 0.0
  %v3765 = vadd.f32 %v3266, %v3764
  %3766 = vadd.xlane.f32.xlu0 %v3765
  %v3767 = vpop.xlane.xlu0 %3766
  %3768 = vst.msk [vmem:[%s6] sm:$0xff] %vm1017, %v3271
  %3769 = vst.msk [vmem:[%s6 + $0x8] sm:$0xff] %vm1017, %v3275
  %3770 = vst.msk [vmem:[%s6 + $0x10] sm:$0xff] %vm1017, %v3279
  %3771 = vst.msk [vmem:[%s6 + $0x18] sm:$0xff] %vm1017, %v3283
  %3772 = vst.msk [vmem:[%s6 + $0x20] sm:$0xff] %vm1017, %v3287
  %3773 = vst.msk [vmem:[%s6 + $0x28] sm:$0xff] %vm1017, %v3291
  %3774 = vst.msk [vmem:[%s6 + $0x30] sm:$0xff] %vm1017, %v3295
  %3775 = vst.msk [vmem:[%s6 + $0x38] sm:$0xff] %vm1017, %v3299
  %3776 = vst.msk [vmem:[%s6 + $0x40] sm:$0xff] %vm1017, %v3303
  %3777 = vst.msk [vmem:[%s6 + $0x48] sm:$0xff] %vm1017, %v3307
  %3778 = vst.msk [vmem:[%s6 + $0x50] sm:$0xff] %vm1017, %v3311
  %3779 = vst.msk [vmem:[%s6 + $0x58] sm:$0xff] %vm1017, %v3315
  %3780 = vst.msk [vmem:[%s6 + $0x60] sm:$0xff] %vm1017, %v3319
  %3781 = vst.msk [vmem:[%s6 + $0x68] sm:$0xff] %vm1017, %v3323
  %3782 = vst.msk [vmem:[%s6 + $0x70] sm:$0xff] %vm1017, %v3327
  %3783 = vst.msk [vmem:[%s6 + $0x78] sm:$0xff] %vm1017, %v3331
  %3784 = vst.msk [vmem:[%s6 + $0x80] sm:$0xff] %vm1017, %v3335
  %3785 = vst.msk [vmem:[%s6 + $0x88] sm:$0xff] %vm1017, %v3339
  %3786 = vst.msk [vmem:[%s6 + $0x90] sm:$0xff] %vm1017, %v3343
  %3787 = vst.msk [vmem:[%s6 + $0x98] sm:$0xff] %vm1017, %v3347
  %3788 = vst.msk [vmem:[%s6 + $0xa0] sm:$0xff] %vm1017, %v3351
  %3789 = vst.msk [vmem:[%s6 + $0xa8] sm:$0xff] %vm1017, %v3355
  %3790 = vst.msk [vmem:[%s6 + $0xb0] sm:$0xff] %vm1017, %v3359
  %3791 = vst.msk [vmem:[%s6 + $0xb8] sm:$0xff] %vm1017, %v3363
  %3792 = vst.msk [vmem:[%s6 + $0xc0] sm:$0xff] %vm1017, %v3367
  %3793 = vst.msk [vmem:[%s6 + $0xc8] sm:$0xff] %vm1017, %v3371
  %3794 = vst.msk [vmem:[%s6 + $0xd0] sm:$0xff] %vm1017, %v3375
  %3795 = vst.msk [vmem:[%s6 + $0xd8] sm:$0xff] %vm1017, %v3379
  %3796 = vst.msk [vmem:[%s6 + $0xe0] sm:$0xff] %vm1017, %v3383
  %3797 = vst.msk [vmem:[%s6 + $0xe8] sm:$0xff] %vm1017, %v3387
  %3798 = vst.msk [vmem:[%s6 + $0xf0] sm:$0xff] %vm1017, %v3391
  %3799 = vst.msk [vmem:[%s6 + $0xf8] sm:$0xff] %vm1017, %v3395
  %3800 = vst.msk [vmem:[%s6 + $0x100] sm:$0xff] %vm1017, %v3399
  %3801 = vst.msk [vmem:[%s6 + $0x108] sm:$0xff] %vm1017, %v3403
  %3802 = vst.msk [vmem:[%s6 + $0x110] sm:$0xff] %vm1017, %v3407
  %3803 = vst.msk [vmem:[%s6 + $0x118] sm:$0xff] %vm1017, %v3411
  %3804 = vst.msk [vmem:[%s6 + $0x120] sm:$0xff] %vm1017, %v3415
  %3805 = vst.msk [vmem:[%s6 + $0x128] sm:$0xff] %vm1017, %v3419
  %3806 = vst.msk [vmem:[%s6 + $0x130] sm:$0xff] %vm1017, %v3423
  %3807 = vst.msk [vmem:[%s6 + $0x138] sm:$0xff] %vm1017, %v3427
  %3808 = vst.msk [vmem:[%s6 + $0x140] sm:$0xff] %vm1017, %v3431
  %3809 = vst.msk [vmem:[%s6 + $0x148] sm:$0xff] %vm1017, %v3435
  %3810 = vst.msk [vmem:[%s6 + $0x150] sm:$0xff] %vm1017, %v3439
  %3811 = vst.msk [vmem:[%s6 + $0x158] sm:$0xff] %vm1017, %v3443
  %3812 = vst.msk [vmem:[%s6 + $0x160] sm:$0xff] %vm1017, %v3447
  %3813 = vst.msk [vmem:[%s6 + $0x168] sm:$0xff] %vm1017, %v3451
  %3814 = vst.msk [vmem:[%s6 + $0x170] sm:$0xff] %vm1017, %v3455
  %3815 = vst.msk [vmem:[%s6 + $0x178] sm:$0xff] %vm1017, %v3459
  %3816 = vst.msk [vmem:[%s6 + $0x180] sm:$0xff] %vm1017, %v3463
  %3817 = vst.msk [vmem:[%s6 + $0x188] sm:$0xff] %vm1017, %v3467
  %3818 = vst.msk [vmem:[%s6 + $0x190] sm:$0xff] %vm1017, %v3471
  %3819 = vst.msk [vmem:[%s6 + $0x198] sm:$0xff] %vm1017, %v3475
  %3820 = vst.msk [vmem:[%s6 + $0x1a0] sm:$0xff] %vm1017, %v3479
  %3821 = vst.msk [vmem:[%s6 + $0x1a8] sm:$0xff] %vm1017, %v3483
  %3822 = vst.msk [vmem:[%s6 + $0x1b0] sm:$0xff] %vm1017, %v3487
  %3823 = vst.msk [vmem:[%s6 + $0x1b8] sm:$0xff] %vm1017, %v3491
  %3824 = vst.msk [vmem:[%s6 + $0x1c0] sm:$0xff] %vm1017, %v3495
  %3825 = vst.msk [vmem:[%s6 + $0x1c8] sm:$0xff] %vm1017, %v3499
  %3826 = vst.msk [vmem:[%s6 + $0x1d0] sm:$0xff] %vm1017, %v3503
  %3827 = vst.msk [vmem:[%s6 + $0x1d8] sm:$0xff] %vm1017, %v3507
  %3828 = vst.msk [vmem:[%s6 + $0x1e0] sm:$0xff] %vm1017, %v3511
  %3829 = vst.msk [vmem:[%s6 + $0x1e8] sm:$0xff] %vm1017, %v3515
  %3830 = vst.msk [vmem:[%s6 + $0x1f0] sm:$0xff] %vm1017, %v3519
  %3831 = vst.msk [vmem:[%s6 + $0x1f8] sm:$0xff] %vm1017, %v3523
  %3832 = vst.msk [vmem:[%s6 + $0x200] sm:$0xff] %vm1017, %v3527
  %3833 = vst.msk [vmem:[%s6 + $0x208] sm:$0xff] %vm1017, %v3531
  %3834 = vst.msk [vmem:[%s6 + $0x210] sm:$0xff] %vm1017, %v3535
  %3835 = vst.msk [vmem:[%s6 + $0x218] sm:$0xff] %vm1017, %v3539
  %3836 = vst.msk [vmem:[%s6 + $0x220] sm:$0xff] %vm1017, %v3543
  %3837 = vst.msk [vmem:[%s6 + $0x228] sm:$0xff] %vm1017, %v3547
  %3838 = vst.msk [vmem:[%s6 + $0x230] sm:$0xff] %vm1017, %v3551
  %3839 = vst.msk [vmem:[%s6 + $0x238] sm:$0xff] %vm1017, %v3555
  %3840 = vst.msk [vmem:[%s6 + $0x240] sm:$0xff] %vm1017, %v3559
  %3841 = vst.msk [vmem:[%s6 + $0x248] sm:$0xff] %vm1017, %v3563
  %3842 = vst.msk [vmem:[%s6 + $0x250] sm:$0xff] %vm1017, %v3567
  %3843 = vst.msk [vmem:[%s6 + $0x258] sm:$0xff] %vm1017, %v3571
  %3844 = vst.msk [vmem:[%s6 + $0x260] sm:$0xff] %vm1017, %v3575
  %3845 = vst.msk [vmem:[%s6 + $0x268] sm:$0xff] %vm1017, %v3579
  %3846 = vst.msk [vmem:[%s6 + $0x270] sm:$0xff] %vm1017, %v3583
  %3847 = vst.msk [vmem:[%s6 + $0x278] sm:$0xff] %vm1017, %v3587
  %3848 = vst.msk [vmem:[%s6 + $0x280] sm:$0xff] %vm1017, %v3591
  %3849 = vst.msk [vmem:[%s6 + $0x288] sm:$0xff] %vm1017, %v3595
  %3850 = vst.msk [vmem:[%s6 + $0x290] sm:$0xff] %vm1017, %v3599
  %3851 = vst.msk [vmem:[%s6 + $0x298] sm:$0xff] %vm1017, %v3603
  %3852 = vst.msk [vmem:[%s6 + $0x2a0] sm:$0xff] %vm1017, %v3607
  %3853 = vst.msk [vmem:[%s6 + $0x2a8] sm:$0xff] %vm1017, %v3611
  %3854 = vst.msk [vmem:[%s6 + $0x2b0] sm:$0xff] %vm1017, %v3615
  %3855 = vst.msk [vmem:[%s6 + $0x2b8] sm:$0xff] %vm1017, %v3619
  %3856 = vst.msk [vmem:[%s6 + $0x2c0] sm:$0xff] %vm1017, %v3623
  %3857 = vst.msk [vmem:[%s6 + $0x2c8] sm:$0xff] %vm1017, %v3627
  %3858 = vst.msk [vmem:[%s6 + $0x2d0] sm:$0xff] %vm1017, %v3631
  %3859 = vst.msk [vmem:[%s6 + $0x2d8] sm:$0xff] %vm1017, %v3635
  %3860 = vst.msk [vmem:[%s6 + $0x2e0] sm:$0xff] %vm1017, %v3639
  %3861 = vst.msk [vmem:[%s6 + $0x2e8] sm:$0xff] %vm1017, %v3643
  %3862 = vst.msk [vmem:[%s6 + $0x2f0] sm:$0xff] %vm1017, %v3647
  %3863 = vst.msk [vmem:[%s6 + $0x2f8] sm:$0xff] %vm1017, %v3651
  %3864 = vst.msk [vmem:[%s6 + $0x300] sm:$0xff] %vm1017, %v3655
  %3865 = vst.msk [vmem:[%s6 + $0x308] sm:$0xff] %vm1017, %v3659
  %3866 = vst.msk [vmem:[%s6 + $0x310] sm:$0xff] %vm1017, %v3663
  %3867 = vst.msk [vmem:[%s6 + $0x318] sm:$0xff] %vm1017, %v3667
  %3868 = vst.msk [vmem:[%s6 + $0x320] sm:$0xff] %vm1017, %v3671
  %3869 = vst.msk [vmem:[%s6 + $0x328] sm:$0xff] %vm1017, %v3675
  %3870 = vst.msk [vmem:[%s6 + $0x330] sm:$0xff] %vm1017, %v3679
  %3871 = vst.msk [vmem:[%s6 + $0x338] sm:$0xff] %vm1017, %v3683
  %3872 = vst.msk [vmem:[%s6 + $0x340] sm:$0xff] %vm1017, %v3687
  %3873 = vst.msk [vmem:[%s6 + $0x348] sm:$0xff] %vm1017, %v3691
  %3874 = vst.msk [vmem:[%s6 + $0x350] sm:$0xff] %vm1017, %v3695
  %3875 = vst.msk [vmem:[%s6 + $0x358] sm:$0xff] %vm1017, %v3699
  %3876 = vst.msk [vmem:[%s6 + $0x360] sm:$0xff] %vm1017, %v3703
  %3877 = vst.msk [vmem:[%s6 + $0x368] sm:$0xff] %vm1017, %v3707
  %3878 = vst.msk [vmem:[%s6 + $0x370] sm:$0xff] %vm1017, %v3711
  %3879 = vst.msk [vmem:[%s6 + $0x378] sm:$0xff] %vm1017, %v3715
  %3880 = vst.msk [vmem:[%s6 + $0x380] sm:$0xff] %vm1017, %v3719
  %3881 = vst.msk [vmem:[%s6 + $0x388] sm:$0xff] %vm1017, %v3723
  %3882 = vst.msk [vmem:[%s6 + $0x390] sm:$0xff] %vm1017, %v3727
  %3883 = vst.msk [vmem:[%s6 + $0x398] sm:$0xff] %vm1017, %v3731
  %3884 = vst.msk [vmem:[%s6 + $0x3a0] sm:$0xff] %vm1017, %v3735
  %3885 = vst.msk [vmem:[%s6 + $0x3a8] sm:$0xff] %vm1017, %v3739
  %3886 = vst.msk [vmem:[%s6 + $0x3b0] sm:$0xff] %vm1017, %v3743
  %3887 = vst.msk [vmem:[%s6 + $0x3b8] sm:$0xff] %vm1017, %v3747
  %3888 = vst.msk [vmem:[%s6 + $0x3c0] sm:$0xff] %vm1017, %v3751
  %3889 = vst.msk [vmem:[%s6 + $0x3c8] sm:$0xff] %vm1017, %v3755
  %3890 = vst.msk [vmem:[%s6 + $0x3d0] sm:$0xff] %vm1017, %v3759
  %3891 = vst.msk [vmem:[%s6 + $0x3d8] sm:$0xff] %vm1017, %v3763
  %3892 = vst.msk [vmem:[%s6 + $0x3e0] sm:$0xff] %vm1017, %v3767
  // Predicated region
  $region10: #{tpu_custom_call.1} parent=0 // pred_check
    _
  $region11: #{tpu_custom_call.1} parent=0 // pred_check_branch
    %3894 = sbr.rel (0) target = $region13
  $region12: #{tpu_custom_call.1} parent=0 // pred_region
    _
  $region13: #{tpu_custom_call.1} parent=0 // pred_fallthru
    _
  // Predicated region
  $region14: #{tpu_custom_call.1} parent=0 // pred_check
    _
  $region15: #{tpu_custom_call.1} parent=0 // pred_check_branch
    %3896 = sbr.rel (0) target = $region17
  $region16: #{tpu_custom_call.1} parent=0 // pred_region
    _
  $region17: #{tpu_custom_call.1} parent=0 // pred_fallthru
    _
  // Predicated region
  $region18: #{tpu_custom_call.1} parent=0 // pred_check
    _
  $region19: #{tpu_custom_call.1} parent=0 // pred_check_branch
    %3898 = sbr.rel (0) target = $region21
  $region20: #{tpu_custom_call.1} parent=0 // pred_region
    _
  $region21: #{tpu_custom_call.1} parent=0 // pred_fallthru
    _
  // Predicated region
  $region22: #{tpu_custom_call.1} parent=0 // pred_check
    _
  $region23: #{tpu_custom_call.1} parent=0 // pred_check_branch
    %3900 = sbr.rel (0) target = $region25
  $region24: #{tpu_custom_call.1} parent=0 // pred_region
    _
  $region25: #{tpu_custom_call.1} parent=0 // pred_fallthru
    _
  // Predicated region
  $region26: #{tpu_custom_call.1} parent=0 // pred_check
    _
  $region27: #{tpu_custom_call.1} parent=0 // pred_check_branch
    %3902 = sbr.rel (0) target = $region29
  $region28: #{tpu_custom_call.1} parent=0 // pred_region
    _
  $region29: #{tpu_custom_call.1} parent=0 // pred_fallthru
    _
  // Predicated region
  $region30: #{tpu_custom_call.1} parent=0 // pred_check
    _
  $region31: #{tpu_custom_call.1} parent=0 // pred_check_branch
    %3904 = sbr.rel (0) target = $region33
  $region32: #{tpu_custom_call.1} parent=0 // pred_region
    _
  $region33: #{tpu_custom_call.1} parent=0 // pred_fallthru
    _
  // Predicated region
  $region34: #{tpu_custom_call.1} parent=0 // pred_check
    _
  $region35: #{tpu_custom_call.1} parent=0 // pred_check_branch
    %3906 = sbr.rel (0) target = $region37
  $region36: #{tpu_custom_call.1} parent=0 // pred_region
    _
  $region37: #{tpu_custom_call.1} parent=0 // pred_fallthru
    _
  // Predicated region
  $region38: #{tpu_custom_call.1} parent=0 // pred_check
    _
  $region39: #{tpu_custom_call.1} parent=0 // pred_check_branch
    %3908 = sbr.rel (0) target = $region41
  $region40: #{tpu_custom_call.1} parent=0 // pred_region
    _
  $region41: #{tpu_custom_call.1} parent=0 // pred_fallthru
    _
  // Predicated region
  $region42: #{tpu_custom_call.1} parent=0 // pred_check
    _
  $region43: #{tpu_custom_call.1} parent=0 // pred_check_branch
    %3910 = sbr.rel (0) target = $region45
  $region44: #{tpu_custom_call.1} parent=0 // pred_region
    _
  $region45: #{tpu_custom_call.1} parent=0 // pred_fallthru
    _
  // Predicated region
  $region46: #{tpu_custom_call.1} parent=0 // pred_check
    _
  $region47: #{tpu_custom_call.1} parent=0 // pred_check_branch
    %3912 = sbr.rel (0) target = $region49
  $region48: #{tpu_custom_call.1} parent=0 // pred_region
    _
  $region49: #{tpu_custom_call.1} parent=0 // pred_fallthru
    _

</llo_original>
